<compile_context>
chip_gen: v5e
topology: v5e:2x2
jax: 0.10.0
libtpu: 0.0.40
codegen_flags: <defaults>
</compile_context>

<pallas_src>
import math

import jax
import jax.numpy as jnp
from jax.experimental import pallas as pl
from jax.experimental.pallas import tpu as pltpu

# ---------------- config (ModelConfig stand-in) ----------------
D_EMBED = 32
N_HEADS = 2
N_STREAMS = 4
SHORT_CTX = 6
OUT_CTX = 2
CTX_LEN = SHORT_CTX + OUT_CTX
VOCAB = 64
D_FF = 48
N_INTERMEDIATE = 2
RESID_GATE_MULT = 2.0
BATCH = 2

# TODO(synk): config.get_activation() is unspecified; GELU (tanh approx) stand-in.
_ACT = lambda x: jax.nn.gelu(x, approximate=True)
_MXU_DTYPE = jnp.bfloat16                # matmul operand dtype (f32 accumulation)
_ATTN_SCALE = 1.0 / math.sqrt(D_EMBED)
_NEG_BIG = -1e30


# ================= in-kernel helpers (pure jnp, traced once) =================

def _mxu_dot(a, b):
    return jnp.dot(a.astype(_MXU_DTYPE), b.astype(_MXU_DTYPE),
                   preferred_element_type=jnp.float32)


def _mxu_dot_tt(a, b):
    # (m, k) x (n, k) -> (m, n), contracting the last dim of both (no transpose op).
    return jax.lax.dot_general(
        a.astype(_MXU_DTYPE), b.astype(_MXU_DTYPE),
        dimension_numbers=(((1,), (1,)), ((), ())),
        preferred_element_type=jnp.float32)


def _stream_mask(width):
    """mask[r, c] = 1.0 iff column chunk (c // width) == stream (r % N_STREAMS).

    Built from iota + compares only (no div/mod) so it lowers unconditionally;
    computed once per forward on the VPU instead of being DMA'd from HBM.
    """
    rows, cols = BATCH * N_STREAMS, N_STREAMS * width
    r = jax.lax.broadcasted_iota(jnp.int32, (rows, cols), 0)
    c = jax.lax.broadcasted_iota(jnp.int32, (rows, cols), 1)
    sel = None
    for s in range(N_STREAMS):
        row_hit = None
        for b in range(BATCH):
            h = r == (b * N_STREAMS + s)
            row_hit = h if row_hit is None else (row_hit | h)
        blk = row_hit & (c >= s * width) & (c < (s + 1) * width)
        sel = blk if sel is None else (sel | blk)
    return sel.astype(jnp.float32)


def _batch_bias(n_q, n_kv):
    """Additive attention bias: 0 where query-batch == kv-batch, -1e30 elsewhere."""
    rows, cols = BATCH * n_q, BATCH * n_kv
    r = jax.lax.broadcasted_iota(jnp.int32, (rows, cols), 0)
    c = jax.lax.broadcasted_iota(jnp.int32, (rows, cols), 1)
    same = None
    for b in range(BATCH):
        blk = ((r >= b * n_q) & (r < (b + 1) * n_q) &
               (c >= b * n_kv) & (c < (b + 1) * n_kv))
        same = blk if same is None else (same | blk)
    return jnp.where(same, 0.0, _NEG_BIG).astype(jnp.float32)


def _stream_matmul(x, w_stack, mask):
    """Per-stream (block-diagonal-equivalent) matmul in ONE MXU pass.

    x:        (B*S, w)       batch-major rows, stream = row % S
    w_stack:  (S*w, d_out)   vertically stacked per-stream W_s^T (bf16)
    mask:     (B*S, S*w)     selects chunk s == row % S, zeroes the rest
    """
    xe = jnp.tile(x, (1, N_STREAMS)) * mask
    return _mxu_dot(xe, w_stack)


def _layernorm(x, g, b):
    x = x.astype(jnp.float32)
    mu = jnp.mean(x, axis=-1, keepdims=True)
    var = jnp.mean(jnp.square(x - mu), axis=-1, keepdims=True)
    return (x - mu) * jax.lax.rsqrt(var + 1e-5) * g + b


def _softmax_rows(s):
    s = s - jnp.max(s, axis=-1, keepdims=True)
    p = jnp.exp(s)
    return p * pl.reciprocal(jnp.sum(p, axis=-1, keepdims=True), approx=True)


def _mha_masked(q2d, kv2d, bias):
    """q2d: (B*n_q, H*D); kv2d: (B*n_kv, 2*H*D) cols = [k_h0..k_hH | v_h0..v_hH].

    One QK dot + softmax + PV dot PER HEAD over all batches; cross-batch
    interactions are killed by the additive block-diagonal `bias`."""
    d, n_h = D_EMBED, N_HEADS
    heads = []
    for h in range(n_h):
        qh = q2d[:, h * d:(h + 1) * d]
        kh = kv2d[:, h * d:(h + 1) * d]
        vh = kv2d[:, n_h * d + h * d:n_h * d + (h + 1) * d]
        p = _softmax_rows(_mxu_dot_tt(qh, kh) * _ATTN_SCALE + bias)
        heads.append(_mxu_dot(p, vh))
    return jnp.concatenate(heads, axis=1)                    # (B*n_q, H*D)


def _attn_block(x2d, blk, mask_q, mask_ff, mask_mid, bias, concat_norm,
                kv_src=None):
    """Shared body of CrossAttentionInput / Intermediate / PreOutput."""
    xn = _layernorm(x2d, blk["ln_g"], blk["ln_b"])                  # (B*S, D)
    if kv_src is None:                                              # self blocks
        kv_src = xn
    q2d = _stream_matmul(xn, blk["wq"], mask_q) + blk["bq"]         # (B*S, H*D)
    kv2d = _mxu_dot(kv_src, blk["wkv"]) + blk["bkv"]                # (B*n_kv, 2*H*D)
    attn = _mha_masked(q2d, kv2d, bias)                             # (B*S, H*D)
    if concat_norm:
        attn = jnp.concatenate([attn, xn], axis=1)                  # (B*S, (H+1)*D)
    attn = attn * blk["hs"]                                         # head_scales
    h = _stream_matmul(attn, blk["w_in"], mask_ff) + blk["b_in"]    # (B*S, 2*D_FF)
    mid = _ACT(h[:, :D_FF]) * h[:, D_FF:]                           # BatchGLU: act(a)*b
    return _stream_matmul(mid, blk["w_out"], mask_mid) + blk["b_out"]


def _inline_gate(x):
    gate = jax.nn.sigmoid(x[:, D_EMBED:D_EMBED + 1]) * RESID_GATE_MULT
    return x[:, :D_EMBED] * gate


def _read_block(refs, idx):
    """Load one attention block's parameters; `idx` statically indexes the
    stacked concat-block arrays (None -> plain, non-stacked refs)."""
    ln, wq, bq, wkv, bkv, hs, w_in, b_in, w_out, b_out = refs
    ld = (lambda r: r[idx]) if idx is not None else (lambda r: r[...])
    ln_v = ld(ln)                                          # (2, D): [gamma; beta]
    return {"ln_g": ln_v[0:1, :], "ln_b": ln_v[1:2, :],
            "wq": ld(wq), "bq": ld(bq),
            "wkv": ld(wkv), "bkv": ld(bkv),
            "hs": ld(hs),
            "w_in": ld(w_in), "b_in": ld(b_in),
            "w_out": ld(w_out), "b_out": ld(b_out)}


# ================= the single fused kernel =================

def _rnn_fused_kernel(
    # dynamic inputs
    rec_ref, tok_ref, com_ref,
    # global params
    embed_ref, unc_ref, pos_ref,
    # stacked concat blocks (leading dim = 1 + N_INTERMEDIATE)
    c_ln, c_wq, c_bq, c_wkv, c_bkv, c_hs, c_win, c_bin, c_wout, c_bout,
    # pre-output block
    p_ln, p_wq, p_bq, p_wkv, p_bkv, p_hs, p_win, p_bin, p_wout, p_bout,
    # char decode
    dq_ref, d_wkv, d_bkv, d_wglu, d_bglu, d_wout, d_bout,
    # outputs
    rec_out_ref, emb_out_ref, logits_out_ref,
):
    # Stream-selection masks / batch-block biases built once from iota (no HBM traffic).
    mask_q = _stream_mask(D_EMBED)
    mask_cat = _stream_mask((N_HEADS + 1) * D_EMBED)
    mask_pre = _stream_mask(N_HEADS * D_EMBED)
    mask_mid = _stream_mask(D_FF)
    bias_self = _batch_bias(N_STREAMS, N_STREAMS)
    bias_in = _batch_bias(N_STREAMS, CTX_LEN)
    bias_dec = _batch_bias(OUT_CTX, N_STREAMS)

    rec = rec_ref[...].astype(jnp.float32)                          # (B*S, D)

    # ----- input embedding: exact gather via one-hot matmul, VMEM resident -----
    tok = tok_ref[...]                                              # (B*T, 1) int32
    committed = com_ref[...]                                        # (B*T, 1) f32
    vocab_iota = jax.lax.broadcasted_iota(jnp.int32, (BATCH * CTX_LEN, VOCAB), 1)
    onehot = jnp.where(vocab_iota == tok, 1.0, 0.0).astype(jnp.float32)
    emb = jnp.dot(onehot, embed_ref[...], preferred_element_type=jnp.float32)
    emb = emb + (1.0 - committed) * unc_ref[...] + pos_ref[...]     # (B*T, D)

    concat_refs = (c_ln, c_wq, c_bq, c_wkv, c_bkv, c_hs, c_win, c_bin, c_wout, c_bout)

    # ----- CrossAttentionInput + Intermediate blocks, each with gated residual -----
    for i in range(1 + N_INTERMEDIATE):
        blk = _read_block(concat_refs, idx=i)
        kv_src = emb if i == 0 else None
        bias = bias_in if i == 0 else bias_self
        ff = _attn_block(rec, blk, mask_q, mask_cat, mask_mid, bias,
                         concat_norm=True, kv_src=kv_src)
        rec = rec + _inline_gate(ff)

    # ----- PreOutput -----
    pre_refs = (p_ln, p_wq, p_bq, p_wkv, p_bkv, p_hs, p_win, p_bin, p_wout, p_bout)
    blk = _read_block(pre_refs, idx=None)
    out = _attn_block(rec, blk, mask_q, mask_pre, mask_mid, bias_self,
                      concat_norm=False)                            # (B*S, D)

    # ----- CharDecode -----
    kv = _mxu_dot(out, d_wkv[...]) + d_bkv[...]                     # (B*S, 2*D)
    k, v = kv[:, :D_EMBED], kv[:, D_EMBED:]
    q = jnp.tile(dq_ref[...], (BATCH, 1))                           # (B*O, D)
    p = _softmax_rows(_mxu_dot_tt(q, k) * _ATTN_SCALE + bias_dec)   # (B*O, B*S)
    attn_dec = _mxu_dot(p, v)                                       # (B*O, D)
    h = _mxu_dot(attn_dec, d_wglu[...]) + d_bglu[...]               # (B*O, 2*D)
    emb_out = h[:, :D_EMBED] * _ACT(h[:, D_EMBED:])                 # GLU: w1 * act(w2)
    logits = _mxu_dot(emb_out, d_wout[...]) + d_bout[...]           # (B*O, V)

    rec_out_ref[...] = rec
    emb_out_ref[...] = emb_out
    logits_out_ref[...] = logits


# ================= one-time parameter packing (no per-forward work) =================

def _pack_batch_linear(p, batch):
    s, d_out, d_in = p["w"].shape
    w_stack = jnp.transpose(p["w"], (0, 2, 1)).reshape(s * d_in, d_out)  # stacked W_s^T
    b_rows = jnp.tile(p["b"], (batch, 1))                                # (B*S, d_out)
    return w_stack.astype(_MXU_DTYPE), b_rows.astype(jnp.float32)


def _pack_block(p, batch):
    d = D_EMBED
    wq, bq = _pack_batch_linear(p["q"], batch)
    w_in, b_in = _pack_batch_linear(p["ff"]["w_in"], batch)
    w_out, b_out = _pack_batch_linear(p["ff"]["w_out"], batch)
    return {
        "ln": jnp.stack([p["norm_g"], p["norm_b"]], axis=0).astype(jnp.float32),
        "wq": wq, "bq": bq,
        "wkv": p["kv"]["w"].T.astype(_MXU_DTYPE),
        "bkv": p["kv"]["b"].reshape(1, -1).astype(jnp.float32),
        "hs": jnp.repeat(p["head_scales"], d).reshape(1, -1).astype(jnp.float32),
        "w_in": w_in, "b_in": b_in, "w_out": w_out, "b_out": b_out,
    }


_BLOCK_KEYS = ("ln", "wq", "bq", "wkv", "bkv", "hs", "w_in", "b_in", "w_out", "b_out")


def pack_params(params, batch):
    """Repack torch-layout params ONCE into the flat, pre-transposed, bf16,
    block-stacked, MXU/VMEM-friendly layout the fused kernel consumes."""
    ip = params["input"]
    globals_ = [
        jnp.asarray(ip["embed"], jnp.float32),                       # (V, D)
        jnp.asarray(ip["uncommitted"], jnp.float32).reshape(1, D_EMBED),
        jnp.tile(jnp.asarray(ip["pos"], jnp.float32), (batch, 1)),   # (B*T, D)
    ]
    concat_blocks = [_pack_block(ip, batch)] + \
                    [_pack_block(p, batch) for p in params["intermediate"]]
    stacked = [jnp.stack([blk[k] for blk in concat_blocks], axis=0)
               for k in _BLOCK_KEYS]
    pre = _pack_block(params["pre_output"], batch)
    pre_list = [pre[k] for k in _BLOCK_KEYS]
    cd = params["char_decode"]
    dec = [
        jnp.asarray(cd["out_query"], jnp.float32),                   # (O, D)
        cd["kv"]["w"].T.astype(_MXU_DTYPE),
        cd["kv"]["b"].reshape(1, -1).astype(jnp.float32),
        cd["glu"]["w"].T.astype(_MXU_DTYPE),
        cd["glu"]["b"].reshape(1, -1).astype(jnp.float32),
        cd["w_out"]["w"].T.astype(_MXU_DTYPE),
        cd["w_out"]["b"].reshape(1, -1).astype(jnp.float32),
    ]
    return globals_ + stacked + pre_list + dec


# ================= forward wrapper (single pallas_call, no grid) =================

def rnn_forward(packed, recurrent, inputs, inputs_committed):
    b, s, d = recurrent.shape
    t = inputs.shape[1]
    flat = [recurrent.reshape(b * s, d).astype(jnp.float32),
            inputs.reshape(b * t, 1).astype(jnp.int32),
            inputs_committed.reshape(b * t, 1).astype(jnp.float32),
            *packed]
    rec2d, emb2d, logits2d = pl.pallas_call(
        _rnn_fused_kernel,
        out_shape=(jax.ShapeDtypeStruct((b * s, d), jnp.float32),
                   jax.ShapeDtypeStruct((b * OUT_CTX, d), jnp.float32),
                   jax.ShapeDtypeStruct((b * OUT_CTX, VOCAB), jnp.float32)),
        # Single invocation, whole arrays VMEM-resident (default specs, no grid).
        compiler_params=pltpu.CompilerParams(
            vmem_limit_bytes=32 * 1024 * 1024),
    )(*flat)
    return (rec2d.reshape(b, s, d),
            emb2d.reshape(b, OUT_CTX, d),
            logits2d.reshape(b, OUT_CTX, VOCAB))


# ================= parameter init (torch-layout, deterministic) =================

def _uniform(key, shape, bound):
    return jax.random.uniform(key, shape, jnp.float32, -bound, bound)


def init_params(key):
    keys = iter(jax.random.split(key, 256))
    nxt = lambda: next(keys)
    d, h, s = D_EMBED, N_HEADS, N_STREAMS

    def linear_params(d_in, d_out):
        bound = 1.0 / math.sqrt(d_in)
        return {"w": _uniform(nxt(), (d_out, d_in), bound),
                "b": _uniform(nxt(), (d_out,), bound)}

    def batch_linear_params(d_in, d_out):
        bound = 1.0 / math.sqrt(d_in)
        return {"w": _uniform(nxt(), (s, d_out, d_in), bound),
                "b": _uniform(nxt(), (s, d_out), bound)}

    def batch_glu_params(d_in, d_mid, d_out):
        return {"w_in": batch_linear_params(d_in, 2 * d_mid),
                "w_out": batch_linear_params(d_mid, d_out)}

    def attn_block_params(concat_norm):
        n_h = h + 1 if concat_norm else h
        ff_out = d + 1 if concat_norm else d
        return {"norm_g": jnp.ones((d,), jnp.float32),
                "norm_b": jnp.zeros((d,), jnp.float32),
                "q": batch_linear_params(d, h * d),
                "kv": linear_params(d, 2 * h * d),
                "head_scales": jnp.ones((n_h,), jnp.float32),
                "ff": batch_glu_params(d * n_h, D_FF, ff_out)}

    return {
        "recurrent_init": _uniform(nxt(), (s, d), 1.0 / math.sqrt(d)),
        "input": {
            "embed": jax.random.normal(nxt(), (VOCAB, d), jnp.float32),
            "uncommitted": jax.random.normal(nxt(), (d,), jnp.float32),
            "pos": jax.random.normal(nxt(), (CTX_LEN, d), jnp.float32),
            **attn_block_params(True),
        },
        "intermediate": [attn_block_params(True) for _ in range(N_INTERMEDIATE)],
        "pre_output": attn_block_params(False),
        "char_decode": {
            "out_query": jax.random.normal(nxt(), (OUT_CTX, d), jnp.float32),
            "kv": linear_params(d, 2 * d),
            "glu": linear_params(d, 2 * d),
            "w_out": linear_params(d, VOCAB),
        },
    }


# ================= main =================

if __name__ == "__main__":
    key = jax.random.PRNGKey(0)
    pkey, ikey, ckey = jax.random.split(key, 3)

    params = init_params(pkey)
    packed = pack_params(params, BATCH)          # one-time repack, outside jit
    recurrent0 = jnp.broadcast_to(params["recurrent_init"],
                                  (BATCH, N_STREAMS, D_EMBED))
    inputs = jax.random.randint(ikey, (BATCH, CTX_LEN), 0, VOCAB, dtype=jnp.int32)
    committed = jax.random.bernoulli(ckey, 0.5, (BATCH, CTX_LEN))

    fwd = jax.jit(rnn_forward)
    rec, emb, logits = fwd(packed, recurrent0, inputs, committed)
    jax.block_until_ready((rec, emb, logits))

    assert rec.shape == (BATCH, N_STREAMS, D_EMBED)
    assert emb.shape == (BATCH, OUT_CTX, D_EMBED)
    assert logits.shape == (BATCH, OUT_CTX, VOCAB)
    assert bool(jnp.all(jnp.isfinite(rec)))
    assert bool(jnp.all(jnp.isfinite(emb)))
    assert bool(jnp.all(jnp.isfinite(logits)))
    print("KERNEL_OK")
</pallas_src>

<mosaic_0001>
module attributes {stable_mosaic.version = 11 : i64} {
  func.func @_rnn_fused_kernel(%arg0: memref<8x32xf32, #tpu.memory_space<vmem>>, %arg1: memref<16x1xi32, #tpu.memory_space<vmem>>, %arg2: memref<16x1xf32, #tpu.memory_space<vmem>>, %arg3: memref<64x32xf32, #tpu.memory_space<vmem>>, %arg4: memref<1x32xf32, #tpu.memory_space<vmem>>, %arg5: memref<16x32xf32, #tpu.memory_space<vmem>>, %arg6: memref<3x2x32xf32, #tpu.memory_space<vmem>>, %arg7: memref<3x128x64xbf16, #tpu.memory_space<vmem>>, %arg8: memref<3x8x64xf32, #tpu.memory_space<vmem>>, %arg9: memref<3x32x128xbf16, #tpu.memory_space<vmem>>, %arg10: memref<3x1x128xf32, #tpu.memory_space<vmem>>, %arg11: memref<3x1x96xf32, #tpu.memory_space<vmem>>, %arg12: memref<3x384x96xbf16, #tpu.memory_space<vmem>>, %arg13: memref<3x8x96xf32, #tpu.memory_space<vmem>>, %arg14: memref<3x192x33xbf16, #tpu.memory_space<vmem>>, %arg15: memref<3x8x33xf32, #tpu.memory_space<vmem>>, %arg16: memref<2x32xf32, #tpu.memory_space<vmem>>, %arg17: memref<128x64xbf16, #tpu.memory_space<vmem>>, %arg18: memref<8x64xf32, #tpu.memory_space<vmem>>, %arg19: memref<32x128xbf16, #tpu.memory_space<vmem>>, %arg20: memref<1x128xf32, #tpu.memory_space<vmem>>, %arg21: memref<1x64xf32, #tpu.memory_space<vmem>>, %arg22: memref<256x96xbf16, #tpu.memory_space<vmem>>, %arg23: memref<8x96xf32, #tpu.memory_space<vmem>>, %arg24: memref<192x32xbf16, #tpu.memory_space<vmem>>, %arg25: memref<8x32xf32, #tpu.memory_space<vmem>>, %arg26: memref<2x32xf32, #tpu.memory_space<vmem>>, %arg27: memref<32x64xbf16, #tpu.memory_space<vmem>>, %arg28: memref<1x64xf32, #tpu.memory_space<vmem>>, %arg29: memref<32x64xbf16, #tpu.memory_space<vmem>>, %arg30: memref<1x64xf32, #tpu.memory_space<vmem>>, %arg31: memref<32x64xbf16, #tpu.memory_space<vmem>>, %arg32: memref<1x64xf32, #tpu.memory_space<vmem>>, %arg33: memref<8x32xf32, #tpu.memory_space<vmem>>, %arg34: memref<4x32xf32, #tpu.memory_space<vmem>>, %arg35: memref<4x64xf32, #tpu.memory_space<vmem>>) attributes {dimension_semantics = [], scalar_prefetch = 0 : i64, scratch_operands = 0 : i64, tpu.core_type = #tpu.core_type<tc>} {
    %0 = tpu.iota {dimensions = array<i32: 0>} : vector<8x128xi32>
    %1 = tpu.iota {dimensions = array<i32: 1>} : vector<8x128xi32>
    %c0_i32 = arith.constant 0 : i32
    %2 = vector.broadcast %c0_i32 : i32 to vector<8x128xi32>
    %3 = arith.cmpi eq, %0, %2 : vector<8x128xi32>
    %c4_i32 = arith.constant 4 : i32
    %4 = vector.broadcast %c4_i32 : i32 to vector<8x128xi32>
    %5 = arith.cmpi eq, %0, %4 : vector<8x128xi32>
    %6 = arith.ori %3, %5 : vector<8x128xi1>
    %c0_i32_0 = arith.constant 0 : i32
    %7 = vector.broadcast %c0_i32_0 : i32 to vector<8x128xi32>
    %8 = arith.cmpi sge, %1, %7 : vector<8x128xi32>
    %9 = arith.andi %6, %8 : vector<8x128xi1>
    %c32_i32 = arith.constant 32 : i32
    %10 = vector.broadcast %c32_i32 : i32 to vector<8x128xi32>
    %11 = arith.cmpi slt, %1, %10 : vector<8x128xi32>
    %12 = arith.andi %9, %11 : vector<8x128xi1>
    %c1_i32 = arith.constant 1 : i32
    %13 = vector.broadcast %c1_i32 : i32 to vector<8x128xi32>
    %14 = arith.cmpi eq, %0, %13 : vector<8x128xi32>
    %c5_i32 = arith.constant 5 : i32
    %15 = vector.broadcast %c5_i32 : i32 to vector<8x128xi32>
    %16 = arith.cmpi eq, %0, %15 : vector<8x128xi32>
    %17 = arith.ori %14, %16 : vector<8x128xi1>
    %c32_i32_1 = arith.constant 32 : i32
    %18 = vector.broadcast %c32_i32_1 : i32 to vector<8x128xi32>
    %19 = arith.cmpi sge, %1, %18 : vector<8x128xi32>
    %20 = arith.andi %17, %19 : vector<8x128xi1>
    %c64_i32 = arith.constant 64 : i32
    %21 = vector.broadcast %c64_i32 : i32 to vector<8x128xi32>
    %22 = arith.cmpi slt, %1, %21 : vector<8x128xi32>
    %23 = arith.andi %20, %22 : vector<8x128xi1>
    %24 = arith.ori %12, %23 : vector<8x128xi1>
    %c2_i32 = arith.constant 2 : i32
    %25 = vector.broadcast %c2_i32 : i32 to vector<8x128xi32>
    %26 = arith.cmpi eq, %0, %25 : vector<8x128xi32>
    %c6_i32 = arith.constant 6 : i32
    %27 = vector.broadcast %c6_i32 : i32 to vector<8x128xi32>
    %28 = arith.cmpi eq, %0, %27 : vector<8x128xi32>
    %29 = arith.ori %26, %28 : vector<8x128xi1>
    %c64_i32_2 = arith.constant 64 : i32
    %30 = vector.broadcast %c64_i32_2 : i32 to vector<8x128xi32>
    %31 = arith.cmpi sge, %1, %30 : vector<8x128xi32>
    %32 = arith.andi %29, %31 : vector<8x128xi1>
    %c96_i32 = arith.constant 96 : i32
    %33 = vector.broadcast %c96_i32 : i32 to vector<8x128xi32>
    %34 = arith.cmpi slt, %1, %33 : vector<8x128xi32>
    %35 = arith.andi %32, %34 : vector<8x128xi1>
    %36 = arith.ori %24, %35 : vector<8x128xi1>
    %c3_i32 = arith.constant 3 : i32
    %37 = vector.broadcast %c3_i32 : i32 to vector<8x128xi32>
    %38 = arith.cmpi eq, %0, %37 : vector<8x128xi32>
    %c7_i32 = arith.constant 7 : i32
    %39 = vector.broadcast %c7_i32 : i32 to vector<8x128xi32>
    %40 = arith.cmpi eq, %0, %39 : vector<8x128xi32>
    %41 = arith.ori %38, %40 : vector<8x128xi1>
    %c96_i32_3 = arith.constant 96 : i32
    %42 = vector.broadcast %c96_i32_3 : i32 to vector<8x128xi32>
    %43 = arith.cmpi sge, %1, %42 : vector<8x128xi32>
    %44 = arith.andi %41, %43 : vector<8x128xi1>
    %c128_i32 = arith.constant 128 : i32
    %45 = vector.broadcast %c128_i32 : i32 to vector<8x128xi32>
    %46 = arith.cmpi slt, %1, %45 : vector<8x128xi32>
    %47 = arith.andi %44, %46 : vector<8x128xi1>
    %48 = arith.ori %36, %47 : vector<8x128xi1>
    %49 = arith.extui %48 : vector<8x128xi1> to vector<8x128xi32>
    %50 = arith.sitofp %49 : vector<8x128xi32> to vector<8x128xf32>
    %51 = tpu.iota {dimensions = array<i32: 0>} : vector<8x384xi32>
    %52 = tpu.iota {dimensions = array<i32: 1>} : vector<8x384xi32>
    %c0_i32_4 = arith.constant 0 : i32
    %53 = vector.broadcast %c0_i32_4 : i32 to vector<8x384xi32>
    %54 = arith.cmpi eq, %51, %53 : vector<8x384xi32>
    %c4_i32_5 = arith.constant 4 : i32
    %55 = vector.broadcast %c4_i32_5 : i32 to vector<8x384xi32>
    %56 = arith.cmpi eq, %51, %55 : vector<8x384xi32>
    %57 = arith.ori %54, %56 : vector<8x384xi1>
    %c0_i32_6 = arith.constant 0 : i32
    %58 = vector.broadcast %c0_i32_6 : i32 to vector<8x384xi32>
    %59 = arith.cmpi sge, %52, %58 : vector<8x384xi32>
    %60 = arith.andi %57, %59 : vector<8x384xi1>
    %c96_i32_7 = arith.constant 96 : i32
    %61 = vector.broadcast %c96_i32_7 : i32 to vector<8x384xi32>
    %62 = arith.cmpi slt, %52, %61 : vector<8x384xi32>
    %63 = arith.andi %60, %62 : vector<8x384xi1>
    %c1_i32_8 = arith.constant 1 : i32
    %64 = vector.broadcast %c1_i32_8 : i32 to vector<8x384xi32>
    %65 = arith.cmpi eq, %51, %64 : vector<8x384xi32>
    %c5_i32_9 = arith.constant 5 : i32
    %66 = vector.broadcast %c5_i32_9 : i32 to vector<8x384xi32>
    %67 = arith.cmpi eq, %51, %66 : vector<8x384xi32>
    %68 = arith.ori %65, %67 : vector<8x384xi1>
    %c96_i32_10 = arith.constant 96 : i32
    %69 = vector.broadcast %c96_i32_10 : i32 to vector<8x384xi32>
    %70 = arith.cmpi sge, %52, %69 : vector<8x384xi32>
    %71 = arith.andi %68, %70 : vector<8x384xi1>
    %c192_i32 = arith.constant 192 : i32
    %72 = vector.broadcast %c192_i32 : i32 to vector<8x384xi32>
    %73 = arith.cmpi slt, %52, %72 : vector<8x384xi32>
    %74 = arith.andi %71, %73 : vector<8x384xi1>
    %75 = arith.ori %63, %74 : vector<8x384xi1>
    %c2_i32_11 = arith.constant 2 : i32
    %76 = vector.broadcast %c2_i32_11 : i32 to vector<8x384xi32>
    %77 = arith.cmpi eq, %51, %76 : vector<8x384xi32>
    %c6_i32_12 = arith.constant 6 : i32
    %78 = vector.broadcast %c6_i32_12 : i32 to vector<8x384xi32>
    %79 = arith.cmpi eq, %51, %78 : vector<8x384xi32>
    %80 = arith.ori %77, %79 : vector<8x384xi1>
    %c192_i32_13 = arith.constant 192 : i32
    %81 = vector.broadcast %c192_i32_13 : i32 to vector<8x384xi32>
    %82 = arith.cmpi sge, %52, %81 : vector<8x384xi32>
    %83 = arith.andi %80, %82 : vector<8x384xi1>
    %c288_i32 = arith.constant 288 : i32
    %84 = vector.broadcast %c288_i32 : i32 to vector<8x384xi32>
    %85 = arith.cmpi slt, %52, %84 : vector<8x384xi32>
    %86 = arith.andi %83, %85 : vector<8x384xi1>
    %87 = arith.ori %75, %86 : vector<8x384xi1>
    %c3_i32_14 = arith.constant 3 : i32
    %88 = vector.broadcast %c3_i32_14 : i32 to vector<8x384xi32>
    %89 = arith.cmpi eq, %51, %88 : vector<8x384xi32>
    %c7_i32_15 = arith.constant 7 : i32
    %90 = vector.broadcast %c7_i32_15 : i32 to vector<8x384xi32>
    %91 = arith.cmpi eq, %51, %90 : vector<8x384xi32>
    %92 = arith.ori %89, %91 : vector<8x384xi1>
    %c288_i32_16 = arith.constant 288 : i32
    %93 = vector.broadcast %c288_i32_16 : i32 to vector<8x384xi32>
    %94 = arith.cmpi sge, %52, %93 : vector<8x384xi32>
    %95 = arith.andi %92, %94 : vector<8x384xi1>
    %c384_i32 = arith.constant 384 : i32
    %96 = vector.broadcast %c384_i32 : i32 to vector<8x384xi32>
    %97 = arith.cmpi slt, %52, %96 : vector<8x384xi32>
    %98 = arith.andi %95, %97 : vector<8x384xi1>
    %99 = arith.ori %87, %98 : vector<8x384xi1>
    %100 = arith.extui %99 : vector<8x384xi1> to vector<8x384xi32>
    %101 = arith.sitofp %100 : vector<8x384xi32> to vector<8x384xf32>
    %102 = tpu.iota {dimensions = array<i32: 0>} : vector<8x256xi32>
    %103 = tpu.iota {dimensions = array<i32: 1>} : vector<8x256xi32>
    %c0_i32_17 = arith.constant 0 : i32
    %104 = vector.broadcast %c0_i32_17 : i32 to vector<8x256xi32>
    %105 = arith.cmpi eq, %102, %104 : vector<8x256xi32>
    %c4_i32_18 = arith.constant 4 : i32
    %106 = vector.broadcast %c4_i32_18 : i32 to vector<8x256xi32>
    %107 = arith.cmpi eq, %102, %106 : vector<8x256xi32>
    %108 = arith.ori %105, %107 : vector<8x256xi1>
    %c0_i32_19 = arith.constant 0 : i32
    %109 = vector.broadcast %c0_i32_19 : i32 to vector<8x256xi32>
    %110 = arith.cmpi sge, %103, %109 : vector<8x256xi32>
    %111 = arith.andi %108, %110 : vector<8x256xi1>
    %c64_i32_20 = arith.constant 64 : i32
    %112 = vector.broadcast %c64_i32_20 : i32 to vector<8x256xi32>
    %113 = arith.cmpi slt, %103, %112 : vector<8x256xi32>
    %114 = arith.andi %111, %113 : vector<8x256xi1>
    %c1_i32_21 = arith.constant 1 : i32
    %115 = vector.broadcast %c1_i32_21 : i32 to vector<8x256xi32>
    %116 = arith.cmpi eq, %102, %115 : vector<8x256xi32>
    %c5_i32_22 = arith.constant 5 : i32
    %117 = vector.broadcast %c5_i32_22 : i32 to vector<8x256xi32>
    %118 = arith.cmpi eq, %102, %117 : vector<8x256xi32>
    %119 = arith.ori %116, %118 : vector<8x256xi1>
    %c64_i32_23 = arith.constant 64 : i32
    %120 = vector.broadcast %c64_i32_23 : i32 to vector<8x256xi32>
    %121 = arith.cmpi sge, %103, %120 : vector<8x256xi32>
    %122 = arith.andi %119, %121 : vector<8x256xi1>
    %c128_i32_24 = arith.constant 128 : i32
    %123 = vector.broadcast %c128_i32_24 : i32 to vector<8x256xi32>
    %124 = arith.cmpi slt, %103, %123 : vector<8x256xi32>
    %125 = arith.andi %122, %124 : vector<8x256xi1>
    %126 = arith.ori %114, %125 : vector<8x256xi1>
    %c2_i32_25 = arith.constant 2 : i32
    %127 = vector.broadcast %c2_i32_25 : i32 to vector<8x256xi32>
    %128 = arith.cmpi eq, %102, %127 : vector<8x256xi32>
    %c6_i32_26 = arith.constant 6 : i32
    %129 = vector.broadcast %c6_i32_26 : i32 to vector<8x256xi32>
    %130 = arith.cmpi eq, %102, %129 : vector<8x256xi32>
    %131 = arith.ori %128, %130 : vector<8x256xi1>
    %c128_i32_27 = arith.constant 128 : i32
    %132 = vector.broadcast %c128_i32_27 : i32 to vector<8x256xi32>
    %133 = arith.cmpi sge, %103, %132 : vector<8x256xi32>
    %134 = arith.andi %131, %133 : vector<8x256xi1>
    %c192_i32_28 = arith.constant 192 : i32
    %135 = vector.broadcast %c192_i32_28 : i32 to vector<8x256xi32>
    %136 = arith.cmpi slt, %103, %135 : vector<8x256xi32>
    %137 = arith.andi %134, %136 : vector<8x256xi1>
    %138 = arith.ori %126, %137 : vector<8x256xi1>
    %c3_i32_29 = arith.constant 3 : i32
    %139 = vector.broadcast %c3_i32_29 : i32 to vector<8x256xi32>
    %140 = arith.cmpi eq, %102, %139 : vector<8x256xi32>
    %c7_i32_30 = arith.constant 7 : i32
    %141 = vector.broadcast %c7_i32_30 : i32 to vector<8x256xi32>
    %142 = arith.cmpi eq, %102, %141 : vector<8x256xi32>
    %143 = arith.ori %140, %142 : vector<8x256xi1>
    %c192_i32_31 = arith.constant 192 : i32
    %144 = vector.broadcast %c192_i32_31 : i32 to vector<8x256xi32>
    %145 = arith.cmpi sge, %103, %144 : vector<8x256xi32>
    %146 = arith.andi %143, %145 : vector<8x256xi1>
    %c256_i32 = arith.constant 256 : i32
    %147 = vector.broadcast %c256_i32 : i32 to vector<8x256xi32>
    %148 = arith.cmpi slt, %103, %147 : vector<8x256xi32>
    %149 = arith.andi %146, %148 : vector<8x256xi1>
    %150 = arith.ori %138, %149 : vector<8x256xi1>
    %151 = arith.extui %150 : vector<8x256xi1> to vector<8x256xi32>
    %152 = arith.sitofp %151 : vector<8x256xi32> to vector<8x256xf32>
    %153 = tpu.iota {dimensions = array<i32: 0>} : vector<8x192xi32>
    %154 = tpu.iota {dimensions = array<i32: 1>} : vector<8x192xi32>
    %c0_i32_32 = arith.constant 0 : i32
    %155 = vector.broadcast %c0_i32_32 : i32 to vector<8x192xi32>
    %156 = arith.cmpi eq, %153, %155 : vector<8x192xi32>
    %c4_i32_33 = arith.constant 4 : i32
    %157 = vector.broadcast %c4_i32_33 : i32 to vector<8x192xi32>
    %158 = arith.cmpi eq, %153, %157 : vector<8x192xi32>
    %159 = arith.ori %156, %158 : vector<8x192xi1>
    %c0_i32_34 = arith.constant 0 : i32
    %160 = vector.broadcast %c0_i32_34 : i32 to vector<8x192xi32>
    %161 = arith.cmpi sge, %154, %160 : vector<8x192xi32>
    %162 = arith.andi %159, %161 : vector<8x192xi1>
    %c48_i32 = arith.constant 48 : i32
    %163 = vector.broadcast %c48_i32 : i32 to vector<8x192xi32>
    %164 = arith.cmpi slt, %154, %163 : vector<8x192xi32>
    %165 = arith.andi %162, %164 : vector<8x192xi1>
    %c1_i32_35 = arith.constant 1 : i32
    %166 = vector.broadcast %c1_i32_35 : i32 to vector<8x192xi32>
    %167 = arith.cmpi eq, %153, %166 : vector<8x192xi32>
    %c5_i32_36 = arith.constant 5 : i32
    %168 = vector.broadcast %c5_i32_36 : i32 to vector<8x192xi32>
    %169 = arith.cmpi eq, %153, %168 : vector<8x192xi32>
    %170 = arith.ori %167, %169 : vector<8x192xi1>
    %c48_i32_37 = arith.constant 48 : i32
    %171 = vector.broadcast %c48_i32_37 : i32 to vector<8x192xi32>
    %172 = arith.cmpi sge, %154, %171 : vector<8x192xi32>
    %173 = arith.andi %170, %172 : vector<8x192xi1>
    %c96_i32_38 = arith.constant 96 : i32
    %174 = vector.broadcast %c96_i32_38 : i32 to vector<8x192xi32>
    %175 = arith.cmpi slt, %154, %174 : vector<8x192xi32>
    %176 = arith.andi %173, %175 : vector<8x192xi1>
    %177 = arith.ori %165, %176 : vector<8x192xi1>
    %c2_i32_39 = arith.constant 2 : i32
    %178 = vector.broadcast %c2_i32_39 : i32 to vector<8x192xi32>
    %179 = arith.cmpi eq, %153, %178 : vector<8x192xi32>
    %c6_i32_40 = arith.constant 6 : i32
    %180 = vector.broadcast %c6_i32_40 : i32 to vector<8x192xi32>
    %181 = arith.cmpi eq, %153, %180 : vector<8x192xi32>
    %182 = arith.ori %179, %181 : vector<8x192xi1>
    %c96_i32_41 = arith.constant 96 : i32
    %183 = vector.broadcast %c96_i32_41 : i32 to vector<8x192xi32>
    %184 = arith.cmpi sge, %154, %183 : vector<8x192xi32>
    %185 = arith.andi %182, %184 : vector<8x192xi1>
    %c144_i32 = arith.constant 144 : i32
    %186 = vector.broadcast %c144_i32 : i32 to vector<8x192xi32>
    %187 = arith.cmpi slt, %154, %186 : vector<8x192xi32>
    %188 = arith.andi %185, %187 : vector<8x192xi1>
    %189 = arith.ori %177, %188 : vector<8x192xi1>
    %c3_i32_42 = arith.constant 3 : i32
    %190 = vector.broadcast %c3_i32_42 : i32 to vector<8x192xi32>
    %191 = arith.cmpi eq, %153, %190 : vector<8x192xi32>
    %c7_i32_43 = arith.constant 7 : i32
    %192 = vector.broadcast %c7_i32_43 : i32 to vector<8x192xi32>
    %193 = arith.cmpi eq, %153, %192 : vector<8x192xi32>
    %194 = arith.ori %191, %193 : vector<8x192xi1>
    %c144_i32_44 = arith.constant 144 : i32
    %195 = vector.broadcast %c144_i32_44 : i32 to vector<8x192xi32>
    %196 = arith.cmpi sge, %154, %195 : vector<8x192xi32>
    %197 = arith.andi %194, %196 : vector<8x192xi1>
    %c192_i32_45 = arith.constant 192 : i32
    %198 = vector.broadcast %c192_i32_45 : i32 to vector<8x192xi32>
    %199 = arith.cmpi slt, %154, %198 : vector<8x192xi32>
    %200 = arith.andi %197, %199 : vector<8x192xi1>
    %201 = arith.ori %189, %200 : vector<8x192xi1>
    %202 = arith.extui %201 : vector<8x192xi1> to vector<8x192xi32>
    %203 = arith.sitofp %202 : vector<8x192xi32> to vector<8x192xf32>
    %204 = tpu.iota {dimensions = array<i32: 0>} : vector<8x8xi32>
    %205 = tpu.iota {dimensions = array<i32: 1>} : vector<8x8xi32>
    %c0_i32_46 = arith.constant 0 : i32
    %206 = vector.broadcast %c0_i32_46 : i32 to vector<8x8xi32>
    %207 = arith.cmpi sge, %204, %206 : vector<8x8xi32>
    %c4_i32_47 = arith.constant 4 : i32
    %208 = vector.broadcast %c4_i32_47 : i32 to vector<8x8xi32>
    %209 = arith.cmpi slt, %204, %208 : vector<8x8xi32>
    %210 = arith.andi %207, %209 : vector<8x8xi1>
    %c0_i32_48 = arith.constant 0 : i32
    %211 = vector.broadcast %c0_i32_48 : i32 to vector<8x8xi32>
    %212 = arith.cmpi sge, %205, %211 : vector<8x8xi32>
    %213 = arith.andi %210, %212 : vector<8x8xi1>
    %c4_i32_49 = arith.constant 4 : i32
    %214 = vector.broadcast %c4_i32_49 : i32 to vector<8x8xi32>
    %215 = arith.cmpi slt, %205, %214 : vector<8x8xi32>
    %216 = arith.andi %213, %215 : vector<8x8xi1>
    %c4_i32_50 = arith.constant 4 : i32
    %217 = vector.broadcast %c4_i32_50 : i32 to vector<8x8xi32>
    %218 = arith.cmpi sge, %204, %217 : vector<8x8xi32>
    %c8_i32 = arith.constant 8 : i32
    %219 = vector.broadcast %c8_i32 : i32 to vector<8x8xi32>
    %220 = arith.cmpi slt, %204, %219 : vector<8x8xi32>
    %221 = arith.andi %218, %220 : vector<8x8xi1>
    %c4_i32_51 = arith.constant 4 : i32
    %222 = vector.broadcast %c4_i32_51 : i32 to vector<8x8xi32>
    %223 = arith.cmpi sge, %205, %222 : vector<8x8xi32>
    %224 = arith.andi %221, %223 : vector<8x8xi1>
    %c8_i32_52 = arith.constant 8 : i32
    %225 = vector.broadcast %c8_i32_52 : i32 to vector<8x8xi32>
    %226 = arith.cmpi slt, %205, %225 : vector<8x8xi32>
    %227 = arith.andi %224, %226 : vector<8x8xi1>
    %228 = arith.ori %216, %227 : vector<8x8xi1>
    %cst = arith.constant 0.000000e+00 : f32
    %cst_53 = arith.constant -1.000000e+30 : f32
    %229 = vector.broadcast %cst : f32 to vector<8x8xf32>
    %230 = vector.broadcast %cst_53 : f32 to vector<8x8xf32>
    %231 = arith.select %228, %229, %230 : vector<8x8xi1>, vector<8x8xf32>
    %232 = tpu.iota {dimensions = array<i32: 0>} : vector<8x16xi32>
    %233 = tpu.iota {dimensions = array<i32: 1>} : vector<8x16xi32>
    %c0_i32_54 = arith.constant 0 : i32
    %234 = vector.broadcast %c0_i32_54 : i32 to vector<8x16xi32>
    %235 = arith.cmpi sge, %232, %234 : vector<8x16xi32>
    %c4_i32_55 = arith.constant 4 : i32
    %236 = vector.broadcast %c4_i32_55 : i32 to vector<8x16xi32>
    %237 = arith.cmpi slt, %232, %236 : vector<8x16xi32>
    %238 = arith.andi %235, %237 : vector<8x16xi1>
    %c0_i32_56 = arith.constant 0 : i32
    %239 = vector.broadcast %c0_i32_56 : i32 to vector<8x16xi32>
    %240 = arith.cmpi sge, %233, %239 : vector<8x16xi32>
    %241 = arith.andi %238, %240 : vector<8x16xi1>
    %c8_i32_57 = arith.constant 8 : i32
    %242 = vector.broadcast %c8_i32_57 : i32 to vector<8x16xi32>
    %243 = arith.cmpi slt, %233, %242 : vector<8x16xi32>
    %244 = arith.andi %241, %243 : vector<8x16xi1>
    %c4_i32_58 = arith.constant 4 : i32
    %245 = vector.broadcast %c4_i32_58 : i32 to vector<8x16xi32>
    %246 = arith.cmpi sge, %232, %245 : vector<8x16xi32>
    %c8_i32_59 = arith.constant 8 : i32
    %247 = vector.broadcast %c8_i32_59 : i32 to vector<8x16xi32>
    %248 = arith.cmpi slt, %232, %247 : vector<8x16xi32>
    %249 = arith.andi %246, %248 : vector<8x16xi1>
    %c8_i32_60 = arith.constant 8 : i32
    %250 = vector.broadcast %c8_i32_60 : i32 to vector<8x16xi32>
    %251 = arith.cmpi sge, %233, %250 : vector<8x16xi32>
    %252 = arith.andi %249, %251 : vector<8x16xi1>
    %c16_i32 = arith.constant 16 : i32
    %253 = vector.broadcast %c16_i32 : i32 to vector<8x16xi32>
    %254 = arith.cmpi slt, %233, %253 : vector<8x16xi32>
    %255 = arith.andi %252, %254 : vector<8x16xi1>
    %256 = arith.ori %244, %255 : vector<8x16xi1>
    %cst_61 = arith.constant 0.000000e+00 : f32
    %cst_62 = arith.constant -1.000000e+30 : f32
    %257 = vector.broadcast %cst_61 : f32 to vector<8x16xf32>
    %258 = vector.broadcast %cst_62 : f32 to vector<8x16xf32>
    %259 = arith.select %256, %257, %258 : vector<8x16xi1>, vector<8x16xf32>
    %260 = tpu.iota {dimensions = array<i32: 0>} : vector<4x8xi32>
    %261 = tpu.iota {dimensions = array<i32: 1>} : vector<4x8xi32>
    %c0_i32_63 = arith.constant 0 : i32
    %262 = vector.broadcast %c0_i32_63 : i32 to vector<4x8xi32>
    %263 = arith.cmpi sge, %260, %262 : vector<4x8xi32>
    %c2_i32_64 = arith.constant 2 : i32
    %264 = vector.broadcast %c2_i32_64 : i32 to vector<4x8xi32>
    %265 = arith.cmpi slt, %260, %264 : vector<4x8xi32>
    %266 = arith.andi %263, %265 : vector<4x8xi1>
    %c0_i32_65 = arith.constant 0 : i32
    %267 = vector.broadcast %c0_i32_65 : i32 to vector<4x8xi32>
    %268 = arith.cmpi sge, %261, %267 : vector<4x8xi32>
    %269 = arith.andi %266, %268 : vector<4x8xi1>
    %c4_i32_66 = arith.constant 4 : i32
    %270 = vector.broadcast %c4_i32_66 : i32 to vector<4x8xi32>
    %271 = arith.cmpi slt, %261, %270 : vector<4x8xi32>
    %272 = arith.andi %269, %271 : vector<4x8xi1>
    %c2_i32_67 = arith.constant 2 : i32
    %273 = vector.broadcast %c2_i32_67 : i32 to vector<4x8xi32>
    %274 = arith.cmpi sge, %260, %273 : vector<4x8xi32>
    %c4_i32_68 = arith.constant 4 : i32
    %275 = vector.broadcast %c4_i32_68 : i32 to vector<4x8xi32>
    %276 = arith.cmpi slt, %260, %275 : vector<4x8xi32>
    %277 = arith.andi %274, %276 : vector<4x8xi1>
    %c4_i32_69 = arith.constant 4 : i32
    %278 = vector.broadcast %c4_i32_69 : i32 to vector<4x8xi32>
    %279 = arith.cmpi sge, %261, %278 : vector<4x8xi32>
    %280 = arith.andi %277, %279 : vector<4x8xi1>
    %c8_i32_70 = arith.constant 8 : i32
    %281 = vector.broadcast %c8_i32_70 : i32 to vector<4x8xi32>
    %282 = arith.cmpi slt, %261, %281 : vector<4x8xi32>
    %283 = arith.andi %280, %282 : vector<4x8xi1>
    %284 = arith.ori %272, %283 : vector<4x8xi1>
    %cst_71 = arith.constant 0.000000e+00 : f32
    %cst_72 = arith.constant -1.000000e+30 : f32
    %285 = vector.broadcast %cst_71 : f32 to vector<4x8xf32>
    %286 = vector.broadcast %cst_72 : f32 to vector<4x8xf32>
    %287 = arith.select %284, %285, %286 : vector<4x8xi1>, vector<4x8xf32>
    %c0 = arith.constant 0 : index
    %c0_73 = arith.constant 0 : index
    %288 = vector.load %arg0[%c0, %c0_73] : memref<8x32xf32, #tpu.memory_space<vmem>>, vector<8x32xf32>
    %c0_74 = arith.constant 0 : index
    %c0_75 = arith.constant 0 : index
    %289 = vector.load %arg1[%c0_74, %c0_75] : memref<16x1xi32, #tpu.memory_space<vmem>>, vector<16x1xi32>
    %c0_76 = arith.constant 0 : index
    %c0_77 = arith.constant 0 : index
    %290 = vector.load %arg2[%c0_76, %c0_77] : memref<16x1xf32, #tpu.memory_space<vmem>>, vector<16x1xf32>
    %291 = tpu.iota {dimensions = array<i32: 1>} : vector<16x64xi32>
    %292 = vector.broadcast %289 : vector<16x1xi32> to vector<16x64xi32>
    %293 = arith.cmpi eq, %291, %292 : vector<16x64xi32>
    %cst_78 = arith.constant 1.000000e+00 : f32
    %cst_79 = arith.constant 0.000000e+00 : f32
    %294 = vector.broadcast %cst_78 : f32 to vector<16x64xf32>
    %295 = vector.broadcast %cst_79 : f32 to vector<16x64xf32>
    %296 = arith.select %293, %294, %295 : vector<16x64xi1>, vector<16x64xf32>
    %c0_80 = arith.constant 0 : index
    %c0_81 = arith.constant 0 : index
    %297 = vector.load %arg3[%c0_80, %c0_81] : memref<64x32xf32, #tpu.memory_space<vmem>>, vector<64x32xf32>
    %cst_82 = arith.constant dense<0.000000e+00> : vector<16x32xf32>
    %298 = tpu.matmul %296, %297, %cst_82 {dimension_numbers = #tpu.dot_dimension_numbers<[1], [0], [0], [1], [0, 0, 1, 1], [], []>} : vector<16x64xf32>, vector<64x32xf32>, vector<16x32xf32> -> vector<16x32xf32>
    %cst_83 = arith.constant 1.000000e+00 : f32
    %299 = vector.broadcast %cst_83 : f32 to vector<16x1xf32>
    %300 = arith.subf %299, %290 : vector<16x1xf32>
    %c0_84 = arith.constant 0 : index
    %c0_85 = arith.constant 0 : index
    %301 = vector.load %arg4[%c0_84, %c0_85] : memref<1x32xf32, #tpu.memory_space<vmem>>, vector<1x32xf32>
    %302 = vector.broadcast %300 : vector<16x1xf32> to vector<16x32xf32>
    %303 = vector.broadcast %301 : vector<1x32xf32> to vector<16x32xf32>
    %304 = arith.mulf %302, %303 : vector<16x32xf32>
    %305 = arith.addf %298, %304 : vector<16x32xf32>
    %c0_86 = arith.constant 0 : index
    %c0_87 = arith.constant 0 : index
    %306 = vector.load %arg5[%c0_86, %c0_87] : memref<16x32xf32, #tpu.memory_space<vmem>>, vector<16x32xf32>
    %307 = arith.addf %305, %306 : vector<16x32xf32>
    %c0_88 = arith.constant 0 : index
    %c0_89 = arith.constant 0 : index
    %c0_90 = arith.constant 0 : index
    %308 = vector.load %arg6[%c0_88, %c0_89, %c0_90] : memref<3x2x32xf32, #tpu.memory_space<vmem>>, vector<1x2x32xf32>
    %309 = vector.shape_cast %308 : vector<1x2x32xf32> to vector<2x32xf32>
    %310 = vector.extract_strided_slice %309 {offsets = [0, 0], sizes = [1, 32], strides = [1, 1]} : vector<2x32xf32> to vector<1x32xf32>
    %311 = vector.extract_strided_slice %309 {offsets = [1, 0], sizes = [1, 32], strides = [1, 1]} : vector<2x32xf32> to vector<1x32xf32>
    %c0_91 = arith.constant 0 : index
    %c0_92 = arith.constant 0 : index
    %c0_93 = arith.constant 0 : index
    %312 = vector.load %arg7[%c0_91, %c0_92, %c0_93] : memref<3x128x64xbf16, #tpu.memory_space<vmem>>, vector<1x128x64xbf16>
    %313 = vector.shape_cast %312 : vector<1x128x64xbf16> to vector<128x64xbf16>
    %c0_94 = arith.constant 0 : index
    %c0_95 = arith.constant 0 : index
    %c0_96 = arith.constant 0 : index
    %314 = vector.load %arg8[%c0_94, %c0_95, %c0_96] : memref<3x8x64xf32, #tpu.memory_space<vmem>>, vector<1x8x64xf32>
    %315 = vector.shape_cast %314 : vector<1x8x64xf32> to vector<8x64xf32>
    %c0_97 = arith.constant 0 : index
    %c0_98 = arith.constant 0 : index
    %c0_99 = arith.constant 0 : index
    %316 = vector.load %arg9[%c0_97, %c0_98, %c0_99] : memref<3x32x128xbf16, #tpu.memory_space<vmem>>, vector<1x32x128xbf16>
    %317 = vector.shape_cast %316 : vector<1x32x128xbf16> to vector<32x128xbf16>
    %c0_100 = arith.constant 0 : index
    %c0_101 = arith.constant 0 : index
    %c0_102 = arith.constant 0 : index
    %318 = vector.load %arg10[%c0_100, %c0_101, %c0_102] : memref<3x1x128xf32, #tpu.memory_space<vmem>>, vector<1x1x128xf32>
    %319 = vector.shape_cast %318 : vector<1x1x128xf32> to vector<1x128xf32>
    %c0_103 = arith.constant 0 : index
    %c0_104 = arith.constant 0 : index
    %c0_105 = arith.constant 0 : index
    %320 = vector.load %arg11[%c0_103, %c0_104, %c0_105] : memref<3x1x96xf32, #tpu.memory_space<vmem>>, vector<1x1x96xf32>
    %321 = vector.shape_cast %320 : vector<1x1x96xf32> to vector<1x96xf32>
    %c0_106 = arith.constant 0 : index
    %c0_107 = arith.constant 0 : index
    %c0_108 = arith.constant 0 : index
    %322 = vector.load %arg12[%c0_106, %c0_107, %c0_108] : memref<3x384x96xbf16, #tpu.memory_space<vmem>>, vector<1x384x96xbf16>
    %323 = vector.shape_cast %322 : vector<1x384x96xbf16> to vector<384x96xbf16>
    %c0_109 = arith.constant 0 : index
    %c0_110 = arith.constant 0 : index
    %c0_111 = arith.constant 0 : index
    %324 = vector.load %arg13[%c0_109, %c0_110, %c0_111] : memref<3x8x96xf32, #tpu.memory_space<vmem>>, vector<1x8x96xf32>
    %325 = vector.shape_cast %324 : vector<1x8x96xf32> to vector<8x96xf32>
    %c0_112 = arith.constant 0 : index
    %c0_113 = arith.constant 0 : index
    %c0_114 = arith.constant 0 : index
    %326 = vector.load %arg14[%c0_112, %c0_113, %c0_114] : memref<3x192x33xbf16, #tpu.memory_space<vmem>>, vector<1x192x33xbf16>
    %327 = vector.shape_cast %326 : vector<1x192x33xbf16> to vector<192x33xbf16>
    %c0_115 = arith.constant 0 : index
    %c0_116 = arith.constant 0 : index
    %c0_117 = arith.constant 0 : index
    %328 = vector.load %arg15[%c0_115, %c0_116, %c0_117] : memref<3x8x33xf32, #tpu.memory_space<vmem>>, vector<1x8x33xf32>
    %329 = vector.shape_cast %328 : vector<1x8x33xf32> to vector<8x33xf32>
    %cst_118 = arith.constant dense<0.000000e+00> : vector<8xf32>
    %330 = vector.multi_reduction <add>, %288, %cst_118 [1] : vector<8x32xf32> to vector<8xf32>
    %331 = vector.shape_cast %330 : vector<8xf32> to vector<8x1xf32>
    %cst_119 = arith.constant 3.200000e+01 : f32
    %332 = vector.broadcast %cst_119 : f32 to vector<8x1xf32>
    %333 = arith.divf %331, %332 : vector<8x1xf32>
    %334 = vector.broadcast %333 : vector<8x1xf32> to vector<8x32xf32>
    %335 = arith.subf %288, %334 : vector<8x32xf32>
    %336 = arith.mulf %335, %335 : vector<8x32xf32>
    %cst_120 = arith.constant dense<0.000000e+00> : vector<8xf32>
    %337 = vector.multi_reduction <add>, %336, %cst_120 [1] : vector<8x32xf32> to vector<8xf32>
    %338 = vector.shape_cast %337 : vector<8xf32> to vector<8x1xf32>
    %cst_121 = arith.constant 3.200000e+01 : f32
    %339 = vector.broadcast %cst_121 : f32 to vector<8x1xf32>
    %340 = arith.divf %338, %339 : vector<8x1xf32>
    %341 = vector.broadcast %333 : vector<8x1xf32> to vector<8x32xf32>
    %342 = arith.subf %288, %341 : vector<8x32xf32>
    %cst_122 = arith.constant 9.99999974E-6 : f32
    %343 = vector.broadcast %cst_122 : f32 to vector<8x1xf32>
    %344 = arith.addf %340, %343 : vector<8x1xf32>
    %345 = math.rsqrt %344 : vector<8x1xf32>
    %346 = vector.broadcast %345 : vector<8x1xf32> to vector<8x32xf32>
    %347 = arith.mulf %342, %346 : vector<8x32xf32>
    %348 = vector.broadcast %310 : vector<1x32xf32> to vector<8x32xf32>
    %349 = arith.mulf %347, %348 : vector<8x32xf32>
    %350 = vector.broadcast %311 : vector<1x32xf32> to vector<8x32xf32>
    %351 = arith.addf %349, %350 : vector<8x32xf32>
    %352 = tpu.concatenate %351, %351, %351, %351 in 1 : vector<8x32xf32>, vector<8x32xf32>, vector<8x32xf32>, vector<8x32xf32> -> vector<8x128xf32>
    %353 = arith.mulf %352, %50 : vector<8x128xf32>
    %354 = arith.truncf %353 : vector<8x128xf32> to vector<8x128xbf16>
    %cst_123 = arith.constant dense<0.000000e+00> : vector<8x64xf32>
    %355 = tpu.matmul %354, %313, %cst_123 {dimension_numbers = #tpu.dot_dimension_numbers<[1], [0], [0], [1], [0, 0, 1, 1], [], []>} : vector<8x128xbf16>, vector<128x64xbf16>, vector<8x64xf32> -> vector<8x64xf32>
    %356 = arith.addf %355, %315 : vector<8x64xf32>
    %357 = arith.truncf %307 : vector<16x32xf32> to vector<16x32xbf16>
    %cst_124 = arith.constant dense<0.000000e+00> : vector<16x128xf32>
    %358 = tpu.matmul %357, %317, %cst_124 {dimension_numbers = #tpu.dot_dimension_numbers<[1], [0], [0], [1], [0, 0, 1, 1], [], []>} : vector<16x32xbf16>, vector<32x128xbf16>, vector<16x128xf32> -> vector<16x128xf32>
    %359 = vector.broadcast %319 : vector<1x128xf32> to vector<16x128xf32>
    %360 = arith.addf %358, %359 : vector<16x128xf32>
    %361 = vector.extract_strided_slice %356 {offsets = [0, 0], sizes = [8, 32], strides = [1, 1]} : vector<8x64xf32> to vector<8x32xf32>
    %362 = vector.extract_strided_slice %360 {offsets = [0, 0], sizes = [16, 32], strides = [1, 1]} : vector<16x128xf32> to vector<16x32xf32>
    %363 = vector.extract_strided_slice %360 {offsets = [0, 64], sizes = [16, 32], strides = [1, 1]} : vector<16x128xf32> to vector<16x32xf32>
    %364 = arith.truncf %361 : vector<8x32xf32> to vector<8x32xbf16>
    %365 = arith.truncf %362 : vector<16x32xf32> to vector<16x32xbf16>
    %cst_125 = arith.constant dense<0.000000e+00> : vector<8x16xf32>
    %366 = tpu.matmul %364, %365, %cst_125 {dimension_numbers = #tpu.dot_dimension_numbers<[1], [1], [0], [0], [0, 0, 1, 0], [], []>} : vector<8x32xbf16>, vector<16x32xbf16>, vector<8x16xf32> -> vector<8x16xf32>
    %cst_126 = arith.constant 0.176776692 : f32
    %367 = vector.broadcast %cst_126 : f32 to vector<8x16xf32>
    %368 = arith.mulf %366, %367 : vector<8x16xf32>
    %369 = arith.addf %368, %259 : vector<8x16xf32>
    %cst_127 = arith.constant dense<0xFF800000> : vector<8xf32>
    %370 = vector.multi_reduction <maximumf>, %369, %cst_127 [1] : vector<8x16xf32> to vector<8xf32>
    %371 = vector.shape_cast %370 : vector<8xf32> to vector<8x1xf32>
    %372 = vector.broadcast %371 : vector<8x1xf32> to vector<8x16xf32>
    %373 = arith.subf %369, %372 : vector<8x16xf32>
    %374 = math.exp %373 : vector<8x16xf32>
    %cst_128 = arith.constant dense<0.000000e+00> : vector<8xf32>
    %375 = vector.multi_reduction <add>, %374, %cst_128 [1] : vector<8x16xf32> to vector<8xf32>
    %376 = vector.shape_cast %375 : vector<8xf32> to vector<8x1xf32>
    %377 = tpu.reciprocal %376 {approx = true} : vector<8x1xf32> -> vector<8x1xf32>
    %378 = vector.broadcast %377 : vector<8x1xf32> to vector<8x16xf32>
    %379 = arith.mulf %374, %378 : vector<8x16xf32>
    %380 = arith.truncf %379 : vector<8x16xf32> to vector<8x16xbf16>
    %381 = arith.truncf %363 : vector<16x32xf32> to vector<16x32xbf16>
    %cst_129 = arith.constant dense<0.000000e+00> : vector<8x32xf32>
    %382 = tpu.matmul %380, %381, %cst_129 {dimension_numbers = #tpu.dot_dimension_numbers<[1], [0], [0], [1], [0, 0, 1, 1], [], []>} : vector<8x16xbf16>, vector<16x32xbf16>, vector<8x32xf32> -> vector<8x32xf32>
    %383 = vector.extract_strided_slice %356 {offsets = [0, 32], sizes = [8, 32], strides = [1, 1]} : vector<8x64xf32> to vector<8x32xf32>
    %384 = vector.extract_strided_slice %360 {offsets = [0, 32], sizes = [16, 32], strides = [1, 1]} : vector<16x128xf32> to vector<16x32xf32>
    %385 = vector.extract_strided_slice %360 {offsets = [0, 96], sizes = [16, 32], strides = [1, 1]} : vector<16x128xf32> to vector<16x32xf32>
    %386 = arith.truncf %383 : vector<8x32xf32> to vector<8x32xbf16>
    %387 = arith.truncf %384 : vector<16x32xf32> to vector<16x32xbf16>
    %cst_130 = arith.constant dense<0.000000e+00> : vector<8x16xf32>
    %388 = tpu.matmul %386, %387, %cst_130 {dimension_numbers = #tpu.dot_dimension_numbers<[1], [1], [0], [0], [0, 0, 1, 0], [], []>} : vector<8x32xbf16>, vector<16x32xbf16>, vector<8x16xf32> -> vector<8x16xf32>
    %cst_131 = arith.constant 0.176776692 : f32
    %389 = vector.broadcast %cst_131 : f32 to vector<8x16xf32>
    %390 = arith.mulf %388, %389 : vector<8x16xf32>
    %391 = arith.addf %390, %259 : vector<8x16xf32>
    %cst_132 = arith.constant dense<0xFF800000> : vector<8xf32>
    %392 = vector.multi_reduction <maximumf>, %391, %cst_132 [1] : vector<8x16xf32> to vector<8xf32>
    %393 = vector.shape_cast %392 : vector<8xf32> to vector<8x1xf32>
    %394 = vector.broadcast %393 : vector<8x1xf32> to vector<8x16xf32>
    %395 = arith.subf %391, %394 : vector<8x16xf32>
    %396 = math.exp %395 : vector<8x16xf32>
    %cst_133 = arith.constant dense<0.000000e+00> : vector<8xf32>
    %397 = vector.multi_reduction <add>, %396, %cst_133 [1] : vector<8x16xf32> to vector<8xf32>
    %398 = vector.shape_cast %397 : vector<8xf32> to vector<8x1xf32>
    %399 = tpu.reciprocal %398 {approx = true} : vector<8x1xf32> -> vector<8x1xf32>
    %400 = vector.broadcast %399 : vector<8x1xf32> to vector<8x16xf32>
    %401 = arith.mulf %396, %400 : vector<8x16xf32>
    %402 = arith.truncf %401 : vector<8x16xf32> to vector<8x16xbf16>
    %403 = arith.truncf %385 : vector<16x32xf32> to vector<16x32xbf16>
    %cst_134 = arith.constant dense<0.000000e+00> : vector<8x32xf32>
    %404 = tpu.matmul %402, %403, %cst_134 {dimension_numbers = #tpu.dot_dimension_numbers<[1], [0], [0], [1], [0, 0, 1, 1], [], []>} : vector<8x16xbf16>, vector<16x32xbf16>, vector<8x32xf32> -> vector<8x32xf32>
    %405 = tpu.concatenate %382, %404 in 1 : vector<8x32xf32>, vector<8x32xf32> -> vector<8x64xf32>
    %406 = tpu.concatenate %405, %351 in 1 : vector<8x64xf32>, vector<8x32xf32> -> vector<8x96xf32>
    %407 = vector.broadcast %321 : vector<1x96xf32> to vector<8x96xf32>
    %408 = arith.mulf %406, %407 : vector<8x96xf32>
    %409 = tpu.concatenate %408, %408, %408, %408 in 1 : vector<8x96xf32>, vector<8x96xf32>, vector<8x96xf32>, vector<8x96xf32> -> vector<8x384xf32>
    %410 = arith.mulf %409, %101 : vector<8x384xf32>
    %411 = arith.truncf %410 : vector<8x384xf32> to vector<8x384xbf16>
    %cst_135 = arith.constant dense<0.000000e+00> : vector<8x96xf32>
    %412 = tpu.matmul %411, %323, %cst_135 {dimension_numbers = #tpu.dot_dimension_numbers<[1], [0], [0], [1], [0, 0, 1, 1], [], []>} : vector<8x384xbf16>, vector<384x96xbf16>, vector<8x96xf32> -> vector<8x96xf32>
    %413 = arith.addf %412, %325 : vector<8x96xf32>
    %414 = vector.extract_strided_slice %413 {offsets = [0, 0], sizes = [8, 48], strides = [1, 1]} : vector<8x96xf32> to vector<8x48xf32>
    %415 = arith.mulf %414, %414 : vector<8x48xf32>
    %416 = arith.mulf %414, %415 : vector<8x48xf32>
    %cst_136 = arith.constant 4.471500e-02 : f32
    %417 = vector.broadcast %cst_136 : f32 to vector<8x48xf32>
    %418 = arith.mulf %417, %416 : vector<8x48xf32>
    %419 = arith.addf %414, %418 : vector<8x48xf32>
    %cst_137 = arith.constant 0.797884583 : f32
    %420 = vector.broadcast %cst_137 : f32 to vector<8x48xf32>
    %421 = arith.mulf %420, %419 : vector<8x48xf32>
    %422 = math.tanh %421 : vector<8x48xf32>
    %cst_138 = arith.constant 1.000000e+00 : f32
    %423 = vector.broadcast %cst_138 : f32 to vector<8x48xf32>
    %424 = arith.addf %423, %422 : vector<8x48xf32>
    %cst_139 = arith.constant 5.000000e-01 : f32
    %425 = vector.broadcast %cst_139 : f32 to vector<8x48xf32>
    %426 = arith.mulf %425, %424 : vector<8x48xf32>
    %427 = arith.mulf %414, %426 : vector<8x48xf32>
    %428 = vector.extract_strided_slice %413 {offsets = [0, 48], sizes = [8, 48], strides = [1, 1]} : vector<8x96xf32> to vector<8x48xf32>
    %429 = arith.mulf %427, %428 : vector<8x48xf32>
    %430 = tpu.concatenate %429, %429, %429, %429 in 1 : vector<8x48xf32>, vector<8x48xf32>, vector<8x48xf32>, vector<8x48xf32> -> vector<8x192xf32>
    %431 = arith.mulf %430, %203 : vector<8x192xf32>
    %432 = arith.truncf %431 : vector<8x192xf32> to vector<8x192xbf16>
    %cst_140 = arith.constant dense<0.000000e+00> : vector<8x33xf32>
    %433 = tpu.matmul %432, %327, %cst_140 {dimension_numbers = #tpu.dot_dimension_numbers<[1], [0], [0], [1], [0, 0, 1, 1], [], []>} : vector<8x192xbf16>, vector<192x33xbf16>, vector<8x33xf32> -> vector<8x33xf32>
    %434 = arith.addf %433, %329 : vector<8x33xf32>
    %435 = vector.extract_strided_slice %434 {offsets = [0, 32], sizes = [8, 1], strides = [1, 1]} : vector<8x33xf32> to vector<8x1xf32>
    %436 = arith.negf %435 : vector<8x1xf32>
    %437 = math.exp %436 : vector<8x1xf32>
    %cst_141 = arith.constant 1.000000e+00 : f32
    %438 = vector.broadcast %cst_141 : f32 to vector<8x1xf32>
    %439 = arith.addf %438, %437 : vector<8x1xf32>
    %440 = arith.divf %438, %439 : vector<8x1xf32>
    %cst_142 = arith.constant 2.000000e+00 : f32
    %441 = vector.broadcast %cst_142 : f32 to vector<8x1xf32>
    %442 = arith.mulf %440, %441 : vector<8x1xf32>
    %443 = vector.extract_strided_slice %434 {offsets = [0, 0], sizes = [8, 32], strides = [1, 1]} : vector<8x33xf32> to vector<8x32xf32>
    %444 = vector.broadcast %442 : vector<8x1xf32> to vector<8x32xf32>
    %445 = arith.mulf %443, %444 : vector<8x32xf32>
    %446 = arith.addf %288, %445 : vector<8x32xf32>
    %c1 = arith.constant 1 : index
    %c0_143 = arith.constant 0 : index
    %c0_144 = arith.constant 0 : index
    %447 = vector.load %arg6[%c1, %c0_143, %c0_144] : memref<3x2x32xf32, #tpu.memory_space<vmem>>, vector<1x2x32xf32>
    %448 = vector.shape_cast %447 : vector<1x2x32xf32> to vector<2x32xf32>
    %449 = vector.extract_strided_slice %448 {offsets = [0, 0], sizes = [1, 32], strides = [1, 1]} : vector<2x32xf32> to vector<1x32xf32>
    %450 = vector.extract_strided_slice %448 {offsets = [1, 0], sizes = [1, 32], strides = [1, 1]} : vector<2x32xf32> to vector<1x32xf32>
    %c1_145 = arith.constant 1 : index
    %c0_146 = arith.constant 0 : index
    %c0_147 = arith.constant 0 : index
    %451 = vector.load %arg7[%c1_145, %c0_146, %c0_147] : memref<3x128x64xbf16, #tpu.memory_space<vmem>>, vector<1x128x64xbf16>
    %452 = vector.shape_cast %451 : vector<1x128x64xbf16> to vector<128x64xbf16>
    %c1_148 = arith.constant 1 : index
    %c0_149 = arith.constant 0 : index
    %c0_150 = arith.constant 0 : index
    %453 = vector.load %arg8[%c1_148, %c0_149, %c0_150] : memref<3x8x64xf32, #tpu.memory_space<vmem>>, vector<1x8x64xf32>
    %454 = vector.shape_cast %453 : vector<1x8x64xf32> to vector<8x64xf32>
    %c1_151 = arith.constant 1 : index
    %c0_152 = arith.constant 0 : index
    %c0_153 = arith.constant 0 : index
    %455 = vector.load %arg9[%c1_151, %c0_152, %c0_153] : memref<3x32x128xbf16, #tpu.memory_space<vmem>>, vector<1x32x128xbf16>
    %456 = vector.shape_cast %455 : vector<1x32x128xbf16> to vector<32x128xbf16>
    %c1_154 = arith.constant 1 : index
    %c0_155 = arith.constant 0 : index
    %c0_156 = arith.constant 0 : index
    %457 = vector.load %arg10[%c1_154, %c0_155, %c0_156] : memref<3x1x128xf32, #tpu.memory_space<vmem>>, vector<1x1x128xf32>
    %458 = vector.shape_cast %457 : vector<1x1x128xf32> to vector<1x128xf32>
    %c1_157 = arith.constant 1 : index
    %c0_158 = arith.constant 0 : index
    %c0_159 = arith.constant 0 : index
    %459 = vector.load %arg11[%c1_157, %c0_158, %c0_159] : memref<3x1x96xf32, #tpu.memory_space<vmem>>, vector<1x1x96xf32>
    %460 = vector.shape_cast %459 : vector<1x1x96xf32> to vector<1x96xf32>
    %c1_160 = arith.constant 1 : index
    %c0_161 = arith.constant 0 : index
    %c0_162 = arith.constant 0 : index
    %461 = vector.load %arg12[%c1_160, %c0_161, %c0_162] : memref<3x384x96xbf16, #tpu.memory_space<vmem>>, vector<1x384x96xbf16>
    %462 = vector.shape_cast %461 : vector<1x384x96xbf16> to vector<384x96xbf16>
    %c1_163 = arith.constant 1 : index
    %c0_164 = arith.constant 0 : index
    %c0_165 = arith.constant 0 : index
    %463 = vector.load %arg13[%c1_163, %c0_164, %c0_165] : memref<3x8x96xf32, #tpu.memory_space<vmem>>, vector<1x8x96xf32>
    %464 = vector.shape_cast %463 : vector<1x8x96xf32> to vector<8x96xf32>
    %c1_166 = arith.constant 1 : index
    %c0_167 = arith.constant 0 : index
    %c0_168 = arith.constant 0 : index
    %465 = vector.load %arg14[%c1_166, %c0_167, %c0_168] : memref<3x192x33xbf16, #tpu.memory_space<vmem>>, vector<1x192x33xbf16>
    %466 = vector.shape_cast %465 : vector<1x192x33xbf16> to vector<192x33xbf16>
    %c1_169 = arith.constant 1 : index
    %c0_170 = arith.constant 0 : index
    %c0_171 = arith.constant 0 : index
    %467 = vector.load %arg15[%c1_169, %c0_170, %c0_171] : memref<3x8x33xf32, #tpu.memory_space<vmem>>, vector<1x8x33xf32>
    %468 = vector.shape_cast %467 : vector<1x8x33xf32> to vector<8x33xf32>
    %cst_172 = arith.constant dense<0.000000e+00> : vector<8xf32>
    %469 = vector.multi_reduction <add>, %446, %cst_172 [1] : vector<8x32xf32> to vector<8xf32>
    %470 = vector.shape_cast %469 : vector<8xf32> to vector<8x1xf32>
    %cst_173 = arith.constant 3.200000e+01 : f32
    %471 = vector.broadcast %cst_173 : f32 to vector<8x1xf32>
    %472 = arith.divf %470, %471 : vector<8x1xf32>
    %473 = vector.broadcast %472 : vector<8x1xf32> to vector<8x32xf32>
    %474 = arith.subf %446, %473 : vector<8x32xf32>
    %475 = arith.mulf %474, %474 : vector<8x32xf32>
    %cst_174 = arith.constant dense<0.000000e+00> : vector<8xf32>
    %476 = vector.multi_reduction <add>, %475, %cst_174 [1] : vector<8x32xf32> to vector<8xf32>
    %477 = vector.shape_cast %476 : vector<8xf32> to vector<8x1xf32>
    %cst_175 = arith.constant 3.200000e+01 : f32
    %478 = vector.broadcast %cst_175 : f32 to vector<8x1xf32>
    %479 = arith.divf %477, %478 : vector<8x1xf32>
    %480 = vector.broadcast %472 : vector<8x1xf32> to vector<8x32xf32>
    %481 = arith.subf %446, %480 : vector<8x32xf32>
    %cst_176 = arith.constant 9.99999974E-6 : f32
    %482 = vector.broadcast %cst_176 : f32 to vector<8x1xf32>
    %483 = arith.addf %479, %482 : vector<8x1xf32>
    %484 = math.rsqrt %483 : vector<8x1xf32>
    %485 = vector.broadcast %484 : vector<8x1xf32> to vector<8x32xf32>
    %486 = arith.mulf %481, %485 : vector<8x32xf32>
    %487 = vector.broadcast %449 : vector<1x32xf32> to vector<8x32xf32>
    %488 = arith.mulf %486, %487 : vector<8x32xf32>
    %489 = vector.broadcast %450 : vector<1x32xf32> to vector<8x32xf32>
    %490 = arith.addf %488, %489 : vector<8x32xf32>
    %491 = tpu.concatenate %490, %490, %490, %490 in 1 : vector<8x32xf32>, vector<8x32xf32>, vector<8x32xf32>, vector<8x32xf32> -> vector<8x128xf32>
    %492 = arith.mulf %491, %50 : vector<8x128xf32>
    %493 = arith.truncf %492 : vector<8x128xf32> to vector<8x128xbf16>
    %cst_177 = arith.constant dense<0.000000e+00> : vector<8x64xf32>
    %494 = tpu.matmul %493, %452, %cst_177 {dimension_numbers = #tpu.dot_dimension_numbers<[1], [0], [0], [1], [0, 0, 1, 1], [], []>} : vector<8x128xbf16>, vector<128x64xbf16>, vector<8x64xf32> -> vector<8x64xf32>
    %495 = arith.addf %494, %454 : vector<8x64xf32>
    %496 = arith.truncf %490 : vector<8x32xf32> to vector<8x32xbf16>
    %cst_178 = arith.constant dense<0.000000e+00> : vector<8x128xf32>
    %497 = tpu.matmul %496, %456, %cst_178 {dimension_numbers = #tpu.dot_dimension_numbers<[1], [0], [0], [1], [0, 0, 1, 1], [], []>} : vector<8x32xbf16>, vector<32x128xbf16>, vector<8x128xf32> -> vector<8x128xf32>
    %498 = vector.broadcast %458 : vector<1x128xf32> to vector<8x128xf32>
    %499 = arith.addf %497, %498 : vector<8x128xf32>
    %500 = vector.extract_strided_slice %495 {offsets = [0, 0], sizes = [8, 32], strides = [1, 1]} : vector<8x64xf32> to vector<8x32xf32>
    %501 = vector.extract_strided_slice %499 {offsets = [0, 0], sizes = [8, 32], strides = [1, 1]} : vector<8x128xf32> to vector<8x32xf32>
    %502 = vector.extract_strided_slice %499 {offsets = [0, 64], sizes = [8, 32], strides = [1, 1]} : vector<8x128xf32> to vector<8x32xf32>
    %503 = arith.truncf %500 : vector<8x32xf32> to vector<8x32xbf16>
    %504 = arith.truncf %501 : vector<8x32xf32> to vector<8x32xbf16>
    %cst_179 = arith.constant dense<0.000000e+00> : vector<8x8xf32>
    %505 = tpu.matmul %503, %504, %cst_179 {dimension_numbers = #tpu.dot_dimension_numbers<[1], [1], [0], [0], [0, 0, 1, 0], [], []>} : vector<8x32xbf16>, vector<8x32xbf16>, vector<8x8xf32> -> vector<8x8xf32>
    %cst_180 = arith.constant 0.176776692 : f32
    %506 = vector.broadcast %cst_180 : f32 to vector<8x8xf32>
    %507 = arith.mulf %505, %506 : vector<8x8xf32>
    %508 = arith.addf %507, %231 : vector<8x8xf32>
    %cst_181 = arith.constant dense<0xFF800000> : vector<8xf32>
    %509 = vector.multi_reduction <maximumf>, %508, %cst_181 [1] : vector<8x8xf32> to vector<8xf32>
    %510 = vector.shape_cast %509 : vector<8xf32> to vector<8x1xf32>
    %511 = vector.broadcast %510 : vector<8x1xf32> to vector<8x8xf32>
    %512 = arith.subf %508, %511 : vector<8x8xf32>
    %513 = math.exp %512 : vector<8x8xf32>
    %cst_182 = arith.constant dense<0.000000e+00> : vector<8xf32>
    %514 = vector.multi_reduction <add>, %513, %cst_182 [1] : vector<8x8xf32> to vector<8xf32>
    %515 = vector.shape_cast %514 : vector<8xf32> to vector<8x1xf32>
    %516 = tpu.reciprocal %515 {approx = true} : vector<8x1xf32> -> vector<8x1xf32>
    %517 = vector.broadcast %516 : vector<8x1xf32> to vector<8x8xf32>
    %518 = arith.mulf %513, %517 : vector<8x8xf32>
    %519 = arith.truncf %518 : vector<8x8xf32> to vector<8x8xbf16>
    %520 = arith.truncf %502 : vector<8x32xf32> to vector<8x32xbf16>
    %cst_183 = arith.constant dense<0.000000e+00> : vector<8x32xf32>
    %521 = tpu.matmul %519, %520, %cst_183 {dimension_numbers = #tpu.dot_dimension_numbers<[1], [0], [0], [1], [0, 0, 1, 1], [], []>} : vector<8x8xbf16>, vector<8x32xbf16>, vector<8x32xf32> -> vector<8x32xf32>
    %522 = vector.extract_strided_slice %495 {offsets = [0, 32], sizes = [8, 32], strides = [1, 1]} : vector<8x64xf32> to vector<8x32xf32>
    %523 = vector.extract_strided_slice %499 {offsets = [0, 32], sizes = [8, 32], strides = [1, 1]} : vector<8x128xf32> to vector<8x32xf32>
    %524 = vector.extract_strided_slice %499 {offsets = [0, 96], sizes = [8, 32], strides = [1, 1]} : vector<8x128xf32> to vector<8x32xf32>
    %525 = arith.truncf %522 : vector<8x32xf32> to vector<8x32xbf16>
    %526 = arith.truncf %523 : vector<8x32xf32> to vector<8x32xbf16>
    %cst_184 = arith.constant dense<0.000000e+00> : vector<8x8xf32>
    %527 = tpu.matmul %525, %526, %cst_184 {dimension_numbers = #tpu.dot_dimension_numbers<[1], [1], [0], [0], [0, 0, 1, 0], [], []>} : vector<8x32xbf16>, vector<8x32xbf16>, vector<8x8xf32> -> vector<8x8xf32>
    %cst_185 = arith.constant 0.176776692 : f32
    %528 = vector.broadcast %cst_185 : f32 to vector<8x8xf32>
    %529 = arith.mulf %527, %528 : vector<8x8xf32>
    %530 = arith.addf %529, %231 : vector<8x8xf32>
    %cst_186 = arith.constant dense<0xFF800000> : vector<8xf32>
    %531 = vector.multi_reduction <maximumf>, %530, %cst_186 [1] : vector<8x8xf32> to vector<8xf32>
    %532 = vector.shape_cast %531 : vector<8xf32> to vector<8x1xf32>
    %533 = vector.broadcast %532 : vector<8x1xf32> to vector<8x8xf32>
    %534 = arith.subf %530, %533 : vector<8x8xf32>
    %535 = math.exp %534 : vector<8x8xf32>
    %cst_187 = arith.constant dense<0.000000e+00> : vector<8xf32>
    %536 = vector.multi_reduction <add>, %535, %cst_187 [1] : vector<8x8xf32> to vector<8xf32>
    %537 = vector.shape_cast %536 : vector<8xf32> to vector<8x1xf32>
    %538 = tpu.reciprocal %537 {approx = true} : vector<8x1xf32> -> vector<8x1xf32>
    %539 = vector.broadcast %538 : vector<8x1xf32> to vector<8x8xf32>
    %540 = arith.mulf %535, %539 : vector<8x8xf32>
    %541 = arith.truncf %540 : vector<8x8xf32> to vector<8x8xbf16>
    %542 = arith.truncf %524 : vector<8x32xf32> to vector<8x32xbf16>
    %cst_188 = arith.constant dense<0.000000e+00> : vector<8x32xf32>
    %543 = tpu.matmul %541, %542, %cst_188 {dimension_numbers = #tpu.dot_dimension_numbers<[1], [0], [0], [1], [0, 0, 1, 1], [], []>} : vector<8x8xbf16>, vector<8x32xbf16>, vector<8x32xf32> -> vector<8x32xf32>
    %544 = tpu.concatenate %521, %543 in 1 : vector<8x32xf32>, vector<8x32xf32> -> vector<8x64xf32>
    %545 = tpu.concatenate %544, %490 in 1 : vector<8x64xf32>, vector<8x32xf32> -> vector<8x96xf32>
    %546 = vector.broadcast %460 : vector<1x96xf32> to vector<8x96xf32>
    %547 = arith.mulf %545, %546 : vector<8x96xf32>
    %548 = tpu.concatenate %547, %547, %547, %547 in 1 : vector<8x96xf32>, vector<8x96xf32>, vector<8x96xf32>, vector<8x96xf32> -> vector<8x384xf32>
    %549 = arith.mulf %548, %101 : vector<8x384xf32>
    %550 = arith.truncf %549 : vector<8x384xf32> to vector<8x384xbf16>
    %cst_189 = arith.constant dense<0.000000e+00> : vector<8x96xf32>
    %551 = tpu.matmul %550, %462, %cst_189 {dimension_numbers = #tpu.dot_dimension_numbers<[1], [0], [0], [1], [0, 0, 1, 1], [], []>} : vector<8x384xbf16>, vector<384x96xbf16>, vector<8x96xf32> -> vector<8x96xf32>
    %552 = arith.addf %551, %464 : vector<8x96xf32>
    %553 = vector.extract_strided_slice %552 {offsets = [0, 0], sizes = [8, 48], strides = [1, 1]} : vector<8x96xf32> to vector<8x48xf32>
    %554 = arith.mulf %553, %553 : vector<8x48xf32>
    %555 = arith.mulf %553, %554 : vector<8x48xf32>
    %cst_190 = arith.constant 4.471500e-02 : f32
    %556 = vector.broadcast %cst_190 : f32 to vector<8x48xf32>
    %557 = arith.mulf %556, %555 : vector<8x48xf32>
    %558 = arith.addf %553, %557 : vector<8x48xf32>
    %cst_191 = arith.constant 0.797884583 : f32
    %559 = vector.broadcast %cst_191 : f32 to vector<8x48xf32>
    %560 = arith.mulf %559, %558 : vector<8x48xf32>
    %561 = math.tanh %560 : vector<8x48xf32>
    %cst_192 = arith.constant 1.000000e+00 : f32
    %562 = vector.broadcast %cst_192 : f32 to vector<8x48xf32>
    %563 = arith.addf %562, %561 : vector<8x48xf32>
    %cst_193 = arith.constant 5.000000e-01 : f32
    %564 = vector.broadcast %cst_193 : f32 to vector<8x48xf32>
    %565 = arith.mulf %564, %563 : vector<8x48xf32>
    %566 = arith.mulf %553, %565 : vector<8x48xf32>
    %567 = vector.extract_strided_slice %552 {offsets = [0, 48], sizes = [8, 48], strides = [1, 1]} : vector<8x96xf32> to vector<8x48xf32>
    %568 = arith.mulf %566, %567 : vector<8x48xf32>
    %569 = tpu.concatenate %568, %568, %568, %568 in 1 : vector<8x48xf32>, vector<8x48xf32>, vector<8x48xf32>, vector<8x48xf32> -> vector<8x192xf32>
    %570 = arith.mulf %569, %203 : vector<8x192xf32>
    %571 = arith.truncf %570 : vector<8x192xf32> to vector<8x192xbf16>
    %cst_194 = arith.constant dense<0.000000e+00> : vector<8x33xf32>
    %572 = tpu.matmul %571, %466, %cst_194 {dimension_numbers = #tpu.dot_dimension_numbers<[1], [0], [0], [1], [0, 0, 1, 1], [], []>} : vector<8x192xbf16>, vector<192x33xbf16>, vector<8x33xf32> -> vector<8x33xf32>
    %573 = arith.addf %572, %468 : vector<8x33xf32>
    %574 = vector.extract_strided_slice %573 {offsets = [0, 32], sizes = [8, 1], strides = [1, 1]} : vector<8x33xf32> to vector<8x1xf32>
    %575 = arith.negf %574 : vector<8x1xf32>
    %576 = math.exp %575 : vector<8x1xf32>
    %cst_195 = arith.constant 1.000000e+00 : f32
    %577 = vector.broadcast %cst_195 : f32 to vector<8x1xf32>
    %578 = arith.addf %577, %576 : vector<8x1xf32>
    %579 = arith.divf %577, %578 : vector<8x1xf32>
    %cst_196 = arith.constant 2.000000e+00 : f32
    %580 = vector.broadcast %cst_196 : f32 to vector<8x1xf32>
    %581 = arith.mulf %579, %580 : vector<8x1xf32>
    %582 = vector.extract_strided_slice %573 {offsets = [0, 0], sizes = [8, 32], strides = [1, 1]} : vector<8x33xf32> to vector<8x32xf32>
    %583 = vector.broadcast %581 : vector<8x1xf32> to vector<8x32xf32>
    %584 = arith.mulf %582, %583 : vector<8x32xf32>
    %585 = arith.addf %446, %584 : vector<8x32xf32>
    %c2 = arith.constant 2 : index
    %c0_197 = arith.constant 0 : index
    %c0_198 = arith.constant 0 : index
    %586 = vector.load %arg6[%c2, %c0_197, %c0_198] : memref<3x2x32xf32, #tpu.memory_space<vmem>>, vector<1x2x32xf32>
    %587 = vector.shape_cast %586 : vector<1x2x32xf32> to vector<2x32xf32>
    %588 = vector.extract_strided_slice %587 {offsets = [0, 0], sizes = [1, 32], strides = [1, 1]} : vector<2x32xf32> to vector<1x32xf32>
    %589 = vector.extract_strided_slice %587 {offsets = [1, 0], sizes = [1, 32], strides = [1, 1]} : vector<2x32xf32> to vector<1x32xf32>
    %c2_199 = arith.constant 2 : index
    %c0_200 = arith.constant 0 : index
    %c0_201 = arith.constant 0 : index
    %590 = vector.load %arg7[%c2_199, %c0_200, %c0_201] : memref<3x128x64xbf16, #tpu.memory_space<vmem>>, vector<1x128x64xbf16>
    %591 = vector.shape_cast %590 : vector<1x128x64xbf16> to vector<128x64xbf16>
    %c2_202 = arith.constant 2 : index
    %c0_203 = arith.constant 0 : index
    %c0_204 = arith.constant 0 : index
    %592 = vector.load %arg8[%c2_202, %c0_203, %c0_204] : memref<3x8x64xf32, #tpu.memory_space<vmem>>, vector<1x8x64xf32>
    %593 = vector.shape_cast %592 : vector<1x8x64xf32> to vector<8x64xf32>
    %c2_205 = arith.constant 2 : index
    %c0_206 = arith.constant 0 : index
    %c0_207 = arith.constant 0 : index
    %594 = vector.load %arg9[%c2_205, %c0_206, %c0_207] : memref<3x32x128xbf16, #tpu.memory_space<vmem>>, vector<1x32x128xbf16>
    %595 = vector.shape_cast %594 : vector<1x32x128xbf16> to vector<32x128xbf16>
    %c2_208 = arith.constant 2 : index
    %c0_209 = arith.constant 0 : index
    %c0_210 = arith.constant 0 : index
    %596 = vector.load %arg10[%c2_208, %c0_209, %c0_210] : memref<3x1x128xf32, #tpu.memory_space<vmem>>, vector<1x1x128xf32>
    %597 = vector.shape_cast %596 : vector<1x1x128xf32> to vector<1x128xf32>
    %c2_211 = arith.constant 2 : index
    %c0_212 = arith.constant 0 : index
    %c0_213 = arith.constant 0 : index
    %598 = vector.load %arg11[%c2_211, %c0_212, %c0_213] : memref<3x1x96xf32, #tpu.memory_space<vmem>>, vector<1x1x96xf32>
    %599 = vector.shape_cast %598 : vector<1x1x96xf32> to vector<1x96xf32>
    %c2_214 = arith.constant 2 : index
    %c0_215 = arith.constant 0 : index
    %c0_216 = arith.constant 0 : index
    %600 = vector.load %arg12[%c2_214, %c0_215, %c0_216] : memref<3x384x96xbf16, #tpu.memory_space<vmem>>, vector<1x384x96xbf16>
    %601 = vector.shape_cast %600 : vector<1x384x96xbf16> to vector<384x96xbf16>
    %c2_217 = arith.constant 2 : index
    %c0_218 = arith.constant 0 : index
    %c0_219 = arith.constant 0 : index
    %602 = vector.load %arg13[%c2_217, %c0_218, %c0_219] : memref<3x8x96xf32, #tpu.memory_space<vmem>>, vector<1x8x96xf32>
    %603 = vector.shape_cast %602 : vector<1x8x96xf32> to vector<8x96xf32>
    %c2_220 = arith.constant 2 : index
    %c0_221 = arith.constant 0 : index
    %c0_222 = arith.constant 0 : index
    %604 = vector.load %arg14[%c2_220, %c0_221, %c0_222] : memref<3x192x33xbf16, #tpu.memory_space<vmem>>, vector<1x192x33xbf16>
    %605 = vector.shape_cast %604 : vector<1x192x33xbf16> to vector<192x33xbf16>
    %c2_223 = arith.constant 2 : index
    %c0_224 = arith.constant 0 : index
    %c0_225 = arith.constant 0 : index
    %606 = vector.load %arg15[%c2_223, %c0_224, %c0_225] : memref<3x8x33xf32, #tpu.memory_space<vmem>>, vector<1x8x33xf32>
    %607 = vector.shape_cast %606 : vector<1x8x33xf32> to vector<8x33xf32>
    %cst_226 = arith.constant dense<0.000000e+00> : vector<8xf32>
    %608 = vector.multi_reduction <add>, %585, %cst_226 [1] : vector<8x32xf32> to vector<8xf32>
    %609 = vector.shape_cast %608 : vector<8xf32> to vector<8x1xf32>
    %cst_227 = arith.constant 3.200000e+01 : f32
    %610 = vector.broadcast %cst_227 : f32 to vector<8x1xf32>
    %611 = arith.divf %609, %610 : vector<8x1xf32>
    %612 = vector.broadcast %611 : vector<8x1xf32> to vector<8x32xf32>
    %613 = arith.subf %585, %612 : vector<8x32xf32>
    %614 = arith.mulf %613, %613 : vector<8x32xf32>
    %cst_228 = arith.constant dense<0.000000e+00> : vector<8xf32>
    %615 = vector.multi_reduction <add>, %614, %cst_228 [1] : vector<8x32xf32> to vector<8xf32>
    %616 = vector.shape_cast %615 : vector<8xf32> to vector<8x1xf32>
    %cst_229 = arith.constant 3.200000e+01 : f32
    %617 = vector.broadcast %cst_229 : f32 to vector<8x1xf32>
    %618 = arith.divf %616, %617 : vector<8x1xf32>
    %619 = vector.broadcast %611 : vector<8x1xf32> to vector<8x32xf32>
    %620 = arith.subf %585, %619 : vector<8x32xf32>
    %cst_230 = arith.constant 9.99999974E-6 : f32
    %621 = vector.broadcast %cst_230 : f32 to vector<8x1xf32>
    %622 = arith.addf %618, %621 : vector<8x1xf32>
    %623 = math.rsqrt %622 : vector<8x1xf32>
    %624 = vector.broadcast %623 : vector<8x1xf32> to vector<8x32xf32>
    %625 = arith.mulf %620, %624 : vector<8x32xf32>
    %626 = vector.broadcast %588 : vector<1x32xf32> to vector<8x32xf32>
    %627 = arith.mulf %625, %626 : vector<8x32xf32>
    %628 = vector.broadcast %589 : vector<1x32xf32> to vector<8x32xf32>
    %629 = arith.addf %627, %628 : vector<8x32xf32>
    %630 = tpu.concatenate %629, %629, %629, %629 in 1 : vector<8x32xf32>, vector<8x32xf32>, vector<8x32xf32>, vector<8x32xf32> -> vector<8x128xf32>
    %631 = arith.mulf %630, %50 : vector<8x128xf32>
    %632 = arith.truncf %631 : vector<8x128xf32> to vector<8x128xbf16>
    %cst_231 = arith.constant dense<0.000000e+00> : vector<8x64xf32>
    %633 = tpu.matmul %632, %591, %cst_231 {dimension_numbers = #tpu.dot_dimension_numbers<[1], [0], [0], [1], [0, 0, 1, 1], [], []>} : vector<8x128xbf16>, vector<128x64xbf16>, vector<8x64xf32> -> vector<8x64xf32>
    %634 = arith.addf %633, %593 : vector<8x64xf32>
    %635 = arith.truncf %629 : vector<8x32xf32> to vector<8x32xbf16>
    %cst_232 = arith.constant dense<0.000000e+00> : vector<8x128xf32>
    %636 = tpu.matmul %635, %595, %cst_232 {dimension_numbers = #tpu.dot_dimension_numbers<[1], [0], [0], [1], [0, 0, 1, 1], [], []>} : vector<8x32xbf16>, vector<32x128xbf16>, vector<8x128xf32> -> vector<8x128xf32>
    %637 = vector.broadcast %597 : vector<1x128xf32> to vector<8x128xf32>
    %638 = arith.addf %636, %637 : vector<8x128xf32>
    %639 = vector.extract_strided_slice %634 {offsets = [0, 0], sizes = [8, 32], strides = [1, 1]} : vector<8x64xf32> to vector<8x32xf32>
    %640 = vector.extract_strided_slice %638 {offsets = [0, 0], sizes = [8, 32], strides = [1, 1]} : vector<8x128xf32> to vector<8x32xf32>
    %641 = vector.extract_strided_slice %638 {offsets = [0, 64], sizes = [8, 32], strides = [1, 1]} : vector<8x128xf32> to vector<8x32xf32>
    %642 = arith.truncf %639 : vector<8x32xf32> to vector<8x32xbf16>
    %643 = arith.truncf %640 : vector<8x32xf32> to vector<8x32xbf16>
    %cst_233 = arith.constant dense<0.000000e+00> : vector<8x8xf32>
    %644 = tpu.matmul %642, %643, %cst_233 {dimension_numbers = #tpu.dot_dimension_numbers<[1], [1], [0], [0], [0, 0, 1, 0], [], []>} : vector<8x32xbf16>, vector<8x32xbf16>, vector<8x8xf32> -> vector<8x8xf32>
    %cst_234 = arith.constant 0.176776692 : f32
    %645 = vector.broadcast %cst_234 : f32 to vector<8x8xf32>
    %646 = arith.mulf %644, %645 : vector<8x8xf32>
    %647 = arith.addf %646, %231 : vector<8x8xf32>
    %cst_235 = arith.constant dense<0xFF800000> : vector<8xf32>
    %648 = vector.multi_reduction <maximumf>, %647, %cst_235 [1] : vector<8x8xf32> to vector<8xf32>
    %649 = vector.shape_cast %648 : vector<8xf32> to vector<8x1xf32>
    %650 = vector.broadcast %649 : vector<8x1xf32> to vector<8x8xf32>
    %651 = arith.subf %647, %650 : vector<8x8xf32>
    %652 = math.exp %651 : vector<8x8xf32>
    %cst_236 = arith.constant dense<0.000000e+00> : vector<8xf32>
    %653 = vector.multi_reduction <add>, %652, %cst_236 [1] : vector<8x8xf32> to vector<8xf32>
    %654 = vector.shape_cast %653 : vector<8xf32> to vector<8x1xf32>
    %655 = tpu.reciprocal %654 {approx = true} : vector<8x1xf32> -> vector<8x1xf32>
    %656 = vector.broadcast %655 : vector<8x1xf32> to vector<8x8xf32>
    %657 = arith.mulf %652, %656 : vector<8x8xf32>
    %658 = arith.truncf %657 : vector<8x8xf32> to vector<8x8xbf16>
    %659 = arith.truncf %641 : vector<8x32xf32> to vector<8x32xbf16>
    %cst_237 = arith.constant dense<0.000000e+00> : vector<8x32xf32>
    %660 = tpu.matmul %658, %659, %cst_237 {dimension_numbers = #tpu.dot_dimension_numbers<[1], [0], [0], [1], [0, 0, 1, 1], [], []>} : vector<8x8xbf16>, vector<8x32xbf16>, vector<8x32xf32> -> vector<8x32xf32>
    %661 = vector.extract_strided_slice %634 {offsets = [0, 32], sizes = [8, 32], strides = [1, 1]} : vector<8x64xf32> to vector<8x32xf32>
    %662 = vector.extract_strided_slice %638 {offsets = [0, 32], sizes = [8, 32], strides = [1, 1]} : vector<8x128xf32> to vector<8x32xf32>
    %663 = vector.extract_strided_slice %638 {offsets = [0, 96], sizes = [8, 32], strides = [1, 1]} : vector<8x128xf32> to vector<8x32xf32>
    %664 = arith.truncf %661 : vector<8x32xf32> to vector<8x32xbf16>
    %665 = arith.truncf %662 : vector<8x32xf32> to vector<8x32xbf16>
    %cst_238 = arith.constant dense<0.000000e+00> : vector<8x8xf32>
    %666 = tpu.matmul %664, %665, %cst_238 {dimension_numbers = #tpu.dot_dimension_numbers<[1], [1], [0], [0], [0, 0, 1, 0], [], []>} : vector<8x32xbf16>, vector<8x32xbf16>, vector<8x8xf32> -> vector<8x8xf32>
    %cst_239 = arith.constant 0.176776692 : f32
    %667 = vector.broadcast %cst_239 : f32 to vector<8x8xf32>
    %668 = arith.mulf %666, %667 : vector<8x8xf32>
    %669 = arith.addf %668, %231 : vector<8x8xf32>
    %cst_240 = arith.constant dense<0xFF800000> : vector<8xf32>
    %670 = vector.multi_reduction <maximumf>, %669, %cst_240 [1] : vector<8x8xf32> to vector<8xf32>
    %671 = vector.shape_cast %670 : vector<8xf32> to vector<8x1xf32>
    %672 = vector.broadcast %671 : vector<8x1xf32> to vector<8x8xf32>
    %673 = arith.subf %669, %672 : vector<8x8xf32>
    %674 = math.exp %673 : vector<8x8xf32>
    %cst_241 = arith.constant dense<0.000000e+00> : vector<8xf32>
    %675 = vector.multi_reduction <add>, %674, %cst_241 [1] : vector<8x8xf32> to vector<8xf32>
    %676 = vector.shape_cast %675 : vector<8xf32> to vector<8x1xf32>
    %677 = tpu.reciprocal %676 {approx = true} : vector<8x1xf32> -> vector<8x1xf32>
    %678 = vector.broadcast %677 : vector<8x1xf32> to vector<8x8xf32>
    %679 = arith.mulf %674, %678 : vector<8x8xf32>
    %680 = arith.truncf %679 : vector<8x8xf32> to vector<8x8xbf16>
    %681 = arith.truncf %663 : vector<8x32xf32> to vector<8x32xbf16>
    %cst_242 = arith.constant dense<0.000000e+00> : vector<8x32xf32>
    %682 = tpu.matmul %680, %681, %cst_242 {dimension_numbers = #tpu.dot_dimension_numbers<[1], [0], [0], [1], [0, 0, 1, 1], [], []>} : vector<8x8xbf16>, vector<8x32xbf16>, vector<8x32xf32> -> vector<8x32xf32>
    %683 = tpu.concatenate %660, %682 in 1 : vector<8x32xf32>, vector<8x32xf32> -> vector<8x64xf32>
    %684 = tpu.concatenate %683, %629 in 1 : vector<8x64xf32>, vector<8x32xf32> -> vector<8x96xf32>
    %685 = vector.broadcast %599 : vector<1x96xf32> to vector<8x96xf32>
    %686 = arith.mulf %684, %685 : vector<8x96xf32>
    %687 = tpu.concatenate %686, %686, %686, %686 in 1 : vector<8x96xf32>, vector<8x96xf32>, vector<8x96xf32>, vector<8x96xf32> -> vector<8x384xf32>
    %688 = arith.mulf %687, %101 : vector<8x384xf32>
    %689 = arith.truncf %688 : vector<8x384xf32> to vector<8x384xbf16>
    %cst_243 = arith.constant dense<0.000000e+00> : vector<8x96xf32>
    %690 = tpu.matmul %689, %601, %cst_243 {dimension_numbers = #tpu.dot_dimension_numbers<[1], [0], [0], [1], [0, 0, 1, 1], [], []>} : vector<8x384xbf16>, vector<384x96xbf16>, vector<8x96xf32> -> vector<8x96xf32>
    %691 = arith.addf %690, %603 : vector<8x96xf32>
    %692 = vector.extract_strided_slice %691 {offsets = [0, 0], sizes = [8, 48], strides = [1, 1]} : vector<8x96xf32> to vector<8x48xf32>
    %693 = arith.mulf %692, %692 : vector<8x48xf32>
    %694 = arith.mulf %692, %693 : vector<8x48xf32>
    %cst_244 = arith.constant 4.471500e-02 : f32
    %695 = vector.broadcast %cst_244 : f32 to vector<8x48xf32>
    %696 = arith.mulf %695, %694 : vector<8x48xf32>
    %697 = arith.addf %692, %696 : vector<8x48xf32>
    %cst_245 = arith.constant 0.797884583 : f32
    %698 = vector.broadcast %cst_245 : f32 to vector<8x48xf32>
    %699 = arith.mulf %698, %697 : vector<8x48xf32>
    %700 = math.tanh %699 : vector<8x48xf32>
    %cst_246 = arith.constant 1.000000e+00 : f32
    %701 = vector.broadcast %cst_246 : f32 to vector<8x48xf32>
    %702 = arith.addf %701, %700 : vector<8x48xf32>
    %cst_247 = arith.constant 5.000000e-01 : f32
    %703 = vector.broadcast %cst_247 : f32 to vector<8x48xf32>
    %704 = arith.mulf %703, %702 : vector<8x48xf32>
    %705 = arith.mulf %692, %704 : vector<8x48xf32>
    %706 = vector.extract_strided_slice %691 {offsets = [0, 48], sizes = [8, 48], strides = [1, 1]} : vector<8x96xf32> to vector<8x48xf32>
    %707 = arith.mulf %705, %706 : vector<8x48xf32>
    %708 = tpu.concatenate %707, %707, %707, %707 in 1 : vector<8x48xf32>, vector<8x48xf32>, vector<8x48xf32>, vector<8x48xf32> -> vector<8x192xf32>
    %709 = arith.mulf %708, %203 : vector<8x192xf32>
    %710 = arith.truncf %709 : vector<8x192xf32> to vector<8x192xbf16>
    %cst_248 = arith.constant dense<0.000000e+00> : vector<8x33xf32>
    %711 = tpu.matmul %710, %605, %cst_248 {dimension_numbers = #tpu.dot_dimension_numbers<[1], [0], [0], [1], [0, 0, 1, 1], [], []>} : vector<8x192xbf16>, vector<192x33xbf16>, vector<8x33xf32> -> vector<8x33xf32>
    %712 = arith.addf %711, %607 : vector<8x33xf32>
    %713 = vector.extract_strided_slice %712 {offsets = [0, 32], sizes = [8, 1], strides = [1, 1]} : vector<8x33xf32> to vector<8x1xf32>
    %714 = arith.negf %713 : vector<8x1xf32>
    %715 = math.exp %714 : vector<8x1xf32>
    %cst_249 = arith.constant 1.000000e+00 : f32
    %716 = vector.broadcast %cst_249 : f32 to vector<8x1xf32>
    %717 = arith.addf %716, %715 : vector<8x1xf32>
    %718 = arith.divf %716, %717 : vector<8x1xf32>
    %cst_250 = arith.constant 2.000000e+00 : f32
    %719 = vector.broadcast %cst_250 : f32 to vector<8x1xf32>
    %720 = arith.mulf %718, %719 : vector<8x1xf32>
    %721 = vector.extract_strided_slice %712 {offsets = [0, 0], sizes = [8, 32], strides = [1, 1]} : vector<8x33xf32> to vector<8x32xf32>
    %722 = vector.broadcast %720 : vector<8x1xf32> to vector<8x32xf32>
    %723 = arith.mulf %721, %722 : vector<8x32xf32>
    %724 = arith.addf %585, %723 : vector<8x32xf32>
    %c0_251 = arith.constant 0 : index
    %c0_252 = arith.constant 0 : index
    %725 = vector.load %arg16[%c0_251, %c0_252] : memref<2x32xf32, #tpu.memory_space<vmem>>, vector<2x32xf32>
    %726 = vector.extract_strided_slice %725 {offsets = [0, 0], sizes = [1, 32], strides = [1, 1]} : vector<2x32xf32> to vector<1x32xf32>
    %727 = vector.extract_strided_slice %725 {offsets = [1, 0], sizes = [1, 32], strides = [1, 1]} : vector<2x32xf32> to vector<1x32xf32>
    %c0_253 = arith.constant 0 : index
    %c0_254 = arith.constant 0 : index
    %728 = vector.load %arg17[%c0_253, %c0_254] : memref<128x64xbf16, #tpu.memory_space<vmem>>, vector<128x64xbf16>
    %c0_255 = arith.constant 0 : index
    %c0_256 = arith.constant 0 : index
    %729 = vector.load %arg18[%c0_255, %c0_256] : memref<8x64xf32, #tpu.memory_space<vmem>>, vector<8x64xf32>
    %c0_257 = arith.constant 0 : index
    %c0_258 = arith.constant 0 : index
    %730 = vector.load %arg19[%c0_257, %c0_258] : memref<32x128xbf16, #tpu.memory_space<vmem>>, vector<32x128xbf16>
    %c0_259 = arith.constant 0 : index
    %c0_260 = arith.constant 0 : index
    %731 = vector.load %arg20[%c0_259, %c0_260] : memref<1x128xf32, #tpu.memory_space<vmem>>, vector<1x128xf32>
    %c0_261 = arith.constant 0 : index
    %c0_262 = arith.constant 0 : index
    %732 = vector.load %arg21[%c0_261, %c0_262] : memref<1x64xf32, #tpu.memory_space<vmem>>, vector<1x64xf32>
    %c0_263 = arith.constant 0 : index
    %c0_264 = arith.constant 0 : index
    %733 = vector.load %arg22[%c0_263, %c0_264] : memref<256x96xbf16, #tpu.memory_space<vmem>>, vector<256x96xbf16>
    %c0_265 = arith.constant 0 : index
    %c0_266 = arith.constant 0 : index
    %734 = vector.load %arg23[%c0_265, %c0_266] : memref<8x96xf32, #tpu.memory_space<vmem>>, vector<8x96xf32>
    %c0_267 = arith.constant 0 : index
    %c0_268 = arith.constant 0 : index
    %735 = vector.load %arg24[%c0_267, %c0_268] : memref<192x32xbf16, #tpu.memory_space<vmem>>, vector<192x32xbf16>
    %c0_269 = arith.constant 0 : index
    %c0_270 = arith.constant 0 : index
    %736 = vector.load %arg25[%c0_269, %c0_270] : memref<8x32xf32, #tpu.memory_space<vmem>>, vector<8x32xf32>
    %cst_271 = arith.constant dense<0.000000e+00> : vector<8xf32>
    %737 = vector.multi_reduction <add>, %724, %cst_271 [1] : vector<8x32xf32> to vector<8xf32>
    %738 = vector.shape_cast %737 : vector<8xf32> to vector<8x1xf32>
    %cst_272 = arith.constant 3.200000e+01 : f32
    %739 = vector.broadcast %cst_272 : f32 to vector<8x1xf32>
    %740 = arith.divf %738, %739 : vector<8x1xf32>
    %741 = vector.broadcast %740 : vector<8x1xf32> to vector<8x32xf32>
    %742 = arith.subf %724, %741 : vector<8x32xf32>
    %743 = arith.mulf %742, %742 : vector<8x32xf32>
    %cst_273 = arith.constant dense<0.000000e+00> : vector<8xf32>
    %744 = vector.multi_reduction <add>, %743, %cst_273 [1] : vector<8x32xf32> to vector<8xf32>
    %745 = vector.shape_cast %744 : vector<8xf32> to vector<8x1xf32>
    %cst_274 = arith.constant 3.200000e+01 : f32
    %746 = vector.broadcast %cst_274 : f32 to vector<8x1xf32>
    %747 = arith.divf %745, %746 : vector<8x1xf32>
    %748 = vector.broadcast %740 : vector<8x1xf32> to vector<8x32xf32>
    %749 = arith.subf %724, %748 : vector<8x32xf32>
    %cst_275 = arith.constant 9.99999974E-6 : f32
    %750 = vector.broadcast %cst_275 : f32 to vector<8x1xf32>
    %751 = arith.addf %747, %750 : vector<8x1xf32>
    %752 = math.rsqrt %751 : vector<8x1xf32>
    %753 = vector.broadcast %752 : vector<8x1xf32> to vector<8x32xf32>
    %754 = arith.mulf %749, %753 : vector<8x32xf32>
    %755 = vector.broadcast %726 : vector<1x32xf32> to vector<8x32xf32>
    %756 = arith.mulf %754, %755 : vector<8x32xf32>
    %757 = vector.broadcast %727 : vector<1x32xf32> to vector<8x32xf32>
    %758 = arith.addf %756, %757 : vector<8x32xf32>
    %759 = tpu.concatenate %758, %758, %758, %758 in 1 : vector<8x32xf32>, vector<8x32xf32>, vector<8x32xf32>, vector<8x32xf32> -> vector<8x128xf32>
    %760 = arith.mulf %759, %50 : vector<8x128xf32>
    %761 = arith.truncf %760 : vector<8x128xf32> to vector<8x128xbf16>
    %cst_276 = arith.constant dense<0.000000e+00> : vector<8x64xf32>
    %762 = tpu.matmul %761, %728, %cst_276 {dimension_numbers = #tpu.dot_dimension_numbers<[1], [0], [0], [1], [0, 0, 1, 1], [], []>} : vector<8x128xbf16>, vector<128x64xbf16>, vector<8x64xf32> -> vector<8x64xf32>
    %763 = arith.addf %762, %729 : vector<8x64xf32>
    %764 = arith.truncf %758 : vector<8x32xf32> to vector<8x32xbf16>
    %cst_277 = arith.constant dense<0.000000e+00> : vector<8x128xf32>
    %765 = tpu.matmul %764, %730, %cst_277 {dimension_numbers = #tpu.dot_dimension_numbers<[1], [0], [0], [1], [0, 0, 1, 1], [], []>} : vector<8x32xbf16>, vector<32x128xbf16>, vector<8x128xf32> -> vector<8x128xf32>
    %766 = vector.broadcast %731 : vector<1x128xf32> to vector<8x128xf32>
    %767 = arith.addf %765, %766 : vector<8x128xf32>
    %768 = vector.extract_strided_slice %763 {offsets = [0, 0], sizes = [8, 32], strides = [1, 1]} : vector<8x64xf32> to vector<8x32xf32>
    %769 = vector.extract_strided_slice %767 {offsets = [0, 0], sizes = [8, 32], strides = [1, 1]} : vector<8x128xf32> to vector<8x32xf32>
    %770 = vector.extract_strided_slice %767 {offsets = [0, 64], sizes = [8, 32], strides = [1, 1]} : vector<8x128xf32> to vector<8x32xf32>
    %771 = arith.truncf %768 : vector<8x32xf32> to vector<8x32xbf16>
    %772 = arith.truncf %769 : vector<8x32xf32> to vector<8x32xbf16>
    %cst_278 = arith.constant dense<0.000000e+00> : vector<8x8xf32>
    %773 = tpu.matmul %771, %772, %cst_278 {dimension_numbers = #tpu.dot_dimension_numbers<[1], [1], [0], [0], [0, 0, 1, 0], [], []>} : vector<8x32xbf16>, vector<8x32xbf16>, vector<8x8xf32> -> vector<8x8xf32>
    %cst_279 = arith.constant 0.176776692 : f32
    %774 = vector.broadcast %cst_279 : f32 to vector<8x8xf32>
    %775 = arith.mulf %773, %774 : vector<8x8xf32>
    %776 = arith.addf %775, %231 : vector<8x8xf32>
    %cst_280 = arith.constant dense<0xFF800000> : vector<8xf32>
    %777 = vector.multi_reduction <maximumf>, %776, %cst_280 [1] : vector<8x8xf32> to vector<8xf32>
    %778 = vector.shape_cast %777 : vector<8xf32> to vector<8x1xf32>
    %779 = vector.broadcast %778 : vector<8x1xf32> to vector<8x8xf32>
    %780 = arith.subf %776, %779 : vector<8x8xf32>
    %781 = math.exp %780 : vector<8x8xf32>
    %cst_281 = arith.constant dense<0.000000e+00> : vector<8xf32>
    %782 = vector.multi_reduction <add>, %781, %cst_281 [1] : vector<8x8xf32> to vector<8xf32>
    %783 = vector.shape_cast %782 : vector<8xf32> to vector<8x1xf32>
    %784 = tpu.reciprocal %783 {approx = true} : vector<8x1xf32> -> vector<8x1xf32>
    %785 = vector.broadcast %784 : vector<8x1xf32> to vector<8x8xf32>
    %786 = arith.mulf %781, %785 : vector<8x8xf32>
    %787 = arith.truncf %786 : vector<8x8xf32> to vector<8x8xbf16>
    %788 = arith.truncf %770 : vector<8x32xf32> to vector<8x32xbf16>
    %cst_282 = arith.constant dense<0.000000e+00> : vector<8x32xf32>
    %789 = tpu.matmul %787, %788, %cst_282 {dimension_numbers = #tpu.dot_dimension_numbers<[1], [0], [0], [1], [0, 0, 1, 1], [], []>} : vector<8x8xbf16>, vector<8x32xbf16>, vector<8x32xf32> -> vector<8x32xf32>
    %790 = vector.extract_strided_slice %763 {offsets = [0, 32], sizes = [8, 32], strides = [1, 1]} : vector<8x64xf32> to vector<8x32xf32>
    %791 = vector.extract_strided_slice %767 {offsets = [0, 32], sizes = [8, 32], strides = [1, 1]} : vector<8x128xf32> to vector<8x32xf32>
    %792 = vector.extract_strided_slice %767 {offsets = [0, 96], sizes = [8, 32], strides = [1, 1]} : vector<8x128xf32> to vector<8x32xf32>
    %793 = arith.truncf %790 : vector<8x32xf32> to vector<8x32xbf16>
    %794 = arith.truncf %791 : vector<8x32xf32> to vector<8x32xbf16>
    %cst_283 = arith.constant dense<0.000000e+00> : vector<8x8xf32>
    %795 = tpu.matmul %793, %794, %cst_283 {dimension_numbers = #tpu.dot_dimension_numbers<[1], [1], [0], [0], [0, 0, 1, 0], [], []>} : vector<8x32xbf16>, vector<8x32xbf16>, vector<8x8xf32> -> vector<8x8xf32>
    %cst_284 = arith.constant 0.176776692 : f32
    %796 = vector.broadcast %cst_284 : f32 to vector<8x8xf32>
    %797 = arith.mulf %795, %796 : vector<8x8xf32>
    %798 = arith.addf %797, %231 : vector<8x8xf32>
    %cst_285 = arith.constant dense<0xFF800000> : vector<8xf32>
    %799 = vector.multi_reduction <maximumf>, %798, %cst_285 [1] : vector<8x8xf32> to vector<8xf32>
    %800 = vector.shape_cast %799 : vector<8xf32> to vector<8x1xf32>
    %801 = vector.broadcast %800 : vector<8x1xf32> to vector<8x8xf32>
    %802 = arith.subf %798, %801 : vector<8x8xf32>
    %803 = math.exp %802 : vector<8x8xf32>
    %cst_286 = arith.constant dense<0.000000e+00> : vector<8xf32>
    %804 = vector.multi_reduction <add>, %803, %cst_286 [1] : vector<8x8xf32> to vector<8xf32>
    %805 = vector.shape_cast %804 : vector<8xf32> to vector<8x1xf32>
    %806 = tpu.reciprocal %805 {approx = true} : vector<8x1xf32> -> vector<8x1xf32>
    %807 = vector.broadcast %806 : vector<8x1xf32> to vector<8x8xf32>
    %808 = arith.mulf %803, %807 : vector<8x8xf32>
    %809 = arith.truncf %808 : vector<8x8xf32> to vector<8x8xbf16>
    %810 = arith.truncf %792 : vector<8x32xf32> to vector<8x32xbf16>
    %cst_287 = arith.constant dense<0.000000e+00> : vector<8x32xf32>
    %811 = tpu.matmul %809, %810, %cst_287 {dimension_numbers = #tpu.dot_dimension_numbers<[1], [0], [0], [1], [0, 0, 1, 1], [], []>} : vector<8x8xbf16>, vector<8x32xbf16>, vector<8x32xf32> -> vector<8x32xf32>
    %812 = tpu.concatenate %789, %811 in 1 : vector<8x32xf32>, vector<8x32xf32> -> vector<8x64xf32>
    %813 = vector.broadcast %732 : vector<1x64xf32> to vector<8x64xf32>
    %814 = arith.mulf %812, %813 : vector<8x64xf32>
    %815 = tpu.concatenate %814, %814, %814, %814 in 1 : vector<8x64xf32>, vector<8x64xf32>, vector<8x64xf32>, vector<8x64xf32> -> vector<8x256xf32>
    %816 = arith.mulf %815, %152 : vector<8x256xf32>
    %817 = arith.truncf %816 : vector<8x256xf32> to vector<8x256xbf16>
    %cst_288 = arith.constant dense<0.000000e+00> : vector<8x96xf32>
    %818 = tpu.matmul %817, %733, %cst_288 {dimension_numbers = #tpu.dot_dimension_numbers<[1], [0], [0], [1], [0, 0, 1, 1], [], []>} : vector<8x256xbf16>, vector<256x96xbf16>, vector<8x96xf32> -> vector<8x96xf32>
    %819 = arith.addf %818, %734 : vector<8x96xf32>
    %820 = vector.extract_strided_slice %819 {offsets = [0, 0], sizes = [8, 48], strides = [1, 1]} : vector<8x96xf32> to vector<8x48xf32>
    %821 = arith.mulf %820, %820 : vector<8x48xf32>
    %822 = arith.mulf %820, %821 : vector<8x48xf32>
    %cst_289 = arith.constant 4.471500e-02 : f32
    %823 = vector.broadcast %cst_289 : f32 to vector<8x48xf32>
    %824 = arith.mulf %823, %822 : vector<8x48xf32>
    %825 = arith.addf %820, %824 : vector<8x48xf32>
    %cst_290 = arith.constant 0.797884583 : f32
    %826 = vector.broadcast %cst_290 : f32 to vector<8x48xf32>
    %827 = arith.mulf %826, %825 : vector<8x48xf32>
    %828 = math.tanh %827 : vector<8x48xf32>
    %cst_291 = arith.constant 1.000000e+00 : f32
    %829 = vector.broadcast %cst_291 : f32 to vector<8x48xf32>
    %830 = arith.addf %829, %828 : vector<8x48xf32>
    %cst_292 = arith.constant 5.000000e-01 : f32
    %831 = vector.broadcast %cst_292 : f32 to vector<8x48xf32>
    %832 = arith.mulf %831, %830 : vector<8x48xf32>
    %833 = arith.mulf %820, %832 : vector<8x48xf32>
    %834 = vector.extract_strided_slice %819 {offsets = [0, 48], sizes = [8, 48], strides = [1, 1]} : vector<8x96xf32> to vector<8x48xf32>
    %835 = arith.mulf %833, %834 : vector<8x48xf32>
    %836 = tpu.concatenate %835, %835, %835, %835 in 1 : vector<8x48xf32>, vector<8x48xf32>, vector<8x48xf32>, vector<8x48xf32> -> vector<8x192xf32>
    %837 = arith.mulf %836, %203 : vector<8x192xf32>
    %838 = arith.truncf %837 : vector<8x192xf32> to vector<8x192xbf16>
    %cst_293 = arith.constant dense<0.000000e+00> : vector<8x32xf32>
    %839 = tpu.matmul %838, %735, %cst_293 {dimension_numbers = #tpu.dot_dimension_numbers<[1], [0], [0], [1], [0, 0, 1, 1], [], []>} : vector<8x192xbf16>, vector<192x32xbf16>, vector<8x32xf32> -> vector<8x32xf32>
    %840 = arith.addf %839, %736 : vector<8x32xf32>
    %c0_294 = arith.constant 0 : index
    %c0_295 = arith.constant 0 : index
    %841 = vector.load %arg27[%c0_294, %c0_295] : memref<32x64xbf16, #tpu.memory_space<vmem>>, vector<32x64xbf16>
    %842 = arith.truncf %840 : vector<8x32xf32> to vector<8x32xbf16>
    %cst_296 = arith.constant dense<0.000000e+00> : vector<8x64xf32>
    %843 = tpu.matmul %842, %841, %cst_296 {dimension_numbers = #tpu.dot_dimension_numbers<[1], [0], [0], [1], [0, 0, 1, 1], [], []>} : vector<8x32xbf16>, vector<32x64xbf16>, vector<8x64xf32> -> vector<8x64xf32>
    %c0_297 = arith.constant 0 : index
    %c0_298 = arith.constant 0 : index
    %844 = vector.load %arg28[%c0_297, %c0_298] : memref<1x64xf32, #tpu.memory_space<vmem>>, vector<1x64xf32>
    %845 = vector.broadcast %844 : vector<1x64xf32> to vector<8x64xf32>
    %846 = arith.addf %843, %845 : vector<8x64xf32>
    %847 = vector.extract_strided_slice %846 {offsets = [0, 0], sizes = [8, 32], strides = [1, 1]} : vector<8x64xf32> to vector<8x32xf32>
    %848 = vector.extract_strided_slice %846 {offsets = [0, 32], sizes = [8, 32], strides = [1, 1]} : vector<8x64xf32> to vector<8x32xf32>
    %c0_299 = arith.constant 0 : index
    %c0_300 = arith.constant 0 : index
    %849 = vector.load %arg26[%c0_299, %c0_300] : memref<2x32xf32, #tpu.memory_space<vmem>>, vector<2x32xf32>
    %850 = tpu.concatenate %849, %849 in 0 : vector<2x32xf32>, vector<2x32xf32> -> vector<4x32xf32>
    %851 = arith.truncf %850 : vector<4x32xf32> to vector<4x32xbf16>
    %852 = arith.truncf %847 : vector<8x32xf32> to vector<8x32xbf16>
    %cst_301 = arith.constant dense<0.000000e+00> : vector<4x8xf32>
    %853 = tpu.matmul %851, %852, %cst_301 {dimension_numbers = #tpu.dot_dimension_numbers<[1], [1], [0], [0], [0, 0, 1, 0], [], []>} : vector<4x32xbf16>, vector<8x32xbf16>, vector<4x8xf32> -> vector<4x8xf32>
    %cst_302 = arith.constant 0.176776692 : f32
    %854 = vector.broadcast %cst_302 : f32 to vector<4x8xf32>
    %855 = arith.mulf %853, %854 : vector<4x8xf32>
    %856 = arith.addf %855, %287 : vector<4x8xf32>
    %cst_303 = arith.constant dense<0xFF800000> : vector<4xf32>
    %857 = vector.multi_reduction <maximumf>, %856, %cst_303 [1] : vector<4x8xf32> to vector<4xf32>
    %858 = vector.shape_cast %857 : vector<4xf32> to vector<4x1xf32>
    %859 = vector.broadcast %858 : vector<4x1xf32> to vector<4x8xf32>
    %860 = arith.subf %856, %859 : vector<4x8xf32>
    %861 = math.exp %860 : vector<4x8xf32>
    %cst_304 = arith.constant dense<0.000000e+00> : vector<4xf32>
    %862 = vector.multi_reduction <add>, %861, %cst_304 [1] : vector<4x8xf32> to vector<4xf32>
    %863 = vector.shape_cast %862 : vector<4xf32> to vector<4x1xf32>
    %864 = tpu.reciprocal %863 {approx = true} : vector<4x1xf32> -> vector<4x1xf32>
    %865 = vector.broadcast %864 : vector<4x1xf32> to vector<4x8xf32>
    %866 = arith.mulf %861, %865 : vector<4x8xf32>
    %867 = arith.truncf %866 : vector<4x8xf32> to vector<4x8xbf16>
    %868 = arith.truncf %848 : vector<8x32xf32> to vector<8x32xbf16>
    %cst_305 = arith.constant dense<0.000000e+00> : vector<4x32xf32>
    %869 = tpu.matmul %867, %868, %cst_305 {dimension_numbers = #tpu.dot_dimension_numbers<[1], [0], [0], [1], [0, 0, 1, 1], [], []>} : vector<4x8xbf16>, vector<8x32xbf16>, vector<4x32xf32> -> vector<4x32xf32>
    %c0_306 = arith.constant 0 : index
    %c0_307 = arith.constant 0 : index
    %870 = vector.load %arg29[%c0_306, %c0_307] : memref<32x64xbf16, #tpu.memory_space<vmem>>, vector<32x64xbf16>
    %871 = arith.truncf %869 : vector<4x32xf32> to vector<4x32xbf16>
    %cst_308 = arith.constant dense<0.000000e+00> : vector<4x64xf32>
    %872 = tpu.matmul %871, %870, %cst_308 {dimension_numbers = #tpu.dot_dimension_numbers<[1], [0], [0], [1], [0, 0, 1, 1], [], []>} : vector<4x32xbf16>, vector<32x64xbf16>, vector<4x64xf32> -> vector<4x64xf32>
    %c0_309 = arith.constant 0 : index
    %c0_310 = arith.constant 0 : index
    %873 = vector.load %arg30[%c0_309, %c0_310] : memref<1x64xf32, #tpu.memory_space<vmem>>, vector<1x64xf32>
    %874 = vector.broadcast %873 : vector<1x64xf32> to vector<4x64xf32>
    %875 = arith.addf %872, %874 : vector<4x64xf32>
    %876 = vector.extract_strided_slice %875 {offsets = [0, 0], sizes = [4, 32], strides = [1, 1]} : vector<4x64xf32> to vector<4x32xf32>
    %877 = vector.extract_strided_slice %875 {offsets = [0, 32], sizes = [4, 32], strides = [1, 1]} : vector<4x64xf32> to vector<4x32xf32>
    %878 = arith.mulf %877, %877 : vector<4x32xf32>
    %879 = arith.mulf %877, %878 : vector<4x32xf32>
    %cst_311 = arith.constant 4.471500e-02 : f32
    %880 = vector.broadcast %cst_311 : f32 to vector<4x32xf32>
    %881 = arith.mulf %880, %879 : vector<4x32xf32>
    %882 = arith.addf %877, %881 : vector<4x32xf32>
    %cst_312 = arith.constant 0.797884583 : f32
    %883 = vector.broadcast %cst_312 : f32 to vector<4x32xf32>
    %884 = arith.mulf %883, %882 : vector<4x32xf32>
    %885 = math.tanh %884 : vector<4x32xf32>
    %cst_313 = arith.constant 1.000000e+00 : f32
    %886 = vector.broadcast %cst_313 : f32 to vector<4x32xf32>
    %887 = arith.addf %886, %885 : vector<4x32xf32>
    %cst_314 = arith.constant 5.000000e-01 : f32
    %888 = vector.broadcast %cst_314 : f32 to vector<4x32xf32>
    %889 = arith.mulf %888, %887 : vector<4x32xf32>
    %890 = arith.mulf %877, %889 : vector<4x32xf32>
    %891 = arith.mulf %876, %890 : vector<4x32xf32>
    %c0_315 = arith.constant 0 : index
    %c0_316 = arith.constant 0 : index
    %892 = vector.load %arg31[%c0_315, %c0_316] : memref<32x64xbf16, #tpu.memory_space<vmem>>, vector<32x64xbf16>
    %893 = arith.truncf %891 : vector<4x32xf32> to vector<4x32xbf16>
    %cst_317 = arith.constant dense<0.000000e+00> : vector<4x64xf32>
    %894 = tpu.matmul %893, %892, %cst_317 {dimension_numbers = #tpu.dot_dimension_numbers<[1], [0], [0], [1], [0, 0, 1, 1], [], []>} : vector<4x32xbf16>, vector<32x64xbf16>, vector<4x64xf32> -> vector<4x64xf32>
    %c0_318 = arith.constant 0 : index
    %c0_319 = arith.constant 0 : index
    %895 = vector.load %arg32[%c0_318, %c0_319] : memref<1x64xf32, #tpu.memory_space<vmem>>, vector<1x64xf32>
    %896 = vector.broadcast %895 : vector<1x64xf32> to vector<4x64xf32>
    %897 = arith.addf %894, %896 : vector<4x64xf32>
    %c0_320 = arith.constant 0 : index
    %c0_321 = arith.constant 0 : index
    %898 = vector.load %arg33[%c0_320, %c0_321] : memref<8x32xf32, #tpu.memory_space<vmem>>, vector<8x32xf32>
    tpu.vector_store %arg33[%c0_320, %c0_321], %724 {strides = array<i32>} : memref<8x32xf32, #tpu.memory_space<vmem>>, vector<8x32xf32>,
    %c0_322 = arith.constant 0 : index
    %c0_323 = arith.constant 0 : index
    %899 = vector.load %arg34[%c0_322, %c0_323] : memref<4x32xf32, #tpu.memory_space<vmem>>, vector<4x32xf32>
    tpu.vector_store %arg34[%c0_322, %c0_323], %891 {strides = array<i32>} : memref<4x32xf32, #tpu.memory_space<vmem>>, vector<4x32xf32>,
    %c0_324 = arith.constant 0 : index
    %c0_325 = arith.constant 0 : index
    %900 = vector.load %arg35[%c0_324, %c0_325] : memref<4x64xf32, #tpu.memory_space<vmem>>, vector<4x64xf32>
    tpu.vector_store %arg35[%c0_324, %c0_325], %897 {strides = array<i32>} : memref<4x64xf32, #tpu.memory_space<vmem>>, vector<4x64xf32>,
    return
  }
}

</mosaic_0001>

<llo_original>
// kernel: rnn_forward.1
$region0: #{rnn_forward.1}
  #allocation0 [shape = 'u32[]', space=smem, size = 0x4, offset = 0x4, fixed_abs, tag = 'smem constant byte address 0x4 - core index']
  #allocation1 [shape = 'u32[72,128]{1,0:T(1,128)}', space=vmem, size = 0x9000, scoped, tag = 'internal scratch']
  %s0 = inlined_call_operand.smem [shape: u32[36], index: -1, kind: input, shape index: {}]
  %s1 = sld [smem:[%s0]]
  %s2 = scalar_lea.smem %s0, 1
  %s3 = sld [smem:[%s2]]
  %s4 = scalar_lea.smem %s0, 2
  %s5 = sld [smem:[%s4]]
  %s6 = scalar_lea.smem %s0, 3
  %s7 = sld [smem:[%s6]]
  %s8 = scalar_lea.smem %s0, 4
  %s9 = sld [smem:[%s8]]
  %s10 = scalar_lea.smem %s0, 5
  %s11 = sld [smem:[%s10]]
  %s12 = scalar_lea.smem %s0, 6
  %s13 = sld [smem:[%s12]]
  %s14 = scalar_lea.smem %s0, 7
  %s15 = sld [smem:[%s14]]
  %s16 = scalar_lea.smem %s0, 8
  %s17 = sld [smem:[%s16]]
  %s18 = scalar_lea.smem %s0, 9
  %s19 = sld [smem:[%s18]]
  %s20 = scalar_lea.smem %s0, 10
  %s21 = sld [smem:[%s20]]
  %s22 = scalar_lea.smem %s0, 11
  %s23 = sld [smem:[%s22]]
  %s24 = scalar_lea.smem %s0, 12
  %s25 = sld [smem:[%s24]]
  %s26 = scalar_lea.smem %s0, 13
  %s27 = sld [smem:[%s26]]
  %s28 = scalar_lea.smem %s0, 14
  %s29 = sld [smem:[%s28]]
  %s30 = scalar_lea.smem %s0, 15
  %s31 = sld [smem:[%s30]]
  %s32 = scalar_lea.smem %s0, 16
  %s33 = sld [smem:[%s32]]
  %s34 = scalar_lea.smem %s0, 17
  %s35 = sld [smem:[%s34]]
  %s36 = scalar_lea.smem %s0, 18
  %s37 = sld [smem:[%s36]]
  %s38 = scalar_lea.smem %s0, 19
  %s39 = sld [smem:[%s38]]
  %s40 = scalar_lea.smem %s0, 20
  %s41 = sld [smem:[%s40]]
  %s42 = scalar_lea.smem %s0, 21
  %s43 = sld [smem:[%s42]]
  %s44 = scalar_lea.smem %s0, 22
  %s45 = sld [smem:[%s44]]
  %s46 = scalar_lea.smem %s0, 23
  %s47 = sld [smem:[%s46]]
  %s48 = scalar_lea.smem %s0, 24
  %s49 = sld [smem:[%s48]]
  %s50 = scalar_lea.smem %s0, 25
  %s51 = sld [smem:[%s50]]
  %s52 = scalar_lea.smem %s0, 26
  %s53 = sld [smem:[%s52]]
  %s54 = scalar_lea.smem %s0, 27
  %s55 = sld [smem:[%s54]]
  %s56 = scalar_lea.smem %s0, 28
  %s57 = sld [smem:[%s56]]
  %s58 = scalar_lea.smem %s0, 29
  %s59 = sld [smem:[%s58]]
  %s60 = scalar_lea.smem %s0, 30
  %s61 = sld [smem:[%s60]]
  %s62 = scalar_lea.smem %s0, 31
  %s63 = sld [smem:[%s62]]
  %s64 = scalar_lea.smem %s0, 32
  %s65 = sld [smem:[%s64]]
  %s66 = scalar_lea.smem %s0, 33
  %s67 = sld [smem:[%s66]]
  %s68 = scalar_lea.smem %s0, 34
  %s69 = sld [smem:[%s68]]
  %s70 = scalar_lea.smem %s0, 35
  %s71 = sld [smem:[%s70]]
  %72 = xla_tuple %s67, %s69, %s71
  %s73 = sld [smem:[#allocation0]]
  $region158: #{rnn_forward.1} parent=0
    _
  %s75 = ssub.s32 1, %s73
  %s76 = scalar_select 0, %s75, %s73
  $region1: #{rnn_forward.1} parent=0
    #allocation2 [shape = 'u8[4096]{0}', space=vmem, size = 0x1000, scoped, tag = 'output window, operand 0, single buffered']
    #allocation3 [shape = 's32[1]{0}', space=sflag, size = 0x4, scoped, tag = 'scoped memory for rnn_forward.1']
    #allocation4 [shape = 'u8[2048]{0}', space=vmem, size = 0x800, scoped, tag = 'output window, operand 1, single buffered']
    #allocation5 [shape = 's32[1]{0}', space=sflag, size = 0x4, scoped, tag = 'scoped memory for rnn_forward.1']
    #allocation6 [shape = 'u8[2048]{0}', space=vmem, size = 0x800, scoped, tag = 'output window, operand 2, single buffered']
    %77 = vsyncpa [#allocation3], 0
    %78 = vsyncpa [#allocation5], 0
    // Predicated region
    $region2: #{rnn_forward.1} parent=1 // pred_check
      _
    $region3: #{rnn_forward.1} parent=1 // pred_check_branch
      %80 = sbr.rel (0) target = $region5
    $region4: #{rnn_forward.1} parent=1 // pred_region
      _
    $region5: #{rnn_forward.1} parent=1 // pred_fallthru
      _
    // Predicated region
    $region6: #{rnn_forward.1} parent=1 // pred_check
      _
    $region7: #{rnn_forward.1} parent=1 // pred_check_branch
      %82 = sbr.rel (0) target = $region9
    $region8: #{rnn_forward.1} parent=1 // pred_region
      _
    $region9: #{rnn_forward.1} parent=1 // pred_fallthru
      _
    // Predicated region
    $region10: #{rnn_forward.1} parent=1 // pred_check
      _
    $region11: #{rnn_forward.1} parent=1 // pred_check_branch
      %84 = sbr.rel (0) target = $region13
    $region12: #{rnn_forward.1} parent=1 // pred_region
      _
    $region13: #{rnn_forward.1} parent=1 // pred_fallthru
      _
    // Predicated region
    $region14: #{rnn_forward.1} parent=1 // pred_check
      _
    $region15: #{rnn_forward.1} parent=1 // pred_check_branch
      %86 = sbr.rel (0) target = $region17
    $region16: #{rnn_forward.1} parent=1 // pred_region
      _
    $region17: #{rnn_forward.1} parent=1 // pred_fallthru
      _
    // Predicated region
    $region18: #{rnn_forward.1} parent=1 // pred_check
      _
    $region19: #{rnn_forward.1} parent=1 // pred_check_branch
      %88 = sbr.rel (0) target = $region21
    $region20: #{rnn_forward.1} parent=1 // pred_region
      _
    $region21: #{rnn_forward.1} parent=1 // pred_fallthru
      _
    // Predicated region
    $region22: #{rnn_forward.1} parent=1 // pred_check
      _
    $region23: #{rnn_forward.1} parent=1 // pred_check_branch
      %90 = sbr.rel (0) target = $region25
    $region24: #{rnn_forward.1} parent=1 // pred_region
      _
    $region25: #{rnn_forward.1} parent=1 // pred_fallthru
      _
    // Predicated region
    $region26: #{rnn_forward.1} parent=1 // pred_check
      _
    $region27: #{rnn_forward.1} parent=1 // pred_check_branch
      %92 = sbr.rel (0) target = $region29
    $region28: #{rnn_forward.1} parent=1 // pred_region
      _
    $region29: #{rnn_forward.1} parent=1 // pred_fallthru
      _
    // Predicated region
    $region30: #{rnn_forward.1} parent=1 // pred_check
      _
    $region31: #{rnn_forward.1} parent=1 // pred_check_branch
      %94 = sbr.rel (0) target = $region33
    $region32: #{rnn_forward.1} parent=1 // pred_region
      _
    $region33: #{rnn_forward.1} parent=1 // pred_fallthru
      _
    // Predicated region
    $region34: #{rnn_forward.1} parent=1 // pred_check
      _
    $region35: #{rnn_forward.1} parent=1 // pred_check_branch
      %96 = sbr.rel (0) target = $region37
    $region36: #{rnn_forward.1} parent=1 // pred_region
      _
    $region37: #{rnn_forward.1} parent=1 // pred_fallthru
      _
    // Predicated region
    $region38: #{rnn_forward.1} parent=1 // pred_check
      _
    $region39: #{rnn_forward.1} parent=1 // pred_check_branch
      %98 = sbr.rel (0) target = $region41
    $region40: #{rnn_forward.1} parent=1 // pred_region
      _
    $region41: #{rnn_forward.1} parent=1 // pred_fallthru
      _
    // Predicated region
    $region42: #{rnn_forward.1} parent=1 // pred_check
      _
    $region43: #{rnn_forward.1} parent=1 // pred_check_branch
      %100 = sbr.rel (0) target = $region45
    $region44: #{rnn_forward.1} parent=1 // pred_region
      _
    $region45: #{rnn_forward.1} parent=1 // pred_fallthru
      _
    // Predicated region
    $region46: #{rnn_forward.1} parent=1 // pred_check
      _
    $region47: #{rnn_forward.1} parent=1 // pred_check_branch
      %102 = sbr.rel (0) target = $region49
    $region48: #{rnn_forward.1} parent=1 // pred_region
      _
    $region49: #{rnn_forward.1} parent=1 // pred_fallthru
      _
    // Predicated region
    $region50: #{rnn_forward.1} parent=1 // pred_check
      _
    $region51: #{rnn_forward.1} parent=1 // pred_check_branch
      %104 = sbr.rel (0) target = $region53
    $region52: #{rnn_forward.1} parent=1 // pred_region
      _
    $region53: #{rnn_forward.1} parent=1 // pred_fallthru
      _
    // Predicated region
    $region54: #{rnn_forward.1} parent=1 // pred_check
      _
    $region55: #{rnn_forward.1} parent=1 // pred_check_branch
      %106 = sbr.rel (0) target = $region57
    $region56: #{rnn_forward.1} parent=1 // pred_region
      _
    $region57: #{rnn_forward.1} parent=1 // pred_fallthru
      _
    // Predicated region
    $region58: #{rnn_forward.1} parent=1 // pred_check
      _
    $region59: #{rnn_forward.1} parent=1 // pred_check_branch
      %108 = sbr.rel (0) target = $region61
    $region60: #{rnn_forward.1} parent=1 // pred_region
      _
    $region61: #{rnn_forward.1} parent=1 // pred_fallthru
      _
    // Predicated region
    $region62: #{rnn_forward.1} parent=1 // pred_check
      _
    $region63: #{rnn_forward.1} parent=1 // pred_check_branch
      %110 = sbr.rel (0) target = $region65
    $region64: #{rnn_forward.1} parent=1 // pred_region
      _
    $region65: #{rnn_forward.1} parent=1 // pred_fallthru
      _
    // Predicated region
    $region66: #{rnn_forward.1} parent=1 // pred_check
      _
    $region67: #{rnn_forward.1} parent=1 // pred_check_branch
      %112 = sbr.rel (0) target = $region69
    $region68: #{rnn_forward.1} parent=1 // pred_region
      _
    $region69: #{rnn_forward.1} parent=1 // pred_fallthru
      _
    // Predicated region
    $region70: #{rnn_forward.1} parent=1 // pred_check
      _
    $region71: #{rnn_forward.1} parent=1 // pred_check_branch
      %114 = sbr.rel (0) target = $region73
    $region72: #{rnn_forward.1} parent=1 // pred_region
      _
    $region73: #{rnn_forward.1} parent=1 // pred_fallthru
      _
    // Predicated region
    $region74: #{rnn_forward.1} parent=1 // pred_check
      _
    $region75: #{rnn_forward.1} parent=1 // pred_check_branch
      %116 = sbr.rel (0) target = $region77
    $region76: #{rnn_forward.1} parent=1 // pred_region
      _
    $region77: #{rnn_forward.1} parent=1 // pred_fallthru
      _
    // Predicated region
    $region78: #{rnn_forward.1} parent=1 // pred_check
      _
    $region79: #{rnn_forward.1} parent=1 // pred_check_branch
      %118 = sbr.rel (0) target = $region81
    $region80: #{rnn_forward.1} parent=1 // pred_region
      _
    $region81: #{rnn_forward.1} parent=1 // pred_fallthru
      _
    // Predicated region
    $region82: #{rnn_forward.1} parent=1 // pred_check
      _
    $region83: #{rnn_forward.1} parent=1 // pred_check_branch
      %120 = sbr.rel (0) target = $region85
    $region84: #{rnn_forward.1} parent=1 // pred_region
      _
    $region85: #{rnn_forward.1} parent=1 // pred_fallthru
      _
    // Predicated region
    $region86: #{rnn_forward.1} parent=1 // pred_check
      _
    $region87: #{rnn_forward.1} parent=1 // pred_check_branch
      %122 = sbr.rel (0) target = $region89
    $region88: #{rnn_forward.1} parent=1 // pred_region
      _
    $region89: #{rnn_forward.1} parent=1 // pred_fallthru
      _
    // Predicated region
    $region90: #{rnn_forward.1} parent=1 // pred_check
      _
    $region91: #{rnn_forward.1} parent=1 // pred_check_branch
      %124 = sbr.rel (0) target = $region93
    $region92: #{rnn_forward.1} parent=1 // pred_region
      _
    $region93: #{rnn_forward.1} parent=1 // pred_fallthru
      _
    // Predicated region
    $region94: #{rnn_forward.1} parent=1 // pred_check
      _
    $region95: #{rnn_forward.1} parent=1 // pred_check_branch
      %126 = sbr.rel (0) target = $region97
    $region96: #{rnn_forward.1} parent=1 // pred_region
      _
    $region97: #{rnn_forward.1} parent=1 // pred_fallthru
      _
    // Predicated region
    $region98: #{rnn_forward.1} parent=1 // pred_check
      _
    $region99: #{rnn_forward.1} parent=1 // pred_check_branch
      %128 = sbr.rel (0) target = $region101
    $region100: #{rnn_forward.1} parent=1 // pred_region
      _
    $region101: #{rnn_forward.1} parent=1 // pred_fallthru
      _
    // Predicated region
    $region102: #{rnn_forward.1} parent=1 // pred_check
      _
    $region103: #{rnn_forward.1} parent=1 // pred_check_branch
      %130 = sbr.rel (0) target = $region105
    $region104: #{rnn_forward.1} parent=1 // pred_region
      _
    $region105: #{rnn_forward.1} parent=1 // pred_fallthru
      _
    // Predicated region
    $region106: #{rnn_forward.1} parent=1 // pred_check
      _
    $region107: #{rnn_forward.1} parent=1 // pred_check_branch
      %132 = sbr.rel (0) target = $region109
    $region108: #{rnn_forward.1} parent=1 // pred_region
      _
    $region109: #{rnn_forward.1} parent=1 // pred_fallthru
      _
    // Predicated region
    $region110: #{rnn_forward.1} parent=1 // pred_check
      _
    $region111: #{rnn_forward.1} parent=1 // pred_check_branch
      %134 = sbr.rel (0) target = $region113
    $region112: #{rnn_forward.1} parent=1 // pred_region
      _
    $region113: #{rnn_forward.1} parent=1 // pred_fallthru
      _
    // Predicated region
    $region114: #{rnn_forward.1} parent=1 // pred_check
      _
    $region115: #{rnn_forward.1} parent=1 // pred_check_branch
      %136 = sbr.rel (0) target = $region117
    $region116: #{rnn_forward.1} parent=1 // pred_region
      _
    $region117: #{rnn_forward.1} parent=1 // pred_fallthru
      _
    // Predicated region
    $region118: #{rnn_forward.1} parent=1 // pred_check
      _
    $region119: #{rnn_forward.1} parent=1 // pred_check_branch
      %138 = sbr.rel (0) target = $region121
    $region120: #{rnn_forward.1} parent=1 // pred_region
      _
    $region121: #{rnn_forward.1} parent=1 // pred_fallthru
      _
    // Predicated region
    $region122: #{rnn_forward.1} parent=1 // pred_check
      _
    $region123: #{rnn_forward.1} parent=1 // pred_check_branch
      %140 = sbr.rel (0) target = $region125
    $region124: #{rnn_forward.1} parent=1 // pred_region
      _
    $region125: #{rnn_forward.1} parent=1 // pred_fallthru
      _
    // Predicated region
    $region126: #{rnn_forward.1} parent=1 // pred_check
      _
    $region127: #{rnn_forward.1} parent=1 // pred_check_branch
      %142 = sbr.rel (0) target = $region129
    $region128: #{rnn_forward.1} parent=1 // pred_region
      _
    $region129: #{rnn_forward.1} parent=1 // pred_fallthru
      _
    // Predicated region
    $region130: #{rnn_forward.1} parent=1 // pred_check
      _
    $region131: #{rnn_forward.1} parent=1 // pred_check_branch
      %144 = sbr.rel (0) target = $region133
    $region132: #{rnn_forward.1} parent=1 // pred_region
      _
    $region133: #{rnn_forward.1} parent=1 // pred_fallthru
      _
    %v146 = vlaneseq
    %v147 = vshrl.u32 %v146, 7
    %v148 = vlaneseq
    %v149 = vand.u32 %v148, 127
    %vm150 = vcmp.eq.s32.totalorder %v147, 0
    %vm151 = vcmp.eq.s32.totalorder %v147, 4
    %vm152 = vmor %vm150, %vm151
    %vm153 = vcmp.ge.s32.totalorder %v149, 0
    %vm154 = vmand %vm152, %vm153
    %vm155 = vcmp.lt.s32.totalorder %v149, 32
    %vm156 = vmand %vm154, %vm155
    %vm157 = vcmp.eq.s32.totalorder %v147, 1
    %vm158 = vcmp.eq.s32.totalorder %v147, 5
    %vm159 = vmor %vm157, %vm158
    %vm160 = vcmp.ge.s32.totalorder %v149, 32
    %vm161 = vmand %vm159, %vm160
    %vm162 = vcmp.lt.s32.totalorder %v149, 64
    %vm163 = vmand %vm161, %vm162
    %vm164 = vmor %vm156, %vm163
    %vm165 = vcmp.eq.s32.totalorder %v147, 2
    %vm166 = vcmp.eq.s32.totalorder %v147, 6
    %vm167 = vmor %vm165, %vm166
    %vm168 = vcmp.ge.s32.totalorder %v149, 64
    %vm169 = vmand %vm167, %vm168
    %vm170 = vcmp.lt.s32.totalorder %v149, 96
    %vm171 = vmand %vm169, %vm170
    %vm172 = vmor %vm164, %vm171
    %vm173 = vcmp.eq.s32.totalorder %v147, 3
    %vm174 = vcmp.eq.s32.totalorder %v147, 7
    %vm175 = vmor %vm173, %vm174
    %vm176 = vcmp.ge.s32.totalorder %v149, 96
    %vm177 = vmand %vm175, %vm176
    %vm178 = vcmp.lt.s32.totalorder %v149, 128
    %vm179 = vmand %vm177, %vm178
    %vm180 = vmor %vm172, %vm179
    %v181 = vsel %vm180, 1, 0
    %v182 = vcvt.s32.f32 %v181
    %v183 = vadd.s32 %v149, 128
    %v184 = vadd.s32 %v149, 256
    %vm185 = vcmp.ge.s32.totalorder %v183, 0
    %vm186 = vcmp.ge.s32.totalorder %v184, 0
    %vm187 = vmand %vm152, %vm185
    %vm188 = vmand %vm152, %vm186
    %vm189 = vcmp.lt.s32.totalorder %v183, 96
    %vm190 = vcmp.lt.s32.totalorder %v184, 96
    %vm191 = vmand %vm154, %vm170
    %vm192 = vmand %vm187, %vm189
    %vm193 = vmand %vm188, %vm190
    %vm194 = vcmp.ge.s32.totalorder %v183, 96
    %vm195 = vcmp.ge.s32.totalorder %v184, 96
    %vm196 = vmand %vm159, %vm176
    %vm197 = vmand %vm159, %vm194
    %vm198 = vmand %vm159, %vm195
    %vm199 = vcmp.lt.s32.totalorder %v149, 192
    %vm200 = vcmp.lt.s32.totalorder %v183, 192
    %vm201 = vcmp.lt.s32.totalorder %v184, 192
    %vm202 = vmand %vm196, %vm199
    %vm203 = vmand %vm197, %vm200
    %vm204 = vmand %vm198, %vm201
    %vm205 = vmor %vm191, %vm202
    %vm206 = vmor %vm192, %vm203
    %vm207 = vmor %vm193, %vm204
    %vm208 = vcmp.ge.s32.totalorder %v149, 192
    %vm209 = vcmp.ge.s32.totalorder %v183, 192
    %vm210 = vcmp.ge.s32.totalorder %v184, 192
    %vm211 = vmand %vm167, %vm208
    %vm212 = vmand %vm167, %vm209
    %vm213 = vmand %vm167, %vm210
    %vm214 = vcmp.lt.s32.totalorder %v149, 288
    %vm215 = vcmp.lt.s32.totalorder %v183, 288
    %vm216 = vcmp.lt.s32.totalorder %v184, 288
    %vm217 = vmand %vm211, %vm214
    %vm218 = vmand %vm212, %vm215
    %vm219 = vmand %vm213, %vm216
    %vm220 = vmor %vm205, %vm217
    %vm221 = vmor %vm206, %vm218
    %vm222 = vmor %vm207, %vm219
    %vm223 = vcmp.ge.s32.totalorder %v149, 288
    %vm224 = vcmp.ge.s32.totalorder %v183, 288
    %vm225 = vcmp.ge.s32.totalorder %v184, 288
    %vm226 = vmand %vm175, %vm223
    %vm227 = vmand %vm175, %vm224
    %vm228 = vmand %vm175, %vm225
    %vm229 = vcmp.lt.s32.totalorder %v149, 384
    %vm230 = vcmp.lt.s32.totalorder %v183, 384
    %vm231 = vcmp.lt.s32.totalorder %v184, 384
    %vm232 = vmand %vm226, %vm229
    %vm233 = vmand %vm227, %vm230
    %vm234 = vmand %vm228, %vm231
    %vm235 = vmor %vm220, %vm232
    %vm236 = vmor %vm221, %vm233
    %vm237 = vmor %vm222, %vm234
    %v238 = vsel %vm235, 1, 0
    %v239 = vsel %vm236, 1, 0
    %v240 = vsel %vm237, 1, 0
    %v241 = vcvt.s32.f32 %v238
    %v242 = vcvt.s32.f32 %v239
    %v243 = vcvt.s32.f32 %v240
    %vm244 = vcmp.lt.s32.totalorder %v183, 64
    %vm245 = vmand %vm154, %vm162
    %vm246 = vmand %vm187, %vm244
    %vm247 = vcmp.ge.s32.totalorder %v183, 64
    %vm248 = vmand %vm159, %vm168
    %vm249 = vmand %vm159, %vm247
    %vm250 = vcmp.lt.s32.totalorder %v183, 128
    %vm251 = vmand %vm248, %vm178
    %vm252 = vmand %vm249, %vm250
    %vm253 = vmor %vm245, %vm251
    %vm254 = vmor %vm246, %vm252
    %vm255 = vcmp.ge.s32.totalorder %v149, 128
    %vm256 = vcmp.ge.s32.totalorder %v183, 128
    %vm257 = vmand %vm167, %vm255
    %vm258 = vmand %vm167, %vm256
    %vm259 = vmand %vm257, %vm199
    %vm260 = vmand %vm258, %vm200
    %vm261 = vmor %vm253, %vm259
    %vm262 = vmor %vm254, %vm260
    %vm263 = vmand %vm175, %vm208
    %vm264 = vmand %vm175, %vm209
    %vm265 = vcmp.lt.s32.totalorder %v149, 256
    %vm266 = vcmp.lt.s32.totalorder %v183, 256
    %vm267 = vmand %vm263, %vm265
    %vm268 = vmand %vm264, %vm266
    %vm269 = vmor %vm261, %vm267
    %vm270 = vmor %vm262, %vm268
    %v271 = vsel %vm269, 1, 0
    %v272 = vsel %vm270, 1, 0
    %v273 = vcvt.s32.f32 %v271
    %v274 = vcvt.s32.f32 %v272
    %vm275 = vcmp.lt.s32.totalorder %v149, 48
    %vm276 = vcmp.lt.s32.totalorder %v183, 48
    %vm277 = vmand %vm154, %vm275
    %vm278 = vmand %vm187, %vm276
    %vm279 = vcmp.ge.s32.totalorder %v149, 48
    %vm280 = vcmp.ge.s32.totalorder %v183, 48
    %vm281 = vmand %vm159, %vm279
    %vm282 = vmand %vm159, %vm280
    %vm283 = vmand %vm281, %vm170
    %vm284 = vmand %vm282, %vm189
    %vm285 = vmor %vm277, %vm283
    %vm286 = vmor %vm278, %vm284
    %vm287 = vmand %vm167, %vm176
    %vm288 = vmand %vm167, %vm194
    %vm289 = vcmp.lt.s32.totalorder %v149, 144
    %vm290 = vcmp.lt.s32.totalorder %v183, 144
    %vm291 = vmand %vm287, %vm289
    %vm292 = vmand %vm288, %vm290
    %vm293 = vmor %vm285, %vm291
    %vm294 = vmor %vm286, %vm292
    %vm295 = vcmp.ge.s32.totalorder %v149, 144
    %vm296 = vcmp.ge.s32.totalorder %v183, 144
    %vm297 = vmand %vm175, %vm295
    %vm298 = vmand %vm175, %vm296
    %vm299 = vmand %vm297, %vm199
    %vm300 = vmand %vm298, %vm200
    %vm301 = vmor %vm293, %vm299
    %vm302 = vmor %vm294, %vm300
    %v303 = vsel %vm301, 1, 0
    %v304 = vsel %vm302, 1, 0
    %v305 = vcvt.s32.f32 %v303
    %v306 = vcvt.s32.f32 %v304
    %vm307 = vcmp.ge.s32.totalorder %v147, 0
    %vm308 = vcmp.lt.s32.totalorder %v147, 4
    %vm309 = vmand %vm307, %vm308
    %vm310 = vmand %vm309, %vm153
    %vm311 = vcmp.lt.s32.totalorder %v149, 4
    %vm312 = vmand %vm310, %vm311
    %vm313 = vcmp.ge.s32.totalorder %v147, 4
    %vm314 = vcmp.lt.s32.totalorder %v147, 8
    %vm315 = vmand %vm313, %vm314
    %vm316 = vcmp.ge.s32.totalorder %v149, 4
    %vm317 = vmand %vm315, %vm316
    %vm318 = vcmp.lt.s32.totalorder %v149, 8
    %vm319 = vmand %vm317, %vm318
    %vm320 = vmor %vm312, %vm319
    %v321 = vsel %vm320, 0.0, -1e+30
    %vm322 = vmand %vm310, %vm318
    %vm323 = vcmp.ge.s32.totalorder %v149, 8
    %vm324 = vmand %vm315, %vm323
    %vm325 = vcmp.lt.s32.totalorder %v149, 16
    %vm326 = vmand %vm324, %vm325
    %vm327 = vmor %vm322, %vm326
    %v328 = vsel %vm327, 0.0, -1e+30
    %vm329 = vcmp.lt.s32.totalorder %v147, 2
    %vm330 = vmand %vm307, %vm329
    %vm331 = vmand %vm330, %vm153
    %vm332 = vmand %vm331, %vm311
    %vm333 = vcmp.ge.s32.totalorder %v147, 2
    %vm334 = vmand %vm333, %vm308
    %vm335 = vmand %vm334, %vm316
    %vm336 = vmand %vm335, %vm318
    %vm337 = vmor %vm332, %vm336
    %v338 = vsel %vm337, 0.0, -1e+30
    %v339 = vld [vmem:[%s1] sm:$0xff]
    %v340 = vld [vmem:[%s3] sm:$0xff]
    %v341 = vld [vmem:[%s3 + $0x8] sm:$0xff]
    %v342 = vld [vmem:[%s5] sm:$0xff]
    %v343 = vld [vmem:[%s5 + $0x8] sm:$0xff]
    %344 = vset.pattern.permute.xlu0 0
    %345 = vperm.xlu0 %344, %v340
    %v346 = vpop.permute.xlu0 %345
    %347 = vset.pattern.permute.xlu0 0
    %348 = vperm.xlu0 %347, %v341
    %v349 = vpop.permute.xlu0 %348
    %vm350 = vcmp.eq.s32.totalorder %v149, %v346
    %vm351 = vcmp.eq.s32.totalorder %v149, %v349
    %v352 = vsel %vm350, 1.0, 0.0
    %v353 = vsel %vm351, 1.0, 0.0
    %v354 = vld [vmem:[%s7] sm:$0xff]
    %v355 = vld [vmem:[%s7 + $0x8] sm:$0xff]
    %v356 = vld [vmem:[%s7 + $0x10] sm:$0xff]
    %v357 = vld [vmem:[%s7 + $0x18] sm:$0xff]
    %v358 = vld [vmem:[%s7 + $0x20] sm:$0xff]
    %v359 = vld [vmem:[%s7 + $0x28] sm:$0xff]
    %v360 = vld [vmem:[%s7 + $0x30] sm:$0xff]
    %v361 = vld [vmem:[%s7 + $0x38] sm:$0xff]
    %v362 = vsub.f32 1.0, %v342
    %v363 = vsub.f32 1.0, %v343
    %v364 = vld [vmem:[%s9] sm:$0x1]
    %366 = vset.pattern.permute.xlu0 0
    %367 = vperm.xlu0 %366, %v362
    %v368 = vpop.permute.xlu0 %367
    %371 = vset.pattern.permute.xlu0 0
    %372 = vperm.xlu0 %371, %v363
    %v373 = vpop.permute.xlu0 %372
    %v376 = vperm.slane %v364, 0
    %v378 = vmul.f32 %v368, %v376
    %v379 = vmul.f32 %v373, %v376
    %vm380 = vcmask 523264
    %v382 = vsel %vm380, %v352, 0
    %v385 = vsel %vm380, %v353, 0
    %387 = vmatpush.msra.mxu0 0.0
    %388 = vmatpush.msra.mxu0 0.0
    %389 = vmatpush.msra.mxu0 0.0
    %390 = vmatpush.msra.mxu0 0.0
    %391 = vmatpush.msra.mxu0 0.0
    %392 = vmatpush.msra.mxu0 0.0
    %393 = vmatpush.msra.mxu0 0.0
    %394 = vmatpush.msra.mxu0 0.0
    %395 = vmatpush.msra.mxu0 %v361
    %396 = vmatpush.msra.mxu0 %v360
    %397 = vmatpush.msra.mxu0 %v359
    %398 = vmatpush.msra.mxu0 %v358
    %399 = vmatpush.msra.mxu0 %v357
    %400 = vmatpush.msra.mxu0 %v356
    %401 = vmatpush.msra.mxu0 %v355
    %402 = vmatpush.msra.mxu0 %v354
    %403 = vmatmul.f32.gmra.mxu0 %v382
    %v404 = vpop.f32.mrf.mxu0
    %v405 = vadd.f32 %v378, %v404
    %406 = vmatmul.f32.gmra.mxu0 %v385
    %v407 = vpop.f32.mrf.mxu0
    %v408 = vadd.f32 %v379, %v407
    %409 = vdwg.mxu0
    %v410 = vld [vmem:[%s11] sm:$0xff]
    %v411 = vld [vmem:[%s11 + $0x8] sm:$0xff]
    %v412 = vadd.f32 %v405, %v410
    %v413 = vadd.f32 %v408, %v411
    %v414 = vld [vmem:[%s13] sm:$0x3]
    %v415 = vld [vmem:[%s15] sm:$0xf]
    %v416 = vld [vmem:[%s15 + $0x4] sm:$0xf]
    %v417 = vld [vmem:[%s15 + $0x8] sm:$0xf]
    %v418 = vld [vmem:[%s15 + $0xc] sm:$0xf]
    %v419 = vld [vmem:[%s15 + $0x10] sm:$0xf]
    %v420 = vld [vmem:[%s15 + $0x14] sm:$0xf]
    %v421 = vld [vmem:[%s15 + $0x18] sm:$0xf]
    %v422 = vld [vmem:[%s15 + $0x1c] sm:$0xf]
    %v423 = vld [vmem:[%s15 + $0x20] sm:$0xf]
    %v424 = vld [vmem:[%s15 + $0x24] sm:$0xf]
    %v425 = vld [vmem:[%s15 + $0x28] sm:$0xf]
    %v426 = vld [vmem:[%s15 + $0x2c] sm:$0xf]
    %v427 = vld [vmem:[%s15 + $0x30] sm:$0xf]
    %v428 = vld [vmem:[%s15 + $0x34] sm:$0xf]
    %v429 = vld [vmem:[%s15 + $0x38] sm:$0xf]
    %v430 = vld [vmem:[%s15 + $0x3c] sm:$0xf]
    %v431 = vld [vmem:[%s17] sm:$0xff]
    %v432 = vld [vmem:[%s19] sm:$0xf]
    %v433 = vld [vmem:[%s19 + $0x4] sm:$0xf]
    %v434 = vld [vmem:[%s19 + $0x8] sm:$0xf]
    %v435 = vld [vmem:[%s19 + $0xc] sm:$0xf]
    %v436 = vld [vmem:[%s21] sm:$0x1]
    %v437 = vld [vmem:[%s23] sm:$0x1]
    %v438 = vld [vmem:[%s25] sm:$0xf]
    %v439 = vld [vmem:[%s25 + $0x4] sm:$0xf]
    %v440 = vld [vmem:[%s25 + $0x8] sm:$0xf]
    %v441 = vld [vmem:[%s25 + $0xc] sm:$0xf]
    %v442 = vld [vmem:[%s25 + $0x10] sm:$0xf]
    %v443 = vld [vmem:[%s25 + $0x14] sm:$0xf]
    %v444 = vld [vmem:[%s25 + $0x18] sm:$0xf]
    %v445 = vld [vmem:[%s25 + $0x1c] sm:$0xf]
    %v446 = vld [vmem:[%s25 + $0x20] sm:$0xf]
    %v447 = vld [vmem:[%s25 + $0x24] sm:$0xf]
    %v448 = vld [vmem:[%s25 + $0x28] sm:$0xf]
    %v449 = vld [vmem:[%s25 + $0x2c] sm:$0xf]
    %v450 = vld [vmem:[%s25 + $0x30] sm:$0xf]
    %v451 = vld [vmem:[%s25 + $0x34] sm:$0xf]
    %v452 = vld [vmem:[%s25 + $0x38] sm:$0xf]
    %v453 = vld [vmem:[%s25 + $0x3c] sm:$0xf]
    %v454 = vld [vmem:[%s25 + $0x40] sm:$0xf]
    %v455 = vld [vmem:[%s25 + $0x44] sm:$0xf]
    %v456 = vld [vmem:[%s25 + $0x48] sm:$0xf]
    %v457 = vld [vmem:[%s25 + $0x4c] sm:$0xf]
    %v458 = vld [vmem:[%s25 + $0x50] sm:$0xf]
    %v459 = vld [vmem:[%s25 + $0x54] sm:$0xf]
    %v460 = vld [vmem:[%s25 + $0x58] sm:$0xf]
    %v461 = vld [vmem:[%s25 + $0x5c] sm:$0xf]
    %v462 = vld [vmem:[%s25 + $0x60] sm:$0xf]
    %v463 = vld [vmem:[%s25 + $0x64] sm:$0xf]
    %v464 = vld [vmem:[%s25 + $0x68] sm:$0xf]
    %v465 = vld [vmem:[%s25 + $0x6c] sm:$0xf]
    %v466 = vld [vmem:[%s25 + $0x70] sm:$0xf]
    %v467 = vld [vmem:[%s25 + $0x74] sm:$0xf]
    %v468 = vld [vmem:[%s25 + $0x78] sm:$0xf]
    %v469 = vld [vmem:[%s25 + $0x7c] sm:$0xf]
    %v470 = vld [vmem:[%s25 + $0x80] sm:$0xf]
    %v471 = vld [vmem:[%s25 + $0x84] sm:$0xf]
    %v472 = vld [vmem:[%s25 + $0x88] sm:$0xf]
    %v473 = vld [vmem:[%s25 + $0x8c] sm:$0xf]
    %v474 = vld [vmem:[%s25 + $0x90] sm:$0xf]
    %v475 = vld [vmem:[%s25 + $0x94] sm:$0xf]
    %v476 = vld [vmem:[%s25 + $0x98] sm:$0xf]
    %v477 = vld [vmem:[%s25 + $0x9c] sm:$0xf]
    %v478 = vld [vmem:[%s25 + $0xa0] sm:$0xf]
    %v479 = vld [vmem:[%s25 + $0xa4] sm:$0xf]
    %v480 = vld [vmem:[%s25 + $0xa8] sm:$0xf]
    %v481 = vld [vmem:[%s25 + $0xac] sm:$0xf]
    %v482 = vld [vmem:[%s25 + $0xb0] sm:$0xf]
    %v483 = vld [vmem:[%s25 + $0xb4] sm:$0xf]
    %v484 = vld [vmem:[%s25 + $0xb8] sm:$0xf]
    %v485 = vld [vmem:[%s25 + $0xbc] sm:$0xf]
    %v486 = vld [vmem:[%s27] sm:$0xff]
    %v487 = vld [vmem:[%s29] sm:$0xf]
    %v488 = vld [vmem:[%s29 + $0x4] sm:$0xf]
    %v489 = vld [vmem:[%s29 + $0x8] sm:$0xf]
    %v490 = vld [vmem:[%s29 + $0xc] sm:$0xf]
    %v491 = vld [vmem:[%s29 + $0x10] sm:$0xf]
    %v492 = vld [vmem:[%s29 + $0x14] sm:$0xf]
    %v493 = vld [vmem:[%s29 + $0x18] sm:$0xf]
    %v494 = vld [vmem:[%s29 + $0x1c] sm:$0xf]
    %v495 = vld [vmem:[%s29 + $0x20] sm:$0xf]
    %v496 = vld [vmem:[%s29 + $0x24] sm:$0xf]
    %v497 = vld [vmem:[%s29 + $0x28] sm:$0xf]
    %v498 = vld [vmem:[%s29 + $0x2c] sm:$0xf]
    %v499 = vld [vmem:[%s29 + $0x30] sm:$0xf]
    %v500 = vld [vmem:[%s29 + $0x34] sm:$0xf]
    %v501 = vld [vmem:[%s29 + $0x38] sm:$0xf]
    %v502 = vld [vmem:[%s29 + $0x3c] sm:$0xf]
    %v503 = vld [vmem:[%s29 + $0x40] sm:$0xf]
    %v504 = vld [vmem:[%s29 + $0x44] sm:$0xf]
    %v505 = vld [vmem:[%s29 + $0x48] sm:$0xf]
    %v506 = vld [vmem:[%s29 + $0x4c] sm:$0xf]
    %v507 = vld [vmem:[%s29 + $0x50] sm:$0xf]
    %v508 = vld [vmem:[%s29 + $0x54] sm:$0xf]
    %v509 = vld [vmem:[%s29 + $0x58] sm:$0xf]
    %v510 = vld [vmem:[%s29 + $0x5c] sm:$0xf]
    %v511 = vld [vmem:[%s31] sm:$0xff]
    %vm512 = vcmask 261120
    %v513 = vsel %vm512, %v339, 0.0
    %514 = vadd.xlane.f32.xlu0 %v513
    %v515 = vpop.xlane.xlu0 %514
    %v516 = vrcp.pop 32.0
    %v517 = vmul.f32 32.0, %v516
    %v518 = vsub.f32 1.0, %v517
    %v519 = vmul.f32 %v516, %v518
    %v520 = vadd.f32 %v516, %v519
    %vm521 = vweird.f32 %v516
    %v522 = vsel %vm521, %v516, %v520
    %v523 = vmul.f32 %v515, %v522
    %v524 = vsub.f32 %v339, %v523
    %v525 = vmul.f32 %v524, %v524
    %v526 = vsel %vm512, %v525, 0.0
    %527 = vadd.xlane.f32.xlu0 %v526
    %v528 = vpop.xlane.xlu0 %527
    %v529 = vmul.f32 %v528, %v522
    %v530 = vadd.f32 %v529, 1e-05
    %v531 = vrsqrt.pop %v530
    %v532 = vmul.f32 %v531, %v530
    %v533 = vmul.f32 %v532, %v531
    %v534 = vmul.f32 0.5, %v533
    %v535 = vsub.f32 1.5, %v534
    %v536 = vmul.f32 %v531, %v535
    %vm537 = vweird.f32 %v530
    %vm538 = vweird.f32 %v531
    %vm539 = vmor %vm537, %vm538
    %v540 = vsel %vm539, %v531, %v536
    %v541 = vmul.f32 %v524, %v540
    %v542 = vperm.slane %v414, 0
    %v543 = vmul.f32 %v541, %v542
    %v544 = vperm.slane %v414, 1
    %v545 = vadd.f32 %v543, %v544
    %547 = vrot.lane.b32.xlu0 %v545, 32
    %v548 = vpop.permute.xlu0 %547
    %550 = vrot.lane.b32.xlu0 %v545, 64
    %v551 = vpop.permute.xlu0 %550
    %553 = vrot.lane.b32.xlu0 %v545, 96
    %v554 = vpop.permute.xlu0 %553
    %v556 = vsel %vm512, %v545, %v548
    %v557 = vsel %vm380, %v556, %v551
    %vm558 = vcmask 785408
    %v559 = vsel %vm558, %v557, %v554
    %v560 = vmul.f32 %v559, %v182
    %v561 = vpack.c.bf16 %v560, %v560
    %v578 = vunpack.c.l.b16 %v415
    %v579 = vunpack.c.l.b16 %v416
    %v580 = vunpack.c.l.b16 %v417
    %v581 = vunpack.c.l.b16 %v418
    %v582 = vunpack.c.l.b16 %v419
    %v583 = vunpack.c.l.b16 %v420
    %v584 = vunpack.c.l.b16 %v421
    %v585 = vunpack.c.l.b16 %v422
    %v586 = vunpack.c.l.b16 %v423
    %v587 = vunpack.c.l.b16 %v424
    %v588 = vunpack.c.l.b16 %v425
    %v589 = vunpack.c.l.b16 %v426
    %v590 = vunpack.c.l.b16 %v427
    %v591 = vunpack.c.l.b16 %v428
    %v592 = vunpack.c.l.b16 %v429
    %v593 = vunpack.c.l.b16 %v430
    %v594 = vpack.c.b16 %v579, %v578
    %v595 = vpack.c.b16 %v581, %v580
    %v596 = vpack.c.b16 %v583, %v582
    %v597 = vpack.c.b16 %v585, %v584
    %v598 = vpack.c.b16 %v587, %v586
    %v599 = vpack.c.b16 %v589, %v588
    %v600 = vpack.c.b16 %v591, %v590
    %v601 = vpack.c.b16 %v593, %v592
    %610 = vmatpush.bf16.msra.mxu0 %v601
    %611 = vmatpush.bf16.msra.mxu0 %v600
    %612 = vmatpush.bf16.msra.mxu0 %v599
    %613 = vmatpush.bf16.msra.mxu0 %v598
    %614 = vmatpush.bf16.msra.mxu0 %v597
    %615 = vmatpush.bf16.msra.mxu0 %v596
    %616 = vmatpush.bf16.msra.mxu0 %v595
    %617 = vmatpush.bf16.msra.mxu0 %v594
    %618 = vmatmul.bf16.gmra.mxu0 %v561
    %v619 = vpop.f32.mrf.mxu0
    %v620 = vadd.f32 %v431, %v619
    %v621 = vpop.f32.mrf.mxu0
    %622 = vdwg.mxu0
    %v623 = vpack.c.bf16 %v413, %v412
    %v625 = vperm.slane %v436, 0
    %v631 = vunpack.c.l.b16 %v432
    %v632 = vunpack.c.l.b16 %v433
    %v633 = vunpack.c.l.b16 %v434
    %v634 = vunpack.c.l.b16 %v435
    %v635 = vpack.c.b16 %v632, %v631
    %v636 = vpack.c.b16 %v634, %v633
    %v640 = vsel %vm512, %v623, 0
    %642 = vmatpush.bf16.msra.mxu0 0
    %643 = vmatpush.bf16.msra.mxu0 0
    %644 = vmatpush.bf16.msra.mxu0 0
    %645 = vmatpush.bf16.msra.mxu0 0
    %646 = vmatpush.bf16.msra.mxu0 0
    %647 = vmatpush.bf16.msra.mxu0 0
    %648 = vmatpush.bf16.msra.mxu0 %v636
    %649 = vmatpush.bf16.msra.mxu0 %v635
    %650 = vmatmul.bf16.gmra.mxu0 %v640
    %v651 = vpop.f32.mrf.mxu0
    %v652 = vadd.f32 %v625, %v651
    %v653 = vpop.f32.mrf.mxu0
    %v654 = vadd.f32 %v625, %v653
    %655 = vdwg.mxu0
    %v656 = vpack.c.bf16 %v620, %v620
    %v657 = vpack.c.bf16 %v654, %v652
    %v659 = vsel %vm512, %v656, 0
    %v662 = vsel %vm512, %v657, 0
    %664 = vmatpush.bf16.xpose.msra.mxu0 0
    %665 = vmatpush.bf16.xpose.msra.mxu0 0
    %666 = vmatpush.bf16.xpose.msra.mxu0 0
    %667 = vmatpush.bf16.xpose.msra.mxu0 0
    %668 = vmatpush.bf16.xpose.msra.mxu0 0
    %669 = vmatpush.bf16.xpose.msra.mxu0 0
    %670 = vmatpush.bf16.xpose.msra.mxu0 0
    %671 = vmatpush.bf16.xpose.msra.mxu0 %v662
    %672 = vmatmul.bf16.gmra.mxu0 %v659
    %v673 = vpop.f32.mrf.mxu0
    %v674 = vadd.f32 0.0, %v673
    %v675 = vpop.f32.mrf.mxu0
    %676 = vdwg.mxu0
    %v677 = vmul.f32 %v674, 0.17677669
    %v678 = vadd.f32 %v677, %v328
    %vm679 = vcmask 130048
    %v680 = vsel %vm679, %v678, -inf
    %681 = vmax.xlane.f32.xlu0 %v680
    %v682 = vpop.xlane.xlu0 %681
    %v683 = vsub.f32 %v678, %v682
    %v684 = vmul.f32 %v683, 1.442695
    %v685 = vpow.pop %v684
    %v686 = vsel %vm679, %v685, 0.0
    %687 = vadd.xlane.f32.xlu0 %v686
    %v688 = vpop.xlane.xlu0 %687
    %v689 = vrcp.pop %v688
    %v690 = vmul.f32 %v685, %v689
    %v691 = vpack.c.bf16 %v690, %v690
    %693 = vrot.lane.b32.xlu0 %v657, 64
    %v694 = vpop.permute.xlu0 %693
    %v697 = vsel %vm679, %v691, 0
    %699 = vmatpush.bf16.msra.mxu0 0
    %700 = vmatpush.bf16.msra.mxu0 0
    %701 = vmatpush.bf16.msra.mxu0 0
    %702 = vmatpush.bf16.msra.mxu0 0
    %703 = vmatpush.bf16.msra.mxu0 0
    %704 = vmatpush.bf16.msra.mxu0 0
    %705 = vmatpush.bf16.msra.mxu0 0
    %706 = vmatpush.bf16.msra.mxu0 %v694
    %707 = vmatmul.bf16.gmra.mxu0 %v697
    %v708 = vpop.f32.mrf.mxu0
    %v709 = vadd.f32 0.0, %v708
    %v710 = vpop.f32.mrf.mxu0
    %711 = vdwg.mxu0
    %713 = vrot.lane.b32.xlu0 %v656, 96
    %v714 = vpop.permute.xlu0 %713
    %715 = vrot.lane.b32.xlu0 %v657, 96
    %v716 = vpop.permute.xlu0 %715
    %v718 = vsel %vm512, %v714, 0
    %v721 = vsel %vm512, %v716, 0
    %723 = vmatpush.bf16.xpose.msra.mxu0 0
    %724 = vmatpush.bf16.xpose.msra.mxu0 0
    %725 = vmatpush.bf16.xpose.msra.mxu0 0
    %726 = vmatpush.bf16.xpose.msra.mxu0 0
    %727 = vmatpush.bf16.xpose.msra.mxu0 0
    %728 = vmatpush.bf16.xpose.msra.mxu0 0
    %729 = vmatpush.bf16.xpose.msra.mxu0 0
    %730 = vmatpush.bf16.xpose.msra.mxu0 %v721
    %731 = vmatmul.bf16.gmra.mxu0 %v718
    %v732 = vpop.f32.mrf.mxu0
    %v733 = vadd.f32 0.0, %v732
    %v734 = vpop.f32.mrf.mxu0
    %735 = vdwg.mxu0
    %v736 = vmul.f32 %v733, 0.17677669
    %v737 = vadd.f32 %v736, %v328
    %v738 = vsel %vm679, %v737, -inf
    %739 = vmax.xlane.f32.xlu0 %v738
    %v740 = vpop.xlane.xlu0 %739
    %v741 = vsub.f32 %v737, %v740
    %v742 = vmul.f32 %v741, 1.442695
    %v743 = vpow.pop %v742
    %v744 = vsel %vm679, %v743, 0.0
    %745 = vadd.xlane.f32.xlu0 %v744
    %v746 = vpop.xlane.xlu0 %745
    %v747 = vrcp.pop %v746
    %v748 = vmul.f32 %v743, %v747
    %v749 = vpack.c.bf16 %v748, %v748
    %750 = vrot.lane.b32.xlu0 %v657, 32
    %v751 = vpop.permute.xlu0 %750
    %v754 = vsel %vm679, %v749, 0
    %756 = vmatpush.bf16.msra.mxu0 0
    %757 = vmatpush.bf16.msra.mxu0 0
    %758 = vmatpush.bf16.msra.mxu0 0
    %759 = vmatpush.bf16.msra.mxu0 0
    %760 = vmatpush.bf16.msra.mxu0 0
    %761 = vmatpush.bf16.msra.mxu0 0
    %762 = vmatpush.bf16.msra.mxu0 0
    %763 = vmatpush.bf16.msra.mxu0 %v751
    %764 = vmatmul.bf16.gmra.mxu0 %v754
    %v765 = vpop.f32.mrf.mxu0
    %v766 = vadd.f32 0.0, %v765
    %v767 = vpop.f32.mrf.mxu0
    %768 = vdwg.mxu0
    %770 = vrot.lane.b32.xlu0 %v766, 32
    %v771 = vpop.permute.xlu0 %770
    %v773 = vsel %vm512, %v709, %v771
    %v774 = vsel %vm380, %v773, %v551
    %v776 = vperm.slane %v437, 0
    %v778 = vmul.f32 %v774, %v776
    %780 = vrot.lane.b32.xlu0 %v778, 96
    %v781 = vpop.permute.xlu0 %780
    %783 = vrot.lane.b32.xlu0 %v778, 64
    %v784 = vpop.permute.xlu0 %783
    %786 = vrot.lane.b32.xlu0 %v778, 32
    %v787 = vpop.permute.xlu0 %786
    %v789 = vsel %vm558, %v778, %v781
    %v790 = vsel %vm380, %v781, %v784
    %v791 = vsel %vm512, %v784, %v787
    %v792 = vmul.f32 %v789, %v241
    %v793 = vmul.f32 %v790, %v242
    %v794 = vmul.f32 %v791, %v243
    %v795 = vpack.c.bf16 %v792, %v792
    %v796 = vpack.c.bf16 %v793, %v793
    %v797 = vpack.c.bf16 %v794, %v794
    %v846 = vunpack.c.l.b16 %v438
    %v847 = vunpack.c.l.b16 %v439
    %v848 = vunpack.c.l.b16 %v440
    %v849 = vunpack.c.l.b16 %v441
    %v850 = vunpack.c.l.b16 %v442
    %v851 = vunpack.c.l.b16 %v443
    %v852 = vunpack.c.l.b16 %v444
    %v853 = vunpack.c.l.b16 %v445
    %v854 = vunpack.c.l.b16 %v446
    %v855 = vunpack.c.l.b16 %v447
    %v856 = vunpack.c.l.b16 %v448
    %v857 = vunpack.c.l.b16 %v449
    %v858 = vunpack.c.l.b16 %v450
    %v859 = vunpack.c.l.b16 %v451
    %v860 = vunpack.c.l.b16 %v452
    %v861 = vunpack.c.l.b16 %v453
    %v862 = vunpack.c.l.b16 %v454
    %v863 = vunpack.c.l.b16 %v455
    %v864 = vunpack.c.l.b16 %v456
    %v865 = vunpack.c.l.b16 %v457
    %v866 = vunpack.c.l.b16 %v458
    %v867 = vunpack.c.l.b16 %v459
    %v868 = vunpack.c.l.b16 %v460
    %v869 = vunpack.c.l.b16 %v461
    %v870 = vunpack.c.l.b16 %v462
    %v871 = vunpack.c.l.b16 %v463
    %v872 = vunpack.c.l.b16 %v464
    %v873 = vunpack.c.l.b16 %v465
    %v874 = vunpack.c.l.b16 %v466
    %v875 = vunpack.c.l.b16 %v467
    %v876 = vunpack.c.l.b16 %v468
    %v877 = vunpack.c.l.b16 %v469
    %v878 = vunpack.c.l.b16 %v470
    %v879 = vunpack.c.l.b16 %v471
    %v880 = vunpack.c.l.b16 %v472
    %v881 = vunpack.c.l.b16 %v473
    %v882 = vunpack.c.l.b16 %v474
    %v883 = vunpack.c.l.b16 %v475
    %v884 = vunpack.c.l.b16 %v476
    %v885 = vunpack.c.l.b16 %v477
    %v886 = vunpack.c.l.b16 %v478
    %v887 = vunpack.c.l.b16 %v479
    %v888 = vunpack.c.l.b16 %v480
    %v889 = vunpack.c.l.b16 %v481
    %v890 = vunpack.c.l.b16 %v482
    %v891 = vunpack.c.l.b16 %v483
    %v892 = vunpack.c.l.b16 %v484
    %v893 = vunpack.c.l.b16 %v485
    %v894 = vpack.c.b16 %v847, %v846
    %v895 = vpack.c.b16 %v849, %v848
    %v896 = vpack.c.b16 %v851, %v850
    %v897 = vpack.c.b16 %v853, %v852
    %v898 = vpack.c.b16 %v855, %v854
    %v899 = vpack.c.b16 %v857, %v856
    %v900 = vpack.c.b16 %v859, %v858
    %v901 = vpack.c.b16 %v861, %v860
    %v902 = vpack.c.b16 %v863, %v862
    %v903 = vpack.c.b16 %v865, %v864
    %v904 = vpack.c.b16 %v867, %v866
    %v905 = vpack.c.b16 %v869, %v868
    %v906 = vpack.c.b16 %v871, %v870
    %v907 = vpack.c.b16 %v873, %v872
    %v908 = vpack.c.b16 %v875, %v874
    %v909 = vpack.c.b16 %v877, %v876
    %v910 = vpack.c.b16 %v879, %v878
    %v911 = vpack.c.b16 %v881, %v880
    %v912 = vpack.c.b16 %v883, %v882
    %v913 = vpack.c.b16 %v885, %v884
    %v914 = vpack.c.b16 %v887, %v886
    %v915 = vpack.c.b16 %v889, %v888
    %v916 = vpack.c.b16 %v891, %v890
    %v917 = vpack.c.b16 %v893, %v892
    %942 = vmatpush.bf16.msra.mxu0 %v901
    %943 = vmatpush.bf16.msra.mxu0 %v900
    %944 = vmatpush.bf16.msra.mxu0 %v899
    %945 = vmatpush.bf16.msra.mxu0 %v898
    %946 = vmatpush.bf16.msra.mxu0 %v897
    %947 = vmatpush.bf16.msra.mxu0 %v896
    %948 = vmatpush.bf16.msra.mxu0 %v895
    %949 = vmatpush.bf16.msra.mxu0 %v894
    %950 = vmatmul.bf16.gmra.mxu0 %v795
    %v951 = vpop.f32.mrf.mxu0
    %v952 = vadd.f32 %v486, %v951
    %v953 = vpop.f32.mrf.mxu0
    %954 = vdwg.mxu0
    %955 = vmatpush.bf16.msra.mxu0 %v909
    %956 = vmatpush.bf16.msra.mxu0 %v908
    %957 = vmatpush.bf16.msra.mxu0 %v907
    %958 = vmatpush.bf16.msra.mxu0 %v906
    %959 = vmatpush.bf16.msra.mxu0 %v905
    %960 = vmatpush.bf16.msra.mxu0 %v904
    %961 = vmatpush.bf16.msra.mxu0 %v903
    %962 = vmatpush.bf16.msra.mxu0 %v902
    %963 = vmatmul.bf16.gmra.mxu0 %v796
    %v964 = vpop.f32.mrf.mxu0
    %v965 = vadd.f32 %v952, %v964
    %v966 = vpop.f32.mrf.mxu0
    %967 = vdwg.mxu0
    %968 = vmatpush.bf16.msra.mxu0 %v917
    %969 = vmatpush.bf16.msra.mxu0 %v916
    %970 = vmatpush.bf16.msra.mxu0 %v915
    %971 = vmatpush.bf16.msra.mxu0 %v914
    %972 = vmatpush.bf16.msra.mxu0 %v913
    %973 = vmatpush.bf16.msra.mxu0 %v912
    %974 = vmatpush.bf16.msra.mxu0 %v911
    %975 = vmatpush.bf16.msra.mxu0 %v910
    %976 = vmatmul.bf16.gmra.mxu0 %v797
    %v977 = vpop.f32.mrf.mxu0
    %v978 = vadd.f32 %v965, %v977
    %v979 = vpop.f32.mrf.mxu0
    %980 = vdwg.mxu0
    %v981 = vmul.f32 %v978, %v978
    %v982 = vmul.f32 %v978, %v981
    %v983 = vmul.f32 %v982, 0.044715
    %v984 = vadd.f32 %v978, %v983
    %v985 = vmul.f32 %v984, 0.7978846
    %v986 = vtanh.pop %v985
    %v987 = vadd.f32 %v986, 1.0
    %v988 = vmul.f32 %v987, 0.5
    %v989 = vmul.f32 %v978, %v988
    %991 = vrot.lane.b32.xlu0 %v978, 80
    %v992 = vpop.permute.xlu0 %991
    %v994 = vmul.f32 %v989, %v992
    %996 = vrot.lane.b32.xlu0 %v994, 48
    %v997 = vpop.permute.xlu0 %996
    %999 = vrot.lane.b32.xlu0 %v994, 96
    %v1000 = vpop.permute.xlu0 %999
    %1002 = vrot.lane.b32.xlu0 %v994, 16
    %v1003 = vpop.permute.xlu0 %1002
    %vm1005 = vcmask 392192
    %v1006 = vsel %vm1005, %v994, %v997
    %v1007 = vsel %vm558, %v1006, %v1000
    %v1008 = vsel %vm679, %v1000, %v1003
    %v1009 = vmul.f32 %v1007, %v305
    %v1010 = vmul.f32 %v1008, %v306
    %v1011 = vpack.c.bf16 %v1009, %v1009
    %v1012 = vpack.c.bf16 %v1010, %v1010
    %v1037 = vunpack.c.l.b16 %v487
    %v1038 = vunpack.c.l.b16 %v488
    %v1039 = vunpack.c.l.b16 %v489
    %v1040 = vunpack.c.l.b16 %v490
    %v1041 = vunpack.c.l.b16 %v491
    %v1042 = vunpack.c.l.b16 %v492
    %v1043 = vunpack.c.l.b16 %v493
    %v1044 = vunpack.c.l.b16 %v494
    %v1045 = vunpack.c.l.b16 %v495
    %v1046 = vunpack.c.l.b16 %v496
    %v1047 = vunpack.c.l.b16 %v497
    %v1048 = vunpack.c.l.b16 %v498
    %v1049 = vunpack.c.l.b16 %v499
    %v1050 = vunpack.c.l.b16 %v500
    %v1051 = vunpack.c.l.b16 %v501
    %v1052 = vunpack.c.l.b16 %v502
    %v1053 = vunpack.c.l.b16 %v503
    %v1054 = vunpack.c.l.b16 %v504
    %v1055 = vunpack.c.l.b16 %v505
    %v1056 = vunpack.c.l.b16 %v506
    %v1057 = vunpack.c.l.b16 %v507
    %v1058 = vunpack.c.l.b16 %v508
    %v1059 = vunpack.c.l.b16 %v509
    %v1060 = vunpack.c.l.b16 %v510
    %v1061 = vpack.c.b16 %v1038, %v1037
    %v1062 = vpack.c.b16 %v1040, %v1039
    %v1063 = vpack.c.b16 %v1042, %v1041
    %v1064 = vpack.c.b16 %v1044, %v1043
    %v1065 = vpack.c.b16 %v1046, %v1045
    %v1066 = vpack.c.b16 %v1048, %v1047
    %v1067 = vpack.c.b16 %v1050, %v1049
    %v1068 = vpack.c.b16 %v1052, %v1051
    %v1069 = vpack.c.b16 %v1054, %v1053
    %v1070 = vpack.c.b16 %v1056, %v1055
    %v1071 = vpack.c.b16 %v1058, %v1057
    %v1072 = vpack.c.b16 %v1060, %v1059
    %v1086 = vsel %vm380, %v1012, 0
    %1088 = vmatpush.bf16.msra.mxu0 %v1068
    %1089 = vmatpush.bf16.msra.mxu0 %v1067
    %1090 = vmatpush.bf16.msra.mxu0 %v1066
    %1091 = vmatpush.bf16.msra.mxu0 %v1065
    %1092 = vmatpush.bf16.msra.mxu0 %v1064
    %1093 = vmatpush.bf16.msra.mxu0 %v1063
    %1094 = vmatpush.bf16.msra.mxu0 %v1062
    %1095 = vmatpush.bf16.msra.mxu0 %v1061
    %1096 = vmatmul.bf16.gmra.mxu0 %v1011
    %v1097 = vpop.f32.mrf.mxu0
    %v1098 = vadd.f32 %v511, %v1097
    %v1099 = vpop.f32.mrf.mxu0
    %1100 = vdwg.mxu0
    %1101 = vmatpush.bf16.msra.mxu0 0
    %1102 = vmatpush.bf16.msra.mxu0 0
    %1103 = vmatpush.bf16.msra.mxu0 0
    %1104 = vmatpush.bf16.msra.mxu0 0
    %1105 = vmatpush.bf16.msra.mxu0 %v1072
    %1106 = vmatpush.bf16.msra.mxu0 %v1071
    %1107 = vmatpush.bf16.msra.mxu0 %v1070
    %1108 = vmatpush.bf16.msra.mxu0 %v1069
    %1109 = vmatmul.bf16.gmra.mxu0 %v1086
    %v1110 = vpop.f32.mrf.mxu0
    %v1111 = vadd.f32 %v1098, %v1110
    %v1112 = vpop.f32.mrf.mxu0
    %1113 = vdwg.mxu0
    %v1114 = vxor.u32 %v1111, 2147483648
    %v1115 = vmul.f32 %v1114, 1.442695
    %v1116 = vpow.pop %v1115
    %v1117 = vadd.f32 %v1116, 1.0
    %v1118 = vrcp.pop %v1117
    %v1119 = vmul.f32 %v1117, %v1118
    %v1120 = vsub.f32 1.0, %v1119
    %v1121 = vmul.f32 %v1118, %v1120
    %v1122 = vadd.f32 %v1118, %v1121
    %vm1123 = vweird.f32 %v1117
    %vm1124 = vweird.f32 %v1118
    %vm1125 = vmor %vm1123, %vm1124
    %v1126 = vsel %vm1125, %v1118, %v1122
    %v1127 = vand.u32 2147483647, %v1117
    %vm1128 = vcmp.eq.f32.partialorder %v1127, 8.507059e+37
    %v1129 = vand.u32 %v1117, 2147483648
    %v1130 = vor.u32 1.1754944e-38, %v1129
    %v1131 = vsel %vm1128, %v1130, %v1126
    %v1132 = vmul.f32 1.0, %v1131
    %v1133 = vmul.f32 %v1132, 2.0
    %1135 = vset.pattern.permute.xlu0 32
    %1136 = vperm.xlu0 %1135, %v1133
    %v1137 = vpop.permute.xlu0 %1136
    %v1139 = vmul.f32 %v1111, %v1137
    %v1140 = vadd.f32 %v339, %v1139
    %s1141 = scalar_lea.vmem %s13, 2
    %v1142 = vld [vmem:[%s1141] sm:$0x3]
    %s1143 = scalar_lea.vmem %s15, 64
    %v1144 = vld [vmem:[%s1143] sm:$0xf]
    %v1145 = vld [vmem:[%s1143 + $0x4] sm:$0xf]
    %v1146 = vld [vmem:[%s1143 + $0x8] sm:$0xf]
    %v1147 = vld [vmem:[%s1143 + $0xc] sm:$0xf]
    %v1148 = vld [vmem:[%s1143 + $0x10] sm:$0xf]
    %v1149 = vld [vmem:[%s1143 + $0x14] sm:$0xf]
    %v1150 = vld [vmem:[%s1143 + $0x18] sm:$0xf]
    %v1151 = vld [vmem:[%s1143 + $0x1c] sm:$0xf]
    %v1152 = vld [vmem:[%s1143 + $0x20] sm:$0xf]
    %v1153 = vld [vmem:[%s1143 + $0x24] sm:$0xf]
    %v1154 = vld [vmem:[%s1143 + $0x28] sm:$0xf]
    %v1155 = vld [vmem:[%s1143 + $0x2c] sm:$0xf]
    %v1156 = vld [vmem:[%s1143 + $0x30] sm:$0xf]
    %v1157 = vld [vmem:[%s1143 + $0x34] sm:$0xf]
    %v1158 = vld [vmem:[%s1143 + $0x38] sm:$0xf]
    %v1159 = vld [vmem:[%s1143 + $0x3c] sm:$0xf]
    %s1160 = scalar_lea.vmem %s17, 8
    %v1161 = vld [vmem:[%s1160] sm:$0xff]
    %s1162 = scalar_lea.vmem %s19, 16
    %v1163 = vld [vmem:[%s1162] sm:$0xf]
    %v1164 = vld [vmem:[%s1162 + $0x4] sm:$0xf]
    %v1165 = vld [vmem:[%s1162 + $0x8] sm:$0xf]
    %v1166 = vld [vmem:[%s1162 + $0xc] sm:$0xf]
    %s1167 = scalar_lea.vmem %s21, 1
    %v1168 = vld [vmem:[%s1167] sm:$0x1]
    %s1169 = scalar_lea.vmem %s23, 1
    %v1170 = vld [vmem:[%s1169] sm:$0x1]
    %s1171 = scalar_lea.vmem %s25, 192
    %v1172 = vld [vmem:[%s1171] sm:$0xf]
    %v1173 = vld [vmem:[%s1171 + $0x4] sm:$0xf]
    %v1174 = vld [vmem:[%s1171 + $0x8] sm:$0xf]
    %v1175 = vld [vmem:[%s1171 + $0xc] sm:$0xf]
    %v1176 = vld [vmem:[%s1171 + $0x10] sm:$0xf]
    %v1177 = vld [vmem:[%s1171 + $0x14] sm:$0xf]
    %v1178 = vld [vmem:[%s1171 + $0x18] sm:$0xf]
    %v1179 = vld [vmem:[%s1171 + $0x1c] sm:$0xf]
    %v1180 = vld [vmem:[%s1171 + $0x20] sm:$0xf]
    %v1181 = vld [vmem:[%s1171 + $0x24] sm:$0xf]
    %v1182 = vld [vmem:[%s1171 + $0x28] sm:$0xf]
    %v1183 = vld [vmem:[%s1171 + $0x2c] sm:$0xf]
    %v1184 = vld [vmem:[%s1171 + $0x30] sm:$0xf]
    %v1185 = vld [vmem:[%s1171 + $0x34] sm:$0xf]
    %v1186 = vld [vmem:[%s1171 + $0x38] sm:$0xf]
    %v1187 = vld [vmem:[%s1171 + $0x3c] sm:$0xf]
    %v1188 = vld [vmem:[%s1171 + $0x40] sm:$0xf]
    %v1189 = vld [vmem:[%s1171 + $0x44] sm:$0xf]
    %v1190 = vld [vmem:[%s1171 + $0x48] sm:$0xf]
    %v1191 = vld [vmem:[%s1171 + $0x4c] sm:$0xf]
    %v1192 = vld [vmem:[%s1171 + $0x50] sm:$0xf]
    %v1193 = vld [vmem:[%s1171 + $0x54] sm:$0xf]
    %v1194 = vld [vmem:[%s1171 + $0x58] sm:$0xf]
    %v1195 = vld [vmem:[%s1171 + $0x5c] sm:$0xf]
    %v1196 = vld [vmem:[%s1171 + $0x60] sm:$0xf]
    %v1197 = vld [vmem:[%s1171 + $0x64] sm:$0xf]
    %v1198 = vld [vmem:[%s1171 + $0x68] sm:$0xf]
    %v1199 = vld [vmem:[%s1171 + $0x6c] sm:$0xf]
    %v1200 = vld [vmem:[%s1171 + $0x70] sm:$0xf]
    %v1201 = vld [vmem:[%s1171 + $0x74] sm:$0xf]
    %v1202 = vld [vmem:[%s1171 + $0x78] sm:$0xf]
    %v1203 = vld [vmem:[%s1171 + $0x7c] sm:$0xf]
    %v1204 = vld [vmem:[%s1171 + $0x80] sm:$0xf]
    %v1205 = vld [vmem:[%s1171 + $0x84] sm:$0xf]
    %v1206 = vld [vmem:[%s1171 + $0x88] sm:$0xf]
    %v1207 = vld [vmem:[%s1171 + $0x8c] sm:$0xf]
    %v1208 = vld [vmem:[%s1171 + $0x90] sm:$0xf]
    %v1209 = vld [vmem:[%s1171 + $0x94] sm:$0xf]
    %v1210 = vld [vmem:[%s1171 + $0x98] sm:$0xf]
    %v1211 = vld [vmem:[%s1171 + $0x9c] sm:$0xf]
    %v1212 = vld [vmem:[%s1171 + $0xa0] sm:$0xf]
    %v1213 = vld [vmem:[%s1171 + $0xa4] sm:$0xf]
    %v1214 = vld [vmem:[%s1171 + $0xa8] sm:$0xf]
    %v1215 = vld [vmem:[%s1171 + $0xac] sm:$0xf]
    %v1216 = vld [vmem:[%s1171 + $0xb0] sm:$0xf]
    %v1217 = vld [vmem:[%s1171 + $0xb4] sm:$0xf]
    %v1218 = vld [vmem:[%s1171 + $0xb8] sm:$0xf]
    %v1219 = vld [vmem:[%s1171 + $0xbc] sm:$0xf]
    %s1220 = scalar_lea.vmem %s27, 8
    %v1221 = vld [vmem:[%s1220] sm:$0xff]
    %s1222 = scalar_lea.vmem %s29, 96
    %v1223 = vld [vmem:[%s1222] sm:$0xf]
    %v1224 = vld [vmem:[%s1222 + $0x4] sm:$0xf]
    %v1225 = vld [vmem:[%s1222 + $0x8] sm:$0xf]
    %v1226 = vld [vmem:[%s1222 + $0xc] sm:$0xf]
    %v1227 = vld [vmem:[%s1222 + $0x10] sm:$0xf]
    %v1228 = vld [vmem:[%s1222 + $0x14] sm:$0xf]
    %v1229 = vld [vmem:[%s1222 + $0x18] sm:$0xf]
    %v1230 = vld [vmem:[%s1222 + $0x1c] sm:$0xf]
    %v1231 = vld [vmem:[%s1222 + $0x20] sm:$0xf]
    %v1232 = vld [vmem:[%s1222 + $0x24] sm:$0xf]
    %v1233 = vld [vmem:[%s1222 + $0x28] sm:$0xf]
    %v1234 = vld [vmem:[%s1222 + $0x2c] sm:$0xf]
    %v1235 = vld [vmem:[%s1222 + $0x30] sm:$0xf]
    %v1236 = vld [vmem:[%s1222 + $0x34] sm:$0xf]
    %v1237 = vld [vmem:[%s1222 + $0x38] sm:$0xf]
    %v1238 = vld [vmem:[%s1222 + $0x3c] sm:$0xf]
    %v1239 = vld [vmem:[%s1222 + $0x40] sm:$0xf]
    %v1240 = vld [vmem:[%s1222 + $0x44] sm:$0xf]
    %v1241 = vld [vmem:[%s1222 + $0x48] sm:$0xf]
    %v1242 = vld [vmem:[%s1222 + $0x4c] sm:$0xf]
    %v1243 = vld [vmem:[%s1222 + $0x50] sm:$0xf]
    %v1244 = vld [vmem:[%s1222 + $0x54] sm:$0xf]
    %v1245 = vld [vmem:[%s1222 + $0x58] sm:$0xf]
    %v1246 = vld [vmem:[%s1222 + $0x5c] sm:$0xf]
    %s1247 = scalar_lea.vmem %s31, 8
    %v1248 = vld [vmem:[%s1247] sm:$0xff]
    %v1249 = vsel %vm512, %v1140, 0.0
    %1250 = vadd.xlane.f32.xlu0 %v1249
    %v1251 = vpop.xlane.xlu0 %1250
    %v1252 = vmul.f32 %v1251, %v522
    %v1253 = vsub.f32 %v1140, %v1252
    %v1254 = vmul.f32 %v1253, %v1253
    %v1255 = vsel %vm512, %v1254, 0.0
    %1256 = vadd.xlane.f32.xlu0 %v1255
    %v1257 = vpop.xlane.xlu0 %1256
    %v1258 = vmul.f32 %v1257, %v522
    %v1259 = vadd.f32 %v1258, 1e-05
    %v1260 = vrsqrt.pop %v1259
    %v1261 = vmul.f32 %v1260, %v1259
    %v1262 = vmul.f32 %v1261, %v1260
    %v1263 = vmul.f32 0.5, %v1262
    %v1264 = vsub.f32 1.5, %v1263
    %v1265 = vmul.f32 %v1260, %v1264
    %vm1266 = vweird.f32 %v1259
    %vm1267 = vweird.f32 %v1260
    %vm1268 = vmor %vm1266, %vm1267
    %v1269 = vsel %vm1268, %v1260, %v1265
    %v1270 = vmul.f32 %v1253, %v1269
    %v1271 = vperm.slane %v1142, 0
    %v1272 = vmul.f32 %v1270, %v1271
    %v1273 = vperm.slane %v1142, 1
    %v1274 = vadd.f32 %v1272, %v1273
    %1276 = vrot.lane.b32.xlu0 %v1274, 32
    %v1277 = vpop.permute.xlu0 %1276
    %1279 = vrot.lane.b32.xlu0 %v1274, 64
    %v1280 = vpop.permute.xlu0 %1279
    %1282 = vrot.lane.b32.xlu0 %v1274, 96
    %v1283 = vpop.permute.xlu0 %1282
    %v1285 = vsel %vm512, %v1274, %v1277
    %v1286 = vsel %vm380, %v1285, %v1280
    %v1287 = vsel %vm558, %v1286, %v1283
    %v1288 = vmul.f32 %v1287, %v182
    %v1289 = vpack.c.bf16 %v1288, %v1288
    %v1306 = vunpack.c.l.b16 %v1144
    %v1307 = vunpack.c.l.b16 %v1145
    %v1308 = vunpack.c.l.b16 %v1146
    %v1309 = vunpack.c.l.b16 %v1147
    %v1310 = vunpack.c.l.b16 %v1148
    %v1311 = vunpack.c.l.b16 %v1149
    %v1312 = vunpack.c.l.b16 %v1150
    %v1313 = vunpack.c.l.b16 %v1151
    %v1314 = vunpack.c.l.b16 %v1152
    %v1315 = vunpack.c.l.b16 %v1153
    %v1316 = vunpack.c.l.b16 %v1154
    %v1317 = vunpack.c.l.b16 %v1155
    %v1318 = vunpack.c.l.b16 %v1156
    %v1319 = vunpack.c.l.b16 %v1157
    %v1320 = vunpack.c.l.b16 %v1158
    %v1321 = vunpack.c.l.b16 %v1159
    %v1322 = vpack.c.b16 %v1307, %v1306
    %v1323 = vpack.c.b16 %v1309, %v1308
    %v1324 = vpack.c.b16 %v1311, %v1310
    %v1325 = vpack.c.b16 %v1313, %v1312
    %v1326 = vpack.c.b16 %v1315, %v1314
    %v1327 = vpack.c.b16 %v1317, %v1316
    %v1328 = vpack.c.b16 %v1319, %v1318
    %v1329 = vpack.c.b16 %v1321, %v1320
    %1338 = vmatpush.bf16.msra.mxu0 %v1329
    %1339 = vmatpush.bf16.msra.mxu0 %v1328
    %1340 = vmatpush.bf16.msra.mxu0 %v1327
    %1341 = vmatpush.bf16.msra.mxu0 %v1326
    %1342 = vmatpush.bf16.msra.mxu0 %v1325
    %1343 = vmatpush.bf16.msra.mxu0 %v1324
    %1344 = vmatpush.bf16.msra.mxu0 %v1323
    %1345 = vmatpush.bf16.msra.mxu0 %v1322
    %1346 = vmatmul.bf16.gmra.mxu0 %v1289
    %v1347 = vpop.f32.mrf.mxu0
    %v1348 = vadd.f32 %v1161, %v1347
    %v1349 = vpop.f32.mrf.mxu0
    %1350 = vdwg.mxu0
    %v1351 = vpack.c.bf16 %v1274, %v1274
    %v1353 = vperm.slane %v1168, 0
    %v1359 = vunpack.c.l.b16 %v1163
    %v1360 = vunpack.c.l.b16 %v1164
    %v1361 = vunpack.c.l.b16 %v1165
    %v1362 = vunpack.c.l.b16 %v1166
    %v1363 = vpack.c.b16 %v1360, %v1359
    %v1364 = vpack.c.b16 %v1362, %v1361
    %v1368 = vsel %vm512, %v1351, 0
    %1370 = vmatpush.bf16.msra.mxu0 0
    %1371 = vmatpush.bf16.msra.mxu0 0
    %1372 = vmatpush.bf16.msra.mxu0 0
    %1373 = vmatpush.bf16.msra.mxu0 0
    %1374 = vmatpush.bf16.msra.mxu0 0
    %1375 = vmatpush.bf16.msra.mxu0 0
    %1376 = vmatpush.bf16.msra.mxu0 %v1364
    %1377 = vmatpush.bf16.msra.mxu0 %v1363
    %1378 = vmatmul.bf16.gmra.mxu0 %v1368
    %v1379 = vpop.f32.mrf.mxu0
    %v1380 = vadd.f32 %v1353, %v1379
    %v1381 = vpop.f32.mrf.mxu0
    %1382 = vdwg.mxu0
    %v1383 = vpack.c.bf16 %v1348, %v1348
    %v1384 = vpack.c.bf16 %v1380, %v1380
    %v1386 = vsel %vm512, %v1383, 0
    %v1389 = vsel %vm512, %v1384, 0
    %1391 = vmatpush.bf16.xpose.msra.mxu0 0
    %1392 = vmatpush.bf16.xpose.msra.mxu0 0
    %1393 = vmatpush.bf16.xpose.msra.mxu0 0
    %1394 = vmatpush.bf16.xpose.msra.mxu0 0
    %1395 = vmatpush.bf16.xpose.msra.mxu0 0
    %1396 = vmatpush.bf16.xpose.msra.mxu0 0
    %1397 = vmatpush.bf16.xpose.msra.mxu0 0
    %1398 = vmatpush.bf16.xpose.msra.mxu0 %v1389
    %1399 = vmatmul.bf16.gmra.mxu0 %v1386
    %v1400 = vpop.f32.mrf.mxu0
    %v1401 = vadd.f32 0.0, %v1400
    %v1402 = vpop.f32.mrf.mxu0
    %1403 = vdwg.mxu0
    %v1404 = vmul.f32 %v1401, 0.17677669
    %v1405 = vadd.f32 %v1404, %v321
    %vm1406 = vcmask 64512
    %v1407 = vsel %vm1406, %v1405, -inf
    %1408 = vmax.xlane.f32.xlu0 %v1407
    %v1409 = vpop.xlane.xlu0 %1408
    %v1410 = vsub.f32 %v1405, %v1409
    %v1411 = vmul.f32 %v1410, 1.442695
    %v1412 = vpow.pop %v1411
    %v1413 = vsel %vm1406, %v1412, 0.0
    %1414 = vadd.xlane.f32.xlu0 %v1413
    %v1415 = vpop.xlane.xlu0 %1414
    %v1416 = vrcp.pop %v1415
    %v1417 = vmul.f32 %v1412, %v1416
    %v1418 = vpack.c.bf16 %v1417, %v1417
    %1420 = vrot.lane.b32.xlu0 %v1384, 64
    %v1421 = vpop.permute.xlu0 %1420
    %v1423 = vsel %vm1406, %v1418, 0
    %vm1425 = vcmask 1043456
    %v1427 = vsel %vm1425, %v1421, 0
    %1429 = vmatpush.bf16.msra.mxu0 0
    %1430 = vmatpush.bf16.msra.mxu0 0
    %1431 = vmatpush.bf16.msra.mxu0 0
    %1432 = vmatpush.bf16.msra.mxu0 0
    %1433 = vmatpush.bf16.msra.mxu0 0
    %1434 = vmatpush.bf16.msra.mxu0 0
    %1435 = vmatpush.bf16.msra.mxu0 0
    %1436 = vmatpush.bf16.msra.mxu0 %v1427
    %1437 = vmatmul.bf16.gmra.mxu0 %v1423
    %v1438 = vpop.f32.mrf.mxu0
    %v1439 = vadd.f32 0.0, %v1438
    %v1440 = vpop.f32.mrf.mxu0
    %1441 = vdwg.mxu0
    %1443 = vrot.lane.b32.xlu0 %v1383, 96
    %v1444 = vpop.permute.xlu0 %1443
    %1445 = vrot.lane.b32.xlu0 %v1384, 96
    %v1446 = vpop.permute.xlu0 %1445
    %v1448 = vsel %vm512, %v1444, 0
    %v1451 = vsel %vm512, %v1446, 0
    %1453 = vmatpush.bf16.xpose.msra.mxu0 0
    %1454 = vmatpush.bf16.xpose.msra.mxu0 0
    %1455 = vmatpush.bf16.xpose.msra.mxu0 0
    %1456 = vmatpush.bf16.xpose.msra.mxu0 0
    %1457 = vmatpush.bf16.xpose.msra.mxu0 0
    %1458 = vmatpush.bf16.xpose.msra.mxu0 0
    %1459 = vmatpush.bf16.xpose.msra.mxu0 0
    %1460 = vmatpush.bf16.xpose.msra.mxu0 %v1451
    %1461 = vmatmul.bf16.gmra.mxu0 %v1448
    %v1462 = vpop.f32.mrf.mxu0
    %v1463 = vadd.f32 0.0, %v1462
    %v1464 = vpop.f32.mrf.mxu0
    %1465 = vdwg.mxu0
    %v1466 = vmul.f32 %v1463, 0.17677669
    %v1467 = vadd.f32 %v1466, %v321
    %v1468 = vsel %vm1406, %v1467, -inf
    %1469 = vmax.xlane.f32.xlu0 %v1468
    %v1470 = vpop.xlane.xlu0 %1469
    %v1471 = vsub.f32 %v1467, %v1470
    %v1472 = vmul.f32 %v1471, 1.442695
    %v1473 = vpow.pop %v1472
    %v1474 = vsel %vm1406, %v1473, 0.0
    %1475 = vadd.xlane.f32.xlu0 %v1474
    %v1476 = vpop.xlane.xlu0 %1475
    %v1477 = vrcp.pop %v1476
    %v1478 = vmul.f32 %v1473, %v1477
    %v1479 = vpack.c.bf16 %v1478, %v1478
    %1480 = vrot.lane.b32.xlu0 %v1384, 32
    %v1481 = vpop.permute.xlu0 %1480
    %v1483 = vsel %vm1406, %v1479, 0
    %v1486 = vsel %vm1425, %v1481, 0
    %1488 = vmatpush.bf16.msra.mxu0 0
    %1489 = vmatpush.bf16.msra.mxu0 0
    %1490 = vmatpush.bf16.msra.mxu0 0
    %1491 = vmatpush.bf16.msra.mxu0 0
    %1492 = vmatpush.bf16.msra.mxu0 0
    %1493 = vmatpush.bf16.msra.mxu0 0
    %1494 = vmatpush.bf16.msra.mxu0 0
    %1495 = vmatpush.bf16.msra.mxu0 %v1486
    %1496 = vmatmul.bf16.gmra.mxu0 %v1483
    %v1497 = vpop.f32.mrf.mxu0
    %v1498 = vadd.f32 0.0, %v1497
    %v1499 = vpop.f32.mrf.mxu0
    %1500 = vdwg.mxu0
    %1502 = vrot.lane.b32.xlu0 %v1498, 32
    %v1503 = vpop.permute.xlu0 %1502
    %v1505 = vsel %vm512, %v1439, %v1503
    %v1506 = vsel %vm380, %v1505, %v1280
    %v1508 = vperm.slane %v1170, 0
    %v1510 = vmul.f32 %v1506, %v1508
    %1512 = vrot.lane.b32.xlu0 %v1510, 96
    %v1513 = vpop.permute.xlu0 %1512
    %1515 = vrot.lane.b32.xlu0 %v1510, 64
    %v1516 = vpop.permute.xlu0 %1515
    %1518 = vrot.lane.b32.xlu0 %v1510, 32
    %v1519 = vpop.permute.xlu0 %1518
    %v1521 = vsel %vm558, %v1510, %v1513
    %v1522 = vsel %vm380, %v1513, %v1516
    %v1523 = vsel %vm512, %v1516, %v1519
    %v1524 = vmul.f32 %v1521, %v241
    %v1525 = vmul.f32 %v1522, %v242
    %v1526 = vmul.f32 %v1523, %v243
    %v1527 = vpack.c.bf16 %v1524, %v1524
    %v1528 = vpack.c.bf16 %v1525, %v1525
    %v1529 = vpack.c.bf16 %v1526, %v1526
    %v1578 = vunpack.c.l.b16 %v1172
    %v1579 = vunpack.c.l.b16 %v1173
    %v1580 = vunpack.c.l.b16 %v1174
    %v1581 = vunpack.c.l.b16 %v1175
    %v1582 = vunpack.c.l.b16 %v1176
    %v1583 = vunpack.c.l.b16 %v1177
    %v1584 = vunpack.c.l.b16 %v1178
    %v1585 = vunpack.c.l.b16 %v1179
    %v1586 = vunpack.c.l.b16 %v1180
    %v1587 = vunpack.c.l.b16 %v1181
    %v1588 = vunpack.c.l.b16 %v1182
    %v1589 = vunpack.c.l.b16 %v1183
    %v1590 = vunpack.c.l.b16 %v1184
    %v1591 = vunpack.c.l.b16 %v1185
    %v1592 = vunpack.c.l.b16 %v1186
    %v1593 = vunpack.c.l.b16 %v1187
    %v1594 = vunpack.c.l.b16 %v1188
    %v1595 = vunpack.c.l.b16 %v1189
    %v1596 = vunpack.c.l.b16 %v1190
    %v1597 = vunpack.c.l.b16 %v1191
    %v1598 = vunpack.c.l.b16 %v1192
    %v1599 = vunpack.c.l.b16 %v1193
    %v1600 = vunpack.c.l.b16 %v1194
    %v1601 = vunpack.c.l.b16 %v1195
    %v1602 = vunpack.c.l.b16 %v1196
    %v1603 = vunpack.c.l.b16 %v1197
    %v1604 = vunpack.c.l.b16 %v1198
    %v1605 = vunpack.c.l.b16 %v1199
    %v1606 = vunpack.c.l.b16 %v1200
    %v1607 = vunpack.c.l.b16 %v1201
    %v1608 = vunpack.c.l.b16 %v1202
    %v1609 = vunpack.c.l.b16 %v1203
    %v1610 = vunpack.c.l.b16 %v1204
    %v1611 = vunpack.c.l.b16 %v1205
    %v1612 = vunpack.c.l.b16 %v1206
    %v1613 = vunpack.c.l.b16 %v1207
    %v1614 = vunpack.c.l.b16 %v1208
    %v1615 = vunpack.c.l.b16 %v1209
    %v1616 = vunpack.c.l.b16 %v1210
    %v1617 = vunpack.c.l.b16 %v1211
    %v1618 = vunpack.c.l.b16 %v1212
    %v1619 = vunpack.c.l.b16 %v1213
    %v1620 = vunpack.c.l.b16 %v1214
    %v1621 = vunpack.c.l.b16 %v1215
    %v1622 = vunpack.c.l.b16 %v1216
    %v1623 = vunpack.c.l.b16 %v1217
    %v1624 = vunpack.c.l.b16 %v1218
    %v1625 = vunpack.c.l.b16 %v1219
    %v1626 = vpack.c.b16 %v1579, %v1578
    %v1627 = vpack.c.b16 %v1581, %v1580
    %v1628 = vpack.c.b16 %v1583, %v1582
    %v1629 = vpack.c.b16 %v1585, %v1584
    %v1630 = vpack.c.b16 %v1587, %v1586
    %v1631 = vpack.c.b16 %v1589, %v1588
    %v1632 = vpack.c.b16 %v1591, %v1590
    %v1633 = vpack.c.b16 %v1593, %v1592
    %v1634 = vpack.c.b16 %v1595, %v1594
    %v1635 = vpack.c.b16 %v1597, %v1596
    %v1636 = vpack.c.b16 %v1599, %v1598
    %v1637 = vpack.c.b16 %v1601, %v1600
    %v1638 = vpack.c.b16 %v1603, %v1602
    %v1639 = vpack.c.b16 %v1605, %v1604
    %v1640 = vpack.c.b16 %v1607, %v1606
    %v1641 = vpack.c.b16 %v1609, %v1608
    %v1642 = vpack.c.b16 %v1611, %v1610
    %v1643 = vpack.c.b16 %v1613, %v1612
    %v1644 = vpack.c.b16 %v1615, %v1614
    %v1645 = vpack.c.b16 %v1617, %v1616
    %v1646 = vpack.c.b16 %v1619, %v1618
    %v1647 = vpack.c.b16 %v1621, %v1620
    %v1648 = vpack.c.b16 %v1623, %v1622
    %v1649 = vpack.c.b16 %v1625, %v1624
    %1674 = vmatpush.bf16.msra.mxu0 %v1633
    %1675 = vmatpush.bf16.msra.mxu0 %v1632
    %1676 = vmatpush.bf16.msra.mxu0 %v1631
    %1677 = vmatpush.bf16.msra.mxu0 %v1630
    %1678 = vmatpush.bf16.msra.mxu0 %v1629
    %1679 = vmatpush.bf16.msra.mxu0 %v1628
    %1680 = vmatpush.bf16.msra.mxu0 %v1627
    %1681 = vmatpush.bf16.msra.mxu0 %v1626
    %1682 = vmatmul.bf16.gmra.mxu0 %v1527
    %v1683 = vpop.f32.mrf.mxu0
    %v1684 = vadd.f32 %v1221, %v1683
    %v1685 = vpop.f32.mrf.mxu0
    %1686 = vdwg.mxu0
    %1687 = vmatpush.bf16.msra.mxu0 %v1641
    %1688 = vmatpush.bf16.msra.mxu0 %v1640
    %1689 = vmatpush.bf16.msra.mxu0 %v1639
    %1690 = vmatpush.bf16.msra.mxu0 %v1638
    %1691 = vmatpush.bf16.msra.mxu0 %v1637
    %1692 = vmatpush.bf16.msra.mxu0 %v1636
    %1693 = vmatpush.bf16.msra.mxu0 %v1635
    %1694 = vmatpush.bf16.msra.mxu0 %v1634
    %1695 = vmatmul.bf16.gmra.mxu0 %v1528
    %v1696 = vpop.f32.mrf.mxu0
    %v1697 = vadd.f32 %v1684, %v1696
    %v1698 = vpop.f32.mrf.mxu0
    %1699 = vdwg.mxu0
    %1700 = vmatpush.bf16.msra.mxu0 %v1649
    %1701 = vmatpush.bf16.msra.mxu0 %v1648
    %1702 = vmatpush.bf16.msra.mxu0 %v1647
    %1703 = vmatpush.bf16.msra.mxu0 %v1646
    %1704 = vmatpush.bf16.msra.mxu0 %v1645
    %1705 = vmatpush.bf16.msra.mxu0 %v1644
    %1706 = vmatpush.bf16.msra.mxu0 %v1643
    %1707 = vmatpush.bf16.msra.mxu0 %v1642
    %1708 = vmatmul.bf16.gmra.mxu0 %v1529
    %v1709 = vpop.f32.mrf.mxu0
    %v1710 = vadd.f32 %v1697, %v1709
    %v1711 = vpop.f32.mrf.mxu0
    %1712 = vdwg.mxu0
    %v1713 = vmul.f32 %v1710, %v1710
    %v1714 = vmul.f32 %v1710, %v1713
    %v1715 = vmul.f32 %v1714, 0.044715
    %v1716 = vadd.f32 %v1710, %v1715
    %v1717 = vmul.f32 %v1716, 0.7978846
    %v1718 = vtanh.pop %v1717
    %v1719 = vadd.f32 %v1718, 1.0
    %v1720 = vmul.f32 %v1719, 0.5
    %v1721 = vmul.f32 %v1710, %v1720
    %1723 = vrot.lane.b32.xlu0 %v1710, 80
    %v1724 = vpop.permute.xlu0 %1723
    %v1726 = vmul.f32 %v1721, %v1724
    %1728 = vrot.lane.b32.xlu0 %v1726, 48
    %v1729 = vpop.permute.xlu0 %1728
    %1731 = vrot.lane.b32.xlu0 %v1726, 96
    %v1732 = vpop.permute.xlu0 %1731
    %1734 = vrot.lane.b32.xlu0 %v1726, 16
    %v1735 = vpop.permute.xlu0 %1734
    %v1737 = vsel %vm1005, %v1726, %v1729
    %v1738 = vsel %vm558, %v1737, %v1732
    %v1739 = vsel %vm679, %v1732, %v1735
    %v1740 = vmul.f32 %v1738, %v305
    %v1741 = vmul.f32 %v1739, %v306
    %v1742 = vpack.c.bf16 %v1740, %v1740
    %v1743 = vpack.c.bf16 %v1741, %v1741
    %v1768 = vunpack.c.l.b16 %v1223
    %v1769 = vunpack.c.l.b16 %v1224
    %v1770 = vunpack.c.l.b16 %v1225
    %v1771 = vunpack.c.l.b16 %v1226
    %v1772 = vunpack.c.l.b16 %v1227
    %v1773 = vunpack.c.l.b16 %v1228
    %v1774 = vunpack.c.l.b16 %v1229
    %v1775 = vunpack.c.l.b16 %v1230
    %v1776 = vunpack.c.l.b16 %v1231
    %v1777 = vunpack.c.l.b16 %v1232
    %v1778 = vunpack.c.l.b16 %v1233
    %v1779 = vunpack.c.l.b16 %v1234
    %v1780 = vunpack.c.l.b16 %v1235
    %v1781 = vunpack.c.l.b16 %v1236
    %v1782 = vunpack.c.l.b16 %v1237
    %v1783 = vunpack.c.l.b16 %v1238
    %v1784 = vunpack.c.l.b16 %v1239
    %v1785 = vunpack.c.l.b16 %v1240
    %v1786 = vunpack.c.l.b16 %v1241
    %v1787 = vunpack.c.l.b16 %v1242
    %v1788 = vunpack.c.l.b16 %v1243
    %v1789 = vunpack.c.l.b16 %v1244
    %v1790 = vunpack.c.l.b16 %v1245
    %v1791 = vunpack.c.l.b16 %v1246
    %v1792 = vpack.c.b16 %v1769, %v1768
    %v1793 = vpack.c.b16 %v1771, %v1770
    %v1794 = vpack.c.b16 %v1773, %v1772
    %v1795 = vpack.c.b16 %v1775, %v1774
    %v1796 = vpack.c.b16 %v1777, %v1776
    %v1797 = vpack.c.b16 %v1779, %v1778
    %v1798 = vpack.c.b16 %v1781, %v1780
    %v1799 = vpack.c.b16 %v1783, %v1782
    %v1800 = vpack.c.b16 %v1785, %v1784
    %v1801 = vpack.c.b16 %v1787, %v1786
    %v1802 = vpack.c.b16 %v1789, %v1788
    %v1803 = vpack.c.b16 %v1791, %v1790
    %v1817 = vsel %vm380, %v1743, 0
    %1819 = vmatpush.bf16.msra.mxu0 %v1799
    %1820 = vmatpush.bf16.msra.mxu0 %v1798
    %1821 = vmatpush.bf16.msra.mxu0 %v1797
    %1822 = vmatpush.bf16.msra.mxu0 %v1796
    %1823 = vmatpush.bf16.msra.mxu0 %v1795
    %1824 = vmatpush.bf16.msra.mxu0 %v1794
    %1825 = vmatpush.bf16.msra.mxu0 %v1793
    %1826 = vmatpush.bf16.msra.mxu0 %v1792
    %1827 = vmatmul.bf16.gmra.mxu0 %v1742
    %v1828 = vpop.f32.mrf.mxu0
    %v1829 = vadd.f32 %v1248, %v1828
    %v1830 = vpop.f32.mrf.mxu0
    %1831 = vdwg.mxu0
    %1832 = vmatpush.bf16.msra.mxu0 0
    %1833 = vmatpush.bf16.msra.mxu0 0
    %1834 = vmatpush.bf16.msra.mxu0 0
    %1835 = vmatpush.bf16.msra.mxu0 0
    %1836 = vmatpush.bf16.msra.mxu0 %v1803
    %1837 = vmatpush.bf16.msra.mxu0 %v1802
    %1838 = vmatpush.bf16.msra.mxu0 %v1801
    %1839 = vmatpush.bf16.msra.mxu0 %v1800
    %1840 = vmatmul.bf16.gmra.mxu0 %v1817
    %v1841 = vpop.f32.mrf.mxu0
    %v1842 = vadd.f32 %v1829, %v1841
    %v1843 = vpop.f32.mrf.mxu0
    %1844 = vdwg.mxu0
    %v1845 = vxor.u32 %v1842, 2147483648
    %v1846 = vmul.f32 %v1845, 1.442695
    %v1847 = vpow.pop %v1846
    %v1848 = vadd.f32 %v1847, 1.0
    %v1849 = vrcp.pop %v1848
    %v1850 = vmul.f32 %v1848, %v1849
    %v1851 = vsub.f32 1.0, %v1850
    %v1852 = vmul.f32 %v1849, %v1851
    %v1853 = vadd.f32 %v1849, %v1852
    %vm1854 = vweird.f32 %v1848
    %vm1855 = vweird.f32 %v1849
    %vm1856 = vmor %vm1854, %vm1855
    %v1857 = vsel %vm1856, %v1849, %v1853
    %v1858 = vand.u32 2147483647, %v1848
    %vm1859 = vcmp.eq.f32.partialorder %v1858, 8.507059e+37
    %v1860 = vand.u32 %v1848, 2147483648
    %v1861 = vor.u32 1.1754944e-38, %v1860
    %v1862 = vsel %vm1859, %v1861, %v1857
    %v1863 = vmul.f32 1.0, %v1862
    %v1864 = vmul.f32 %v1863, 2.0
    %1866 = vset.pattern.permute.xlu0 32
    %1867 = vperm.xlu0 %1866, %v1864
    %v1868 = vpop.permute.xlu0 %1867
    %v1870 = vmul.f32 %v1842, %v1868
    %v1871 = vadd.f32 %v1140, %v1870
    %s1872 = scalar_lea.vmem %s13, 4
    %v1873 = vld [vmem:[%s1872] sm:$0x3]
    %s1874 = scalar_lea.vmem %s15, 128
    %v1875 = vld [vmem:[%s1874] sm:$0xf]
    %v1876 = vld [vmem:[%s1874 + $0x4] sm:$0xf]
    %v1877 = vld [vmem:[%s1874 + $0x8] sm:$0xf]
    %v1878 = vld [vmem:[%s1874 + $0xc] sm:$0xf]
    %v1879 = vld [vmem:[%s1874 + $0x10] sm:$0xf]
    %v1880 = vld [vmem:[%s1874 + $0x14] sm:$0xf]
    %v1881 = vld [vmem:[%s1874 + $0x18] sm:$0xf]
    %v1882 = vld [vmem:[%s1874 + $0x1c] sm:$0xf]
    %v1883 = vld [vmem:[%s1874 + $0x20] sm:$0xf]
    %v1884 = vld [vmem:[%s1874 + $0x24] sm:$0xf]
    %v1885 = vld [vmem:[%s1874 + $0x28] sm:$0xf]
    %v1886 = vld [vmem:[%s1874 + $0x2c] sm:$0xf]
    %v1887 = vld [vmem:[%s1874 + $0x30] sm:$0xf]
    %v1888 = vld [vmem:[%s1874 + $0x34] sm:$0xf]
    %v1889 = vld [vmem:[%s1874 + $0x38] sm:$0xf]
    %v1890 = vld [vmem:[%s1874 + $0x3c] sm:$0xf]
    %s1891 = scalar_lea.vmem %s17, 16
    %v1892 = vld [vmem:[%s1891] sm:$0xff]
    %s1893 = scalar_lea.vmem %s19, 32
    %v1894 = vld [vmem:[%s1893] sm:$0xf]
    %v1895 = vld [vmem:[%s1893 + $0x4] sm:$0xf]
    %v1896 = vld [vmem:[%s1893 + $0x8] sm:$0xf]
    %v1897 = vld [vmem:[%s1893 + $0xc] sm:$0xf]
    %s1898 = scalar_lea.vmem %s21, 2
    %v1899 = vld [vmem:[%s1898] sm:$0x1]
    %s1900 = scalar_lea.vmem %s23, 2
    %v1901 = vld [vmem:[%s1900] sm:$0x1]
    %s1902 = scalar_lea.vmem %s25, 384
    %v1903 = vld [vmem:[%s1902] sm:$0xf]
    %v1904 = vld [vmem:[%s1902 + $0x4] sm:$0xf]
    %v1905 = vld [vmem:[%s1902 + $0x8] sm:$0xf]
    %v1906 = vld [vmem:[%s1902 + $0xc] sm:$0xf]
    %v1907 = vld [vmem:[%s1902 + $0x10] sm:$0xf]
    %v1908 = vld [vmem:[%s1902 + $0x14] sm:$0xf]
    %v1909 = vld [vmem:[%s1902 + $0x18] sm:$0xf]
    %v1910 = vld [vmem:[%s1902 + $0x1c] sm:$0xf]
    %v1911 = vld [vmem:[%s1902 + $0x20] sm:$0xf]
    %v1912 = vld [vmem:[%s1902 + $0x24] sm:$0xf]
    %v1913 = vld [vmem:[%s1902 + $0x28] sm:$0xf]
    %v1914 = vld [vmem:[%s1902 + $0x2c] sm:$0xf]
    %v1915 = vld [vmem:[%s1902 + $0x30] sm:$0xf]
    %v1916 = vld [vmem:[%s1902 + $0x34] sm:$0xf]
    %v1917 = vld [vmem:[%s1902 + $0x38] sm:$0xf]
    %v1918 = vld [vmem:[%s1902 + $0x3c] sm:$0xf]
    %v1919 = vld [vmem:[%s1902 + $0x40] sm:$0xf]
    %v1920 = vld [vmem:[%s1902 + $0x44] sm:$0xf]
    %v1921 = vld [vmem:[%s1902 + $0x48] sm:$0xf]
    %v1922 = vld [vmem:[%s1902 + $0x4c] sm:$0xf]
    %v1923 = vld [vmem:[%s1902 + $0x50] sm:$0xf]
    %v1924 = vld [vmem:[%s1902 + $0x54] sm:$0xf]
    %v1925 = vld [vmem:[%s1902 + $0x58] sm:$0xf]
    %v1926 = vld [vmem:[%s1902 + $0x5c] sm:$0xf]
    %v1927 = vld [vmem:[%s1902 + $0x60] sm:$0xf]
    %v1928 = vld [vmem:[%s1902 + $0x64] sm:$0xf]
    %v1929 = vld [vmem:[%s1902 + $0x68] sm:$0xf]
    %v1930 = vld [vmem:[%s1902 + $0x6c] sm:$0xf]
    %v1931 = vld [vmem:[%s1902 + $0x70] sm:$0xf]
    %v1932 = vld [vmem:[%s1902 + $0x74] sm:$0xf]
    %v1933 = vld [vmem:[%s1902 + $0x78] sm:$0xf]
    %v1934 = vld [vmem:[%s1902 + $0x7c] sm:$0xf]
    %v1935 = vld [vmem:[%s1902 + $0x80] sm:$0xf]
    %v1936 = vld [vmem:[%s1902 + $0x84] sm:$0xf]
    %v1937 = vld [vmem:[%s1902 + $0x88] sm:$0xf]
    %v1938 = vld [vmem:[%s1902 + $0x8c] sm:$0xf]
    %v1939 = vld [vmem:[%s1902 + $0x90] sm:$0xf]
    %v1940 = vld [vmem:[%s1902 + $0x94] sm:$0xf]
    %v1941 = vld [vmem:[%s1902 + $0x98] sm:$0xf]
    %v1942 = vld [vmem:[%s1902 + $0x9c] sm:$0xf]
    %v1943 = vld [vmem:[%s1902 + $0xa0] sm:$0xf]
    %v1944 = vld [vmem:[%s1902 + $0xa4] sm:$0xf]
    %v1945 = vld [vmem:[%s1902 + $0xa8] sm:$0xf]
    %v1946 = vld [vmem:[%s1902 + $0xac] sm:$0xf]
    %v1947 = vld [vmem:[%s1902 + $0xb0] sm:$0xf]
    %v1948 = vld [vmem:[%s1902 + $0xb4] sm:$0xf]
    %v1949 = vld [vmem:[%s1902 + $0xb8] sm:$0xf]
    %v1950 = vld [vmem:[%s1902 + $0xbc] sm:$0xf]
    %s1951 = scalar_lea.vmem %s27, 16
    %v1952 = vld [vmem:[%s1951] sm:$0xff]
    %s1953 = scalar_lea.vmem %s29, 192
    %v1954 = vld [vmem:[%s1953] sm:$0xf]
    %v1955 = vld [vmem:[%s1953 + $0x4] sm:$0xf]
    %v1956 = vld [vmem:[%s1953 + $0x8] sm:$0xf]
    %v1957 = vld [vmem:[%s1953 + $0xc] sm:$0xf]
    %v1958 = vld [vmem:[%s1953 + $0x10] sm:$0xf]
    %v1959 = vld [vmem:[%s1953 + $0x14] sm:$0xf]
    %v1960 = vld [vmem:[%s1953 + $0x18] sm:$0xf]
    %v1961 = vld [vmem:[%s1953 + $0x1c] sm:$0xf]
    %v1962 = vld [vmem:[%s1953 + $0x20] sm:$0xf]
    %v1963 = vld [vmem:[%s1953 + $0x24] sm:$0xf]
    %v1964 = vld [vmem:[%s1953 + $0x28] sm:$0xf]
    %v1965 = vld [vmem:[%s1953 + $0x2c] sm:$0xf]
    %v1966 = vld [vmem:[%s1953 + $0x30] sm:$0xf]
    %v1967 = vld [vmem:[%s1953 + $0x34] sm:$0xf]
    %v1968 = vld [vmem:[%s1953 + $0x38] sm:$0xf]
    %v1969 = vld [vmem:[%s1953 + $0x3c] sm:$0xf]
    %v1970 = vld [vmem:[%s1953 + $0x40] sm:$0xf]
    %v1971 = vld [vmem:[%s1953 + $0x44] sm:$0xf]
    %v1972 = vld [vmem:[%s1953 + $0x48] sm:$0xf]
    %v1973 = vld [vmem:[%s1953 + $0x4c] sm:$0xf]
    %v1974 = vld [vmem:[%s1953 + $0x50] sm:$0xf]
    %v1975 = vld [vmem:[%s1953 + $0x54] sm:$0xf]
    %v1976 = vld [vmem:[%s1953 + $0x58] sm:$0xf]
    %v1977 = vld [vmem:[%s1953 + $0x5c] sm:$0xf]
    %s1978 = scalar_lea.vmem %s31, 16
    %v1979 = vld [vmem:[%s1978] sm:$0xff]
    %v1980 = vsel %vm512, %v1871, 0.0
    %1981 = vadd.xlane.f32.xlu0 %v1980
    %v1982 = vpop.xlane.xlu0 %1981
    %v1983 = vmul.f32 %v1982, %v522
    %v1984 = vsub.f32 %v1871, %v1983
    %v1985 = vmul.f32 %v1984, %v1984
    %v1986 = vsel %vm512, %v1985, 0.0
    %1987 = vadd.xlane.f32.xlu0 %v1986
    %v1988 = vpop.xlane.xlu0 %1987
    %v1989 = vmul.f32 %v1988, %v522
    %v1990 = vadd.f32 %v1989, 1e-05
    %v1991 = vrsqrt.pop %v1990
    %v1992 = vmul.f32 %v1991, %v1990
    %v1993 = vmul.f32 %v1992, %v1991
    %v1994 = vmul.f32 0.5, %v1993
    %v1995 = vsub.f32 1.5, %v1994
    %v1996 = vmul.f32 %v1991, %v1995
    %vm1997 = vweird.f32 %v1990
    %vm1998 = vweird.f32 %v1991
    %vm1999 = vmor %vm1997, %vm1998
    %v2000 = vsel %vm1999, %v1991, %v1996
    %v2001 = vmul.f32 %v1984, %v2000
    %v2002 = vperm.slane %v1873, 0
    %v2003 = vmul.f32 %v2001, %v2002
    %v2004 = vperm.slane %v1873, 1
    %v2005 = vadd.f32 %v2003, %v2004
    %2007 = vrot.lane.b32.xlu0 %v2005, 32
    %v2008 = vpop.permute.xlu0 %2007
    %2010 = vrot.lane.b32.xlu0 %v2005, 64
    %v2011 = vpop.permute.xlu0 %2010
    %2013 = vrot.lane.b32.xlu0 %v2005, 96
    %v2014 = vpop.permute.xlu0 %2013
    %v2016 = vsel %vm512, %v2005, %v2008
    %v2017 = vsel %vm380, %v2016, %v2011
    %v2018 = vsel %vm558, %v2017, %v2014
    %v2019 = vmul.f32 %v2018, %v182
    %v2020 = vpack.c.bf16 %v2019, %v2019
    %v2037 = vunpack.c.l.b16 %v1875
    %v2038 = vunpack.c.l.b16 %v1876
    %v2039 = vunpack.c.l.b16 %v1877
    %v2040 = vunpack.c.l.b16 %v1878
    %v2041 = vunpack.c.l.b16 %v1879
    %v2042 = vunpack.c.l.b16 %v1880
    %v2043 = vunpack.c.l.b16 %v1881
    %v2044 = vunpack.c.l.b16 %v1882
    %v2045 = vunpack.c.l.b16 %v1883
    %v2046 = vunpack.c.l.b16 %v1884
    %v2047 = vunpack.c.l.b16 %v1885
    %v2048 = vunpack.c.l.b16 %v1886
    %v2049 = vunpack.c.l.b16 %v1887
    %v2050 = vunpack.c.l.b16 %v1888
    %v2051 = vunpack.c.l.b16 %v1889
    %v2052 = vunpack.c.l.b16 %v1890
    %v2053 = vpack.c.b16 %v2038, %v2037
    %v2054 = vpack.c.b16 %v2040, %v2039
    %v2055 = vpack.c.b16 %v2042, %v2041
    %v2056 = vpack.c.b16 %v2044, %v2043
    %v2057 = vpack.c.b16 %v2046, %v2045
    %v2058 = vpack.c.b16 %v2048, %v2047
    %v2059 = vpack.c.b16 %v2050, %v2049
    %v2060 = vpack.c.b16 %v2052, %v2051
    %2069 = vmatpush.bf16.msra.mxu0 %v2060
    %2070 = vmatpush.bf16.msra.mxu0 %v2059
    %2071 = vmatpush.bf16.msra.mxu0 %v2058
    %2072 = vmatpush.bf16.msra.mxu0 %v2057
    %2073 = vmatpush.bf16.msra.mxu0 %v2056
    %2074 = vmatpush.bf16.msra.mxu0 %v2055
    %2075 = vmatpush.bf16.msra.mxu0 %v2054
    %2076 = vmatpush.bf16.msra.mxu0 %v2053
    %2077 = vmatmul.bf16.gmra.mxu0 %v2020
    %v2078 = vpop.f32.mrf.mxu0
    %v2079 = vadd.f32 %v1892, %v2078
    %v2080 = vpop.f32.mrf.mxu0
    %2081 = vdwg.mxu0
    %v2082 = vpack.c.bf16 %v2005, %v2005
    %v2084 = vperm.slane %v1899, 0
    %v2090 = vunpack.c.l.b16 %v1894
    %v2091 = vunpack.c.l.b16 %v1895
    %v2092 = vunpack.c.l.b16 %v1896
    %v2093 = vunpack.c.l.b16 %v1897
    %v2094 = vpack.c.b16 %v2091, %v2090
    %v2095 = vpack.c.b16 %v2093, %v2092
    %v2099 = vsel %vm512, %v2082, 0
    %2101 = vmatpush.bf16.msra.mxu0 0
    %2102 = vmatpush.bf16.msra.mxu0 0
    %2103 = vmatpush.bf16.msra.mxu0 0
    %2104 = vmatpush.bf16.msra.mxu0 0
    %2105 = vmatpush.bf16.msra.mxu0 0
    %2106 = vmatpush.bf16.msra.mxu0 0
    %2107 = vmatpush.bf16.msra.mxu0 %v2095
    %2108 = vmatpush.bf16.msra.mxu0 %v2094
    %2109 = vmatmul.bf16.gmra.mxu0 %v2099
    %v2110 = vpop.f32.mrf.mxu0
    %v2111 = vadd.f32 %v2084, %v2110
    %v2112 = vpop.f32.mrf.mxu0
    %2113 = vdwg.mxu0
    %v2114 = vpack.c.bf16 %v2079, %v2079
    %v2115 = vpack.c.bf16 %v2111, %v2111
    %v2117 = vsel %vm512, %v2114, 0
    %v2120 = vsel %vm512, %v2115, 0
    %2122 = vmatpush.bf16.xpose.msra.mxu0 0
    %2123 = vmatpush.bf16.xpose.msra.mxu0 0
    %2124 = vmatpush.bf16.xpose.msra.mxu0 0
    %2125 = vmatpush.bf16.xpose.msra.mxu0 0
    %2126 = vmatpush.bf16.xpose.msra.mxu0 0
    %2127 = vmatpush.bf16.xpose.msra.mxu0 0
    %2128 = vmatpush.bf16.xpose.msra.mxu0 0
    %2129 = vmatpush.bf16.xpose.msra.mxu0 %v2120
    %2130 = vmatmul.bf16.gmra.mxu0 %v2117
    %v2131 = vpop.f32.mrf.mxu0
    %v2132 = vadd.f32 0.0, %v2131
    %v2133 = vpop.f32.mrf.mxu0
    %2134 = vdwg.mxu0
    %v2135 = vmul.f32 %v2132, 0.17677669
    %v2136 = vadd.f32 %v2135, %v321
    %v2137 = vsel %vm1406, %v2136, -inf
    %2138 = vmax.xlane.f32.xlu0 %v2137
    %v2139 = vpop.xlane.xlu0 %2138
    %v2140 = vsub.f32 %v2136, %v2139
    %v2141 = vmul.f32 %v2140, 1.442695
    %v2142 = vpow.pop %v2141
    %v2143 = vsel %vm1406, %v2142, 0.0
    %2144 = vadd.xlane.f32.xlu0 %v2143
    %v2145 = vpop.xlane.xlu0 %2144
    %v2146 = vrcp.pop %v2145
    %v2147 = vmul.f32 %v2142, %v2146
    %v2148 = vpack.c.bf16 %v2147, %v2147
    %2150 = vrot.lane.b32.xlu0 %v2115, 64
    %v2151 = vpop.permute.xlu0 %2150
    %v2153 = vsel %vm1406, %v2148, 0
    %v2156 = vsel %vm1425, %v2151, 0
    %2158 = vmatpush.bf16.msra.mxu0 0
    %2159 = vmatpush.bf16.msra.mxu0 0
    %2160 = vmatpush.bf16.msra.mxu0 0
    %2161 = vmatpush.bf16.msra.mxu0 0
    %2162 = vmatpush.bf16.msra.mxu0 0
    %2163 = vmatpush.bf16.msra.mxu0 0
    %2164 = vmatpush.bf16.msra.mxu0 0
    %2165 = vmatpush.bf16.msra.mxu0 %v2156
    %2166 = vmatmul.bf16.gmra.mxu0 %v2153
    %v2167 = vpop.f32.mrf.mxu0
    %v2168 = vadd.f32 0.0, %v2167
    %v2169 = vpop.f32.mrf.mxu0
    %2170 = vdwg.mxu0
    %2172 = vrot.lane.b32.xlu0 %v2114, 96
    %v2173 = vpop.permute.xlu0 %2172
    %2174 = vrot.lane.b32.xlu0 %v2115, 96
    %v2175 = vpop.permute.xlu0 %2174
    %v2177 = vsel %vm512, %v2173, 0
    %v2180 = vsel %vm512, %v2175, 0
    %2182 = vmatpush.bf16.xpose.msra.mxu0 0
    %2183 = vmatpush.bf16.xpose.msra.mxu0 0
    %2184 = vmatpush.bf16.xpose.msra.mxu0 0
    %2185 = vmatpush.bf16.xpose.msra.mxu0 0
    %2186 = vmatpush.bf16.xpose.msra.mxu0 0
    %2187 = vmatpush.bf16.xpose.msra.mxu0 0
    %2188 = vmatpush.bf16.xpose.msra.mxu0 0
    %2189 = vmatpush.bf16.xpose.msra.mxu0 %v2180
    %2190 = vmatmul.bf16.gmra.mxu0 %v2177
    %v2191 = vpop.f32.mrf.mxu0
    %v2192 = vadd.f32 0.0, %v2191
    %v2193 = vpop.f32.mrf.mxu0
    %2194 = vdwg.mxu0
    %v2195 = vmul.f32 %v2192, 0.17677669
    %v2196 = vadd.f32 %v2195, %v321
    %v2197 = vsel %vm1406, %v2196, -inf
    %2198 = vmax.xlane.f32.xlu0 %v2197
    %v2199 = vpop.xlane.xlu0 %2198
    %v2200 = vsub.f32 %v2196, %v2199
    %v2201 = vmul.f32 %v2200, 1.442695
    %v2202 = vpow.pop %v2201
    %v2203 = vsel %vm1406, %v2202, 0.0
    %2204 = vadd.xlane.f32.xlu0 %v2203
    %v2205 = vpop.xlane.xlu0 %2204
    %v2206 = vrcp.pop %v2205
    %v2207 = vmul.f32 %v2202, %v2206
    %v2208 = vpack.c.bf16 %v2207, %v2207
    %2209 = vrot.lane.b32.xlu0 %v2115, 32
    %v2210 = vpop.permute.xlu0 %2209
    %v2212 = vsel %vm1406, %v2208, 0
    %v2215 = vsel %vm1425, %v2210, 0
    %2217 = vmatpush.bf16.msra.mxu0 0
    %2218 = vmatpush.bf16.msra.mxu0 0
    %2219 = vmatpush.bf16.msra.mxu0 0
    %2220 = vmatpush.bf16.msra.mxu0 0
    %2221 = vmatpush.bf16.msra.mxu0 0
    %2222 = vmatpush.bf16.msra.mxu0 0
    %2223 = vmatpush.bf16.msra.mxu0 0
    %2224 = vmatpush.bf16.msra.mxu0 %v2215
    %2225 = vmatmul.bf16.gmra.mxu0 %v2212
    %v2226 = vpop.f32.mrf.mxu0
    %v2227 = vadd.f32 0.0, %v2226
    %v2228 = vpop.f32.mrf.mxu0
    %2229 = vdwg.mxu0
    %2231 = vrot.lane.b32.xlu0 %v2227, 32
    %v2232 = vpop.permute.xlu0 %2231
    %v2234 = vsel %vm512, %v2168, %v2232
    %v2235 = vsel %vm380, %v2234, %v2011
    %v2237 = vperm.slane %v1901, 0
    %v2239 = vmul.f32 %v2235, %v2237
    %2241 = vrot.lane.b32.xlu0 %v2239, 96
    %v2242 = vpop.permute.xlu0 %2241
    %2244 = vrot.lane.b32.xlu0 %v2239, 64
    %v2245 = vpop.permute.xlu0 %2244
    %2247 = vrot.lane.b32.xlu0 %v2239, 32
    %v2248 = vpop.permute.xlu0 %2247
    %v2250 = vsel %vm558, %v2239, %v2242
    %v2251 = vsel %vm380, %v2242, %v2245
    %v2252 = vsel %vm512, %v2245, %v2248
    %v2253 = vmul.f32 %v2250, %v241
    %v2254 = vmul.f32 %v2251, %v242
    %v2255 = vmul.f32 %v2252, %v243
    %v2256 = vpack.c.bf16 %v2253, %v2253
    %v2257 = vpack.c.bf16 %v2254, %v2254
    %v2258 = vpack.c.bf16 %v2255, %v2255
    %v2307 = vunpack.c.l.b16 %v1903
    %v2308 = vunpack.c.l.b16 %v1904
    %v2309 = vunpack.c.l.b16 %v1905
    %v2310 = vunpack.c.l.b16 %v1906
    %v2311 = vunpack.c.l.b16 %v1907
    %v2312 = vunpack.c.l.b16 %v1908
    %v2313 = vunpack.c.l.b16 %v1909
    %v2314 = vunpack.c.l.b16 %v1910
    %v2315 = vunpack.c.l.b16 %v1911
    %v2316 = vunpack.c.l.b16 %v1912
    %v2317 = vunpack.c.l.b16 %v1913
    %v2318 = vunpack.c.l.b16 %v1914
    %v2319 = vunpack.c.l.b16 %v1915
    %v2320 = vunpack.c.l.b16 %v1916
    %v2321 = vunpack.c.l.b16 %v1917
    %v2322 = vunpack.c.l.b16 %v1918
    %v2323 = vunpack.c.l.b16 %v1919
    %v2324 = vunpack.c.l.b16 %v1920
    %v2325 = vunpack.c.l.b16 %v1921
    %v2326 = vunpack.c.l.b16 %v1922
    %v2327 = vunpack.c.l.b16 %v1923
    %v2328 = vunpack.c.l.b16 %v1924
    %v2329 = vunpack.c.l.b16 %v1925
    %v2330 = vunpack.c.l.b16 %v1926
    %v2331 = vunpack.c.l.b16 %v1927
    %v2332 = vunpack.c.l.b16 %v1928
    %v2333 = vunpack.c.l.b16 %v1929
    %v2334 = vunpack.c.l.b16 %v1930
    %v2335 = vunpack.c.l.b16 %v1931
    %v2336 = vunpack.c.l.b16 %v1932
    %v2337 = vunpack.c.l.b16 %v1933
    %v2338 = vunpack.c.l.b16 %v1934
    %v2339 = vunpack.c.l.b16 %v1935
    %v2340 = vunpack.c.l.b16 %v1936
    %v2341 = vunpack.c.l.b16 %v1937
    %v2342 = vunpack.c.l.b16 %v1938
    %v2343 = vunpack.c.l.b16 %v1939
    %v2344 = vunpack.c.l.b16 %v1940
    %v2345 = vunpack.c.l.b16 %v1941
    %v2346 = vunpack.c.l.b16 %v1942
    %v2347 = vunpack.c.l.b16 %v1943
    %v2348 = vunpack.c.l.b16 %v1944
    %v2349 = vunpack.c.l.b16 %v1945
    %v2350 = vunpack.c.l.b16 %v1946
    %v2351 = vunpack.c.l.b16 %v1947
    %v2352 = vunpack.c.l.b16 %v1948
    %v2353 = vunpack.c.l.b16 %v1949
    %v2354 = vunpack.c.l.b16 %v1950
    %v2355 = vpack.c.b16 %v2308, %v2307
    %v2356 = vpack.c.b16 %v2310, %v2309
    %v2357 = vpack.c.b16 %v2312, %v2311
    %v2358 = vpack.c.b16 %v2314, %v2313
    %v2359 = vpack.c.b16 %v2316, %v2315
    %v2360 = vpack.c.b16 %v2318, %v2317
    %v2361 = vpack.c.b16 %v2320, %v2319
    %v2362 = vpack.c.b16 %v2322, %v2321
    %v2363 = vpack.c.b16 %v2324, %v2323
    %v2364 = vpack.c.b16 %v2326, %v2325
    %v2365 = vpack.c.b16 %v2328, %v2327
    %v2366 = vpack.c.b16 %v2330, %v2329
    %v2367 = vpack.c.b16 %v2332, %v2331
    %v2368 = vpack.c.b16 %v2334, %v2333
    %v2369 = vpack.c.b16 %v2336, %v2335
    %v2370 = vpack.c.b16 %v2338, %v2337
    %v2371 = vpack.c.b16 %v2340, %v2339
    %v2372 = vpack.c.b16 %v2342, %v2341
    %v2373 = vpack.c.b16 %v2344, %v2343
    %v2374 = vpack.c.b16 %v2346, %v2345
    %v2375 = vpack.c.b16 %v2348, %v2347
    %v2376 = vpack.c.b16 %v2350, %v2349
    %v2377 = vpack.c.b16 %v2352, %v2351
    %v2378 = vpack.c.b16 %v2354, %v2353
    %2403 = vmatpush.bf16.msra.mxu0 %v2362
    %2404 = vmatpush.bf16.msra.mxu0 %v2361
    %2405 = vmatpush.bf16.msra.mxu0 %v2360
    %2406 = vmatpush.bf16.msra.mxu0 %v2359
    %2407 = vmatpush.bf16.msra.mxu0 %v2358
    %2408 = vmatpush.bf16.msra.mxu0 %v2357
    %2409 = vmatpush.bf16.msra.mxu0 %v2356
    %2410 = vmatpush.bf16.msra.mxu0 %v2355
    %2411 = vmatmul.bf16.gmra.mxu0 %v2256
    %v2412 = vpop.f32.mrf.mxu0
    %v2413 = vadd.f32 %v1952, %v2412
    %v2414 = vpop.f32.mrf.mxu0
    %2415 = vdwg.mxu0
    %2416 = vmatpush.bf16.msra.mxu0 %v2370
    %2417 = vmatpush.bf16.msra.mxu0 %v2369
    %2418 = vmatpush.bf16.msra.mxu0 %v2368
    %2419 = vmatpush.bf16.msra.mxu0 %v2367
    %2420 = vmatpush.bf16.msra.mxu0 %v2366
    %2421 = vmatpush.bf16.msra.mxu0 %v2365
    %2422 = vmatpush.bf16.msra.mxu0 %v2364
    %2423 = vmatpush.bf16.msra.mxu0 %v2363
    %2424 = vmatmul.bf16.gmra.mxu0 %v2257
    %v2425 = vpop.f32.mrf.mxu0
    %v2426 = vadd.f32 %v2413, %v2425
    %v2427 = vpop.f32.mrf.mxu0
    %2428 = vdwg.mxu0
    %2429 = vmatpush.bf16.msra.mxu0 %v2378
    %2430 = vmatpush.bf16.msra.mxu0 %v2377
    %2431 = vmatpush.bf16.msra.mxu0 %v2376
    %2432 = vmatpush.bf16.msra.mxu0 %v2375
    %2433 = vmatpush.bf16.msra.mxu0 %v2374
    %2434 = vmatpush.bf16.msra.mxu0 %v2373
    %2435 = vmatpush.bf16.msra.mxu0 %v2372
    %2436 = vmatpush.bf16.msra.mxu0 %v2371
    %2437 = vmatmul.bf16.gmra.mxu0 %v2258
    %v2438 = vpop.f32.mrf.mxu0
    %v2439 = vadd.f32 %v2426, %v2438
    %v2440 = vpop.f32.mrf.mxu0
    %2441 = vdwg.mxu0
    %v2442 = vmul.f32 %v2439, %v2439
    %v2443 = vmul.f32 %v2439, %v2442
    %v2444 = vmul.f32 %v2443, 0.044715
    %v2445 = vadd.f32 %v2439, %v2444
    %v2446 = vmul.f32 %v2445, 0.7978846
    %v2447 = vtanh.pop %v2446
    %v2448 = vadd.f32 %v2447, 1.0
    %v2449 = vmul.f32 %v2448, 0.5
    %v2450 = vmul.f32 %v2439, %v2449
    %2452 = vrot.lane.b32.xlu0 %v2439, 80
    %v2453 = vpop.permute.xlu0 %2452
    %v2455 = vmul.f32 %v2450, %v2453
    %2457 = vrot.lane.b32.xlu0 %v2455, 48
    %v2458 = vpop.permute.xlu0 %2457
    %2460 = vrot.lane.b32.xlu0 %v2455, 96
    %v2461 = vpop.permute.xlu0 %2460
    %2463 = vrot.lane.b32.xlu0 %v2455, 16
    %v2464 = vpop.permute.xlu0 %2463
    %v2466 = vsel %vm1005, %v2455, %v2458
    %v2467 = vsel %vm558, %v2466, %v2461
    %v2468 = vsel %vm679, %v2461, %v2464
    %v2469 = vmul.f32 %v2467, %v305
    %v2470 = vmul.f32 %v2468, %v306
    %v2471 = vpack.c.bf16 %v2469, %v2469
    %v2472 = vpack.c.bf16 %v2470, %v2470
    %v2497 = vunpack.c.l.b16 %v1954
    %v2498 = vunpack.c.l.b16 %v1955
    %v2499 = vunpack.c.l.b16 %v1956
    %v2500 = vunpack.c.l.b16 %v1957
    %v2501 = vunpack.c.l.b16 %v1958
    %v2502 = vunpack.c.l.b16 %v1959
    %v2503 = vunpack.c.l.b16 %v1960
    %v2504 = vunpack.c.l.b16 %v1961
    %v2505 = vunpack.c.l.b16 %v1962
    %v2506 = vunpack.c.l.b16 %v1963
    %v2507 = vunpack.c.l.b16 %v1964
    %v2508 = vunpack.c.l.b16 %v1965
    %v2509 = vunpack.c.l.b16 %v1966
    %v2510 = vunpack.c.l.b16 %v1967
    %v2511 = vunpack.c.l.b16 %v1968
    %v2512 = vunpack.c.l.b16 %v1969
    %v2513 = vunpack.c.l.b16 %v1970
    %v2514 = vunpack.c.l.b16 %v1971
    %v2515 = vunpack.c.l.b16 %v1972
    %v2516 = vunpack.c.l.b16 %v1973
    %v2517 = vunpack.c.l.b16 %v1974
    %v2518 = vunpack.c.l.b16 %v1975
    %v2519 = vunpack.c.l.b16 %v1976
    %v2520 = vunpack.c.l.b16 %v1977
    %v2521 = vpack.c.b16 %v2498, %v2497
    %v2522 = vpack.c.b16 %v2500, %v2499
    %v2523 = vpack.c.b16 %v2502, %v2501
    %v2524 = vpack.c.b16 %v2504, %v2503
    %v2525 = vpack.c.b16 %v2506, %v2505
    %v2526 = vpack.c.b16 %v2508, %v2507
    %v2527 = vpack.c.b16 %v2510, %v2509
    %v2528 = vpack.c.b16 %v2512, %v2511
    %v2529 = vpack.c.b16 %v2514, %v2513
    %v2530 = vpack.c.b16 %v2516, %v2515
    %v2531 = vpack.c.b16 %v2518, %v2517
    %v2532 = vpack.c.b16 %v2520, %v2519
    %v2546 = vsel %vm380, %v2472, 0
    %2548 = vmatpush.bf16.msra.mxu0 %v2528
    %2549 = vmatpush.bf16.msra.mxu0 %v2527
    %2550 = vmatpush.bf16.msra.mxu0 %v2526
    %2551 = vmatpush.bf16.msra.mxu0 %v2525
    %2552 = vmatpush.bf16.msra.mxu0 %v2524
    %2553 = vmatpush.bf16.msra.mxu0 %v2523
    %2554 = vmatpush.bf16.msra.mxu0 %v2522
    %2555 = vmatpush.bf16.msra.mxu0 %v2521
    %2556 = vmatmul.bf16.gmra.mxu0 %v2471
    %v2557 = vpop.f32.mrf.mxu0
    %v2558 = vadd.f32 %v1979, %v2557
    %v2559 = vpop.f32.mrf.mxu0
    %2560 = vdwg.mxu0
    %2561 = vmatpush.bf16.msra.mxu0 0
    %2562 = vmatpush.bf16.msra.mxu0 0
    %2563 = vmatpush.bf16.msra.mxu0 0
    %2564 = vmatpush.bf16.msra.mxu0 0
    %2565 = vmatpush.bf16.msra.mxu0 %v2532
    %2566 = vmatpush.bf16.msra.mxu0 %v2531
    %2567 = vmatpush.bf16.msra.mxu0 %v2530
    %2568 = vmatpush.bf16.msra.mxu0 %v2529
    %2569 = vmatmul.bf16.gmra.mxu0 %v2546
    %v2570 = vpop.f32.mrf.mxu0
    %v2571 = vadd.f32 %v2558, %v2570
    %v2572 = vpop.f32.mrf.mxu0
    %2573 = vdwg.mxu0
    %v2574 = vxor.u32 %v2571, 2147483648
    %v2575 = vmul.f32 %v2574, 1.442695
    %v2576 = vpow.pop %v2575
    %v2577 = vadd.f32 %v2576, 1.0
    %v2578 = vrcp.pop %v2577
    %v2579 = vmul.f32 %v2577, %v2578
    %v2580 = vsub.f32 1.0, %v2579
    %v2581 = vmul.f32 %v2578, %v2580
    %v2582 = vadd.f32 %v2578, %v2581
    %vm2583 = vweird.f32 %v2577
    %vm2584 = vweird.f32 %v2578
    %vm2585 = vmor %vm2583, %vm2584
    %v2586 = vsel %vm2585, %v2578, %v2582
    %v2587 = vand.u32 2147483647, %v2577
    %vm2588 = vcmp.eq.f32.partialorder %v2587, 8.507059e+37
    %v2589 = vand.u32 %v2577, 2147483648
    %v2590 = vor.u32 1.1754944e-38, %v2589
    %v2591 = vsel %vm2588, %v2590, %v2586
    %v2592 = vmul.f32 1.0, %v2591
    %v2593 = vmul.f32 %v2592, 2.0
    %2595 = vset.pattern.permute.xlu0 32
    %2596 = vperm.xlu0 %2595, %v2593
    %v2597 = vpop.permute.xlu0 %2596
    %v2599 = vmul.f32 %v2571, %v2597
    %v2600 = vadd.f32 %v1871, %v2599
    %v2601 = vld [vmem:[%s33] sm:$0x3]
    %v2602 = vld [vmem:[%s35] sm:$0xf]
    %v2603 = vld [vmem:[%s35 + $0x4] sm:$0xf]
    %v2604 = vld [vmem:[%s35 + $0x8] sm:$0xf]
    %v2605 = vld [vmem:[%s35 + $0xc] sm:$0xf]
    %v2606 = vld [vmem:[%s35 + $0x10] sm:$0xf]
    %v2607 = vld [vmem:[%s35 + $0x14] sm:$0xf]
    %v2608 = vld [vmem:[%s35 + $0x18] sm:$0xf]
    %v2609 = vld [vmem:[%s35 + $0x1c] sm:$0xf]
    %v2610 = vld [vmem:[%s35 + $0x20] sm:$0xf]
    %v2611 = vld [vmem:[%s35 + $0x24] sm:$0xf]
    %v2612 = vld [vmem:[%s35 + $0x28] sm:$0xf]
    %v2613 = vld [vmem:[%s35 + $0x2c] sm:$0xf]
    %v2614 = vld [vmem:[%s35 + $0x30] sm:$0xf]
    %v2615 = vld [vmem:[%s35 + $0x34] sm:$0xf]
    %v2616 = vld [vmem:[%s35 + $0x38] sm:$0xf]
    %v2617 = vld [vmem:[%s35 + $0x3c] sm:$0xf]
    %v2618 = vld [vmem:[%s37] sm:$0xff]
    %v2619 = vld [vmem:[%s39] sm:$0xf]
    %v2620 = vld [vmem:[%s39 + $0x4] sm:$0xf]
    %v2621 = vld [vmem:[%s39 + $0x8] sm:$0xf]
    %v2622 = vld [vmem:[%s39 + $0xc] sm:$0xf]
    %v2623 = vld [vmem:[%s41] sm:$0x1]
    %v2624 = vld [vmem:[%s43] sm:$0x1]
    %v2625 = vld [vmem:[%s45] sm:$0xf]
    %v2626 = vld [vmem:[%s45 + $0x4] sm:$0xf]
    %v2627 = vld [vmem:[%s45 + $0x8] sm:$0xf]
    %v2628 = vld [vmem:[%s45 + $0xc] sm:$0xf]
    %v2629 = vld [vmem:[%s45 + $0x10] sm:$0xf]
    %v2630 = vld [vmem:[%s45 + $0x14] sm:$0xf]
    %v2631 = vld [vmem:[%s45 + $0x18] sm:$0xf]
    %v2632 = vld [vmem:[%s45 + $0x1c] sm:$0xf]
    %v2633 = vld [vmem:[%s45 + $0x20] sm:$0xf]
    %v2634 = vld [vmem:[%s45 + $0x24] sm:$0xf]
    %v2635 = vld [vmem:[%s45 + $0x28] sm:$0xf]
    %v2636 = vld [vmem:[%s45 + $0x2c] sm:$0xf]
    %v2637 = vld [vmem:[%s45 + $0x30] sm:$0xf]
    %v2638 = vld [vmem:[%s45 + $0x34] sm:$0xf]
    %v2639 = vld [vmem:[%s45 + $0x38] sm:$0xf]
    %v2640 = vld [vmem:[%s45 + $0x3c] sm:$0xf]
    %v2641 = vld [vmem:[%s45 + $0x40] sm:$0xf]
    %v2642 = vld [vmem:[%s45 + $0x44] sm:$0xf]
    %v2643 = vld [vmem:[%s45 + $0x48] sm:$0xf]
    %v2644 = vld [vmem:[%s45 + $0x4c] sm:$0xf]
    %v2645 = vld [vmem:[%s45 + $0x50] sm:$0xf]
    %v2646 = vld [vmem:[%s45 + $0x54] sm:$0xf]
    %v2647 = vld [vmem:[%s45 + $0x58] sm:$0xf]
    %v2648 = vld [vmem:[%s45 + $0x5c] sm:$0xf]
    %v2649 = vld [vmem:[%s45 + $0x60] sm:$0xf]
    %v2650 = vld [vmem:[%s45 + $0x64] sm:$0xf]
    %v2651 = vld [vmem:[%s45 + $0x68] sm:$0xf]
    %v2652 = vld [vmem:[%s45 + $0x6c] sm:$0xf]
    %v2653 = vld [vmem:[%s45 + $0x70] sm:$0xf]
    %v2654 = vld [vmem:[%s45 + $0x74] sm:$0xf]
    %v2655 = vld [vmem:[%s45 + $0x78] sm:$0xf]
    %v2656 = vld [vmem:[%s45 + $0x7c] sm:$0xf]
    %v2657 = vld [vmem:[%s47] sm:$0xff]
    %v2658 = vld [vmem:[%s49] sm:$0xf]
    %v2659 = vld [vmem:[%s49 + $0x4] sm:$0xf]
    %v2660 = vld [vmem:[%s49 + $0x8] sm:$0xf]
    %v2661 = vld [vmem:[%s49 + $0xc] sm:$0xf]
    %v2662 = vld [vmem:[%s49 + $0x10] sm:$0xf]
    %v2663 = vld [vmem:[%s49 + $0x14] sm:$0xf]
    %v2664 = vld [vmem:[%s49 + $0x18] sm:$0xf]
    %v2665 = vld [vmem:[%s49 + $0x1c] sm:$0xf]
    %v2666 = vld [vmem:[%s49 + $0x20] sm:$0xf]
    %v2667 = vld [vmem:[%s49 + $0x24] sm:$0xf]
    %v2668 = vld [vmem:[%s49 + $0x28] sm:$0xf]
    %v2669 = vld [vmem:[%s49 + $0x2c] sm:$0xf]
    %v2670 = vld [vmem:[%s49 + $0x30] sm:$0xf]
    %v2671 = vld [vmem:[%s49 + $0x34] sm:$0xf]
    %v2672 = vld [vmem:[%s49 + $0x38] sm:$0xf]
    %v2673 = vld [vmem:[%s49 + $0x3c] sm:$0xf]
    %v2674 = vld [vmem:[%s49 + $0x40] sm:$0xf]
    %v2675 = vld [vmem:[%s49 + $0x44] sm:$0xf]
    %v2676 = vld [vmem:[%s49 + $0x48] sm:$0xf]
    %v2677 = vld [vmem:[%s49 + $0x4c] sm:$0xf]
    %v2678 = vld [vmem:[%s49 + $0x50] sm:$0xf]
    %v2679 = vld [vmem:[%s49 + $0x54] sm:$0xf]
    %v2680 = vld [vmem:[%s49 + $0x58] sm:$0xf]
    %v2681 = vld [vmem:[%s49 + $0x5c] sm:$0xf]
    %v2682 = vld [vmem:[%s51] sm:$0xff]
    %v2683 = vsel %vm512, %v2600, 0.0
    %2684 = vadd.xlane.f32.xlu0 %v2683
    %v2685 = vpop.xlane.xlu0 %2684
    %v2686 = vmul.f32 %v2685, %v522
    %v2687 = vsub.f32 %v2600, %v2686
    %v2688 = vmul.f32 %v2687, %v2687
    %v2689 = vsel %vm512, %v2688, 0.0
    %2690 = vadd.xlane.f32.xlu0 %v2689
    %v2691 = vpop.xlane.xlu0 %2690
    %v2692 = vmul.f32 %v2691, %v522
    %v2693 = vadd.f32 %v2692, 1e-05
    %v2694 = vrsqrt.pop %v2693
    %v2695 = vmul.f32 %v2694, %v2693
    %v2696 = vmul.f32 %v2695, %v2694
    %v2697 = vmul.f32 0.5, %v2696
    %v2698 = vsub.f32 1.5, %v2697
    %v2699 = vmul.f32 %v2694, %v2698
    %vm2700 = vweird.f32 %v2693
    %vm2701 = vweird.f32 %v2694
    %vm2702 = vmor %vm2700, %vm2701
    %v2703 = vsel %vm2702, %v2694, %v2699
    %v2704 = vmul.f32 %v2687, %v2703
    %v2705 = vperm.slane %v2601, 0
    %v2706 = vmul.f32 %v2704, %v2705
    %v2707 = vperm.slane %v2601, 1
    %v2708 = vadd.f32 %v2706, %v2707
    %2710 = vrot.lane.b32.xlu0 %v2708, 32
    %v2711 = vpop.permute.xlu0 %2710
    %2713 = vrot.lane.b32.xlu0 %v2708, 64
    %v2714 = vpop.permute.xlu0 %2713
    %2716 = vrot.lane.b32.xlu0 %v2708, 96
    %v2717 = vpop.permute.xlu0 %2716
    %v2719 = vsel %vm512, %v2708, %v2711
    %v2720 = vsel %vm380, %v2719, %v2714
    %v2721 = vsel %vm558, %v2720, %v2717
    %v2722 = vmul.f32 %v2721, %v182
    %v2723 = vpack.c.bf16 %v2722, %v2722
    %v2740 = vunpack.c.l.b16 %v2602
    %v2741 = vunpack.c.l.b16 %v2603
    %v2742 = vunpack.c.l.b16 %v2604
    %v2743 = vunpack.c.l.b16 %v2605
    %v2744 = vunpack.c.l.b16 %v2606
    %v2745 = vunpack.c.l.b16 %v2607
    %v2746 = vunpack.c.l.b16 %v2608
    %v2747 = vunpack.c.l.b16 %v2609
    %v2748 = vunpack.c.l.b16 %v2610
    %v2749 = vunpack.c.l.b16 %v2611
    %v2750 = vunpack.c.l.b16 %v2612
    %v2751 = vunpack.c.l.b16 %v2613
    %v2752 = vunpack.c.l.b16 %v2614
    %v2753 = vunpack.c.l.b16 %v2615
    %v2754 = vunpack.c.l.b16 %v2616
    %v2755 = vunpack.c.l.b16 %v2617
    %v2756 = vpack.c.b16 %v2741, %v2740
    %v2757 = vpack.c.b16 %v2743, %v2742
    %v2758 = vpack.c.b16 %v2745, %v2744
    %v2759 = vpack.c.b16 %v2747, %v2746
    %v2760 = vpack.c.b16 %v2749, %v2748
    %v2761 = vpack.c.b16 %v2751, %v2750
    %v2762 = vpack.c.b16 %v2753, %v2752
    %v2763 = vpack.c.b16 %v2755, %v2754
    %2772 = vmatpush.bf16.msra.mxu0 %v2763
    %2773 = vmatpush.bf16.msra.mxu0 %v2762
    %2774 = vmatpush.bf16.msra.mxu0 %v2761
    %2775 = vmatpush.bf16.msra.mxu0 %v2760
    %2776 = vmatpush.bf16.msra.mxu0 %v2759
    %2777 = vmatpush.bf16.msra.mxu0 %v2758
    %2778 = vmatpush.bf16.msra.mxu0 %v2757
    %2779 = vmatpush.bf16.msra.mxu0 %v2756
    %2780 = vmatmul.bf16.gmra.mxu0 %v2723
    %v2781 = vpop.f32.mrf.mxu0
    %v2782 = vadd.f32 %v2618, %v2781
    %v2783 = vpop.f32.mrf.mxu0
    %2784 = vdwg.mxu0
    %v2785 = vpack.c.bf16 %v2708, %v2708
    %v2787 = vperm.slane %v2623, 0
    %v2793 = vunpack.c.l.b16 %v2619
    %v2794 = vunpack.c.l.b16 %v2620
    %v2795 = vunpack.c.l.b16 %v2621
    %v2796 = vunpack.c.l.b16 %v2622
    %v2797 = vpack.c.b16 %v2794, %v2793
    %v2798 = vpack.c.b16 %v2796, %v2795
    %v2802 = vsel %vm512, %v2785, 0
    %2804 = vmatpush.bf16.msra.mxu0 0
    %2805 = vmatpush.bf16.msra.mxu0 0
    %2806 = vmatpush.bf16.msra.mxu0 0
    %2807 = vmatpush.bf16.msra.mxu0 0
    %2808 = vmatpush.bf16.msra.mxu0 0
    %2809 = vmatpush.bf16.msra.mxu0 0
    %2810 = vmatpush.bf16.msra.mxu0 %v2798
    %2811 = vmatpush.bf16.msra.mxu0 %v2797
    %2812 = vmatmul.bf16.gmra.mxu0 %v2802
    %v2813 = vpop.f32.mrf.mxu0
    %v2814 = vadd.f32 %v2787, %v2813
    %v2815 = vpop.f32.mrf.mxu0
    %2816 = vdwg.mxu0
    %v2817 = vpack.c.bf16 %v2782, %v2782
    %v2818 = vpack.c.bf16 %v2814, %v2814
    %v2820 = vsel %vm512, %v2817, 0
    %v2823 = vsel %vm512, %v2818, 0
    %2825 = vmatpush.bf16.xpose.msra.mxu0 0
    %2826 = vmatpush.bf16.xpose.msra.mxu0 0
    %2827 = vmatpush.bf16.xpose.msra.mxu0 0
    %2828 = vmatpush.bf16.xpose.msra.mxu0 0
    %2829 = vmatpush.bf16.xpose.msra.mxu0 0
    %2830 = vmatpush.bf16.xpose.msra.mxu0 0
    %2831 = vmatpush.bf16.xpose.msra.mxu0 0
    %2832 = vmatpush.bf16.xpose.msra.mxu0 %v2823
    %2833 = vmatmul.bf16.gmra.mxu0 %v2820
    %v2834 = vpop.f32.mrf.mxu0
    %v2835 = vadd.f32 0.0, %v2834
    %v2836 = vpop.f32.mrf.mxu0
    %2837 = vdwg.mxu0
    %v2838 = vmul.f32 %v2835, 0.17677669
    %v2839 = vadd.f32 %v2838, %v321
    %v2840 = vsel %vm1406, %v2839, -inf
    %2841 = vmax.xlane.f32.xlu0 %v2840
    %v2842 = vpop.xlane.xlu0 %2841
    %v2843 = vsub.f32 %v2839, %v2842
    %v2844 = vmul.f32 %v2843, 1.442695
    %v2845 = vpow.pop %v2844
    %v2846 = vsel %vm1406, %v2845, 0.0
    %2847 = vadd.xlane.f32.xlu0 %v2846
    %v2848 = vpop.xlane.xlu0 %2847
    %v2849 = vrcp.pop %v2848
    %v2850 = vmul.f32 %v2845, %v2849
    %v2851 = vpack.c.bf16 %v2850, %v2850
    %2853 = vrot.lane.b32.xlu0 %v2818, 64
    %v2854 = vpop.permute.xlu0 %2853
    %v2856 = vsel %vm1406, %v2851, 0
    %v2859 = vsel %vm1425, %v2854, 0
    %2861 = vmatpush.bf16.msra.mxu0 0
    %2862 = vmatpush.bf16.msra.mxu0 0
    %2863 = vmatpush.bf16.msra.mxu0 0
    %2864 = vmatpush.bf16.msra.mxu0 0
    %2865 = vmatpush.bf16.msra.mxu0 0
    %2866 = vmatpush.bf16.msra.mxu0 0
    %2867 = vmatpush.bf16.msra.mxu0 0
    %2868 = vmatpush.bf16.msra.mxu0 %v2859
    %2869 = vmatmul.bf16.gmra.mxu0 %v2856
    %v2870 = vpop.f32.mrf.mxu0
    %v2871 = vadd.f32 0.0, %v2870
    %v2872 = vpop.f32.mrf.mxu0
    %2873 = vdwg.mxu0
    %2875 = vrot.lane.b32.xlu0 %v2817, 96
    %v2876 = vpop.permute.xlu0 %2875
    %2877 = vrot.lane.b32.xlu0 %v2818, 96
    %v2878 = vpop.permute.xlu0 %2877
    %v2880 = vsel %vm512, %v2876, 0
    %v2883 = vsel %vm512, %v2878, 0
    %2885 = vmatpush.bf16.xpose.msra.mxu0 0
    %2886 = vmatpush.bf16.xpose.msra.mxu0 0
    %2887 = vmatpush.bf16.xpose.msra.mxu0 0
    %2888 = vmatpush.bf16.xpose.msra.mxu0 0
    %2889 = vmatpush.bf16.xpose.msra.mxu0 0
    %2890 = vmatpush.bf16.xpose.msra.mxu0 0
    %2891 = vmatpush.bf16.xpose.msra.mxu0 0
    %2892 = vmatpush.bf16.xpose.msra.mxu0 %v2883
    %2893 = vmatmul.bf16.gmra.mxu0 %v2880
    %v2894 = vpop.f32.mrf.mxu0
    %v2895 = vadd.f32 0.0, %v2894
    %v2896 = vpop.f32.mrf.mxu0
    %2897 = vdwg.mxu0
    %v2898 = vmul.f32 %v2895, 0.17677669
    %v2899 = vadd.f32 %v2898, %v321
    %v2900 = vsel %vm1406, %v2899, -inf
    %2901 = vmax.xlane.f32.xlu0 %v2900
    %v2902 = vpop.xlane.xlu0 %2901
    %v2903 = vsub.f32 %v2899, %v2902
    %v2904 = vmul.f32 %v2903, 1.442695
    %v2905 = vpow.pop %v2904
    %v2906 = vsel %vm1406, %v2905, 0.0
    %2907 = vadd.xlane.f32.xlu0 %v2906
    %v2908 = vpop.xlane.xlu0 %2907
    %v2909 = vrcp.pop %v2908
    %v2910 = vmul.f32 %v2905, %v2909
    %v2911 = vpack.c.bf16 %v2910, %v2910
    %2912 = vrot.lane.b32.xlu0 %v2818, 32
    %v2913 = vpop.permute.xlu0 %2912
    %v2915 = vsel %vm1406, %v2911, 0
    %v2918 = vsel %vm1425, %v2913, 0
    %2920 = vmatpush.bf16.msra.mxu0 0
    %2921 = vmatpush.bf16.msra.mxu0 0
    %2922 = vmatpush.bf16.msra.mxu0 0
    %2923 = vmatpush.bf16.msra.mxu0 0
    %2924 = vmatpush.bf16.msra.mxu0 0
    %2925 = vmatpush.bf16.msra.mxu0 0
    %2926 = vmatpush.bf16.msra.mxu0 0
    %2927 = vmatpush.bf16.msra.mxu0 %v2918
    %2928 = vmatmul.bf16.gmra.mxu0 %v2915
    %v2929 = vpop.f32.mrf.mxu0
    %v2930 = vadd.f32 0.0, %v2929
    %v2931 = vpop.f32.mrf.mxu0
    %2932 = vdwg.mxu0
    %2934 = vrot.lane.b32.xlu0 %v2930, 32
    %v2935 = vpop.permute.xlu0 %2934
    %v2937 = vsel %vm512, %v2871, %v2935
    %v2939 = vperm.slane %v2624, 0
    %v2941 = vmul.f32 %v2937, %v2939
    %2943 = vrot.lane.b32.xlu0 %v2941, 64
    %v2944 = vpop.permute.xlu0 %2943
    %v2946 = vsel %vm380, %v2941, %v2944
    %v2947 = vmul.f32 %v2946, %v273
    %v2948 = vmul.f32 %v2946, %v274
    %v2949 = vpack.c.bf16 %v2947, %v2947
    %v2950 = vpack.c.bf16 %v2948, %v2948
    %v2983 = vunpack.c.l.b16 %v2625
    %v2984 = vunpack.c.l.b16 %v2626
    %v2985 = vunpack.c.l.b16 %v2627
    %v2986 = vunpack.c.l.b16 %v2628
    %v2987 = vunpack.c.l.b16 %v2629
    %v2988 = vunpack.c.l.b16 %v2630
    %v2989 = vunpack.c.l.b16 %v2631
    %v2990 = vunpack.c.l.b16 %v2632
    %v2991 = vunpack.c.l.b16 %v2633
    %v2992 = vunpack.c.l.b16 %v2634
    %v2993 = vunpack.c.l.b16 %v2635
    %v2994 = vunpack.c.l.b16 %v2636
    %v2995 = vunpack.c.l.b16 %v2637
    %v2996 = vunpack.c.l.b16 %v2638
    %v2997 = vunpack.c.l.b16 %v2639
    %v2998 = vunpack.c.l.b16 %v2640
    %v2999 = vunpack.c.l.b16 %v2641
    %v3000 = vunpack.c.l.b16 %v2642
    %v3001 = vunpack.c.l.b16 %v2643
    %v3002 = vunpack.c.l.b16 %v2644
    %v3003 = vunpack.c.l.b16 %v2645
    %v3004 = vunpack.c.l.b16 %v2646
    %v3005 = vunpack.c.l.b16 %v2647
    %v3006 = vunpack.c.l.b16 %v2648
    %v3007 = vunpack.c.l.b16 %v2649
    %v3008 = vunpack.c.l.b16 %v2650
    %v3009 = vunpack.c.l.b16 %v2651
    %v3010 = vunpack.c.l.b16 %v2652
    %v3011 = vunpack.c.l.b16 %v2653
    %v3012 = vunpack.c.l.b16 %v2654
    %v3013 = vunpack.c.l.b16 %v2655
    %v3014 = vunpack.c.l.b16 %v2656
    %v3015 = vpack.c.b16 %v2984, %v2983
    %v3016 = vpack.c.b16 %v2986, %v2985
    %v3017 = vpack.c.b16 %v2988, %v2987
    %v3018 = vpack.c.b16 %v2990, %v2989
    %v3019 = vpack.c.b16 %v2992, %v2991
    %v3020 = vpack.c.b16 %v2994, %v2993
    %v3021 = vpack.c.b16 %v2996, %v2995
    %v3022 = vpack.c.b16 %v2998, %v2997
    %v3023 = vpack.c.b16 %v3000, %v2999
    %v3024 = vpack.c.b16 %v3002, %v3001
    %v3025 = vpack.c.b16 %v3004, %v3003
    %v3026 = vpack.c.b16 %v3006, %v3005
    %v3027 = vpack.c.b16 %v3008, %v3007
    %v3028 = vpack.c.b16 %v3010, %v3009
    %v3029 = vpack.c.b16 %v3012, %v3011
    %v3030 = vpack.c.b16 %v3014, %v3013
    %3047 = vmatpush.bf16.msra.mxu0 %v3022
    %3048 = vmatpush.bf16.msra.mxu0 %v3021
    %3049 = vmatpush.bf16.msra.mxu0 %v3020
    %3050 = vmatpush.bf16.msra.mxu0 %v3019
    %3051 = vmatpush.bf16.msra.mxu0 %v3018
    %3052 = vmatpush.bf16.msra.mxu0 %v3017
    %3053 = vmatpush.bf16.msra.mxu0 %v3016
    %3054 = vmatpush.bf16.msra.mxu0 %v3015
    %3055 = vmatmul.bf16.gmra.mxu0 %v2949
    %v3056 = vpop.f32.mrf.mxu0
    %v3057 = vadd.f32 %v2657, %v3056
    %v3058 = vpop.f32.mrf.mxu0
    %3059 = vdwg.mxu0
    %3060 = vmatpush.bf16.msra.mxu0 %v3030
    %3061 = vmatpush.bf16.msra.mxu0 %v3029
    %3062 = vmatpush.bf16.msra.mxu0 %v3028
    %3063 = vmatpush.bf16.msra.mxu0 %v3027
    %3064 = vmatpush.bf16.msra.mxu0 %v3026
    %3065 = vmatpush.bf16.msra.mxu0 %v3025
    %3066 = vmatpush.bf16.msra.mxu0 %v3024
    %3067 = vmatpush.bf16.msra.mxu0 %v3023
    %3068 = vmatmul.bf16.gmra.mxu0 %v2950
    %v3069 = vpop.f32.mrf.mxu0
    %v3070 = vadd.f32 %v3057, %v3069
    %v3071 = vpop.f32.mrf.mxu0
    %3072 = vdwg.mxu0
    %v3073 = vmul.f32 %v3070, %v3070
    %v3074 = vmul.f32 %v3070, %v3073
    %v3075 = vmul.f32 %v3074, 0.044715
    %v3076 = vadd.f32 %v3070, %v3075
    %v3077 = vmul.f32 %v3076, 0.7978846
    %v3078 = vtanh.pop %v3077
    %v3079 = vadd.f32 %v3078, 1.0
    %v3080 = vmul.f32 %v3079, 0.5
    %v3081 = vmul.f32 %v3070, %v3080
    %3083 = vrot.lane.b32.xlu0 %v3070, 80
    %v3084 = vpop.permute.xlu0 %3083
    %v3086 = vmul.f32 %v3081, %v3084
    %3088 = vrot.lane.b32.xlu0 %v3086, 48
    %v3089 = vpop.permute.xlu0 %3088
    %3091 = vrot.lane.b32.xlu0 %v3086, 96
    %v3092 = vpop.permute.xlu0 %3091
    %3094 = vrot.lane.b32.xlu0 %v3086, 16
    %v3095 = vpop.permute.xlu0 %3094
    %v3097 = vsel %vm1005, %v3086, %v3089
    %v3098 = vsel %vm558, %v3097, %v3092
    %v3099 = vsel %vm679, %v3092, %v3095
    %v3100 = vmul.f32 %v3098, %v305
    %v3101 = vmul.f32 %v3099, %v306
    %v3102 = vpack.c.bf16 %v3100, %v3100
    %v3103 = vpack.c.bf16 %v3101, %v3101
    %v3128 = vunpack.c.l.b16 %v2658
    %v3129 = vunpack.c.l.b16 %v2659
    %v3130 = vunpack.c.l.b16 %v2660
    %v3131 = vunpack.c.l.b16 %v2661
    %v3132 = vunpack.c.l.b16 %v2662
    %v3133 = vunpack.c.l.b16 %v2663
    %v3134 = vunpack.c.l.b16 %v2664
    %v3135 = vunpack.c.l.b16 %v2665
    %v3136 = vunpack.c.l.b16 %v2666
    %v3137 = vunpack.c.l.b16 %v2667
    %v3138 = vunpack.c.l.b16 %v2668
    %v3139 = vunpack.c.l.b16 %v2669
    %v3140 = vunpack.c.l.b16 %v2670
    %v3141 = vunpack.c.l.b16 %v2671
    %v3142 = vunpack.c.l.b16 %v2672
    %v3143 = vunpack.c.l.b16 %v2673
    %v3144 = vunpack.c.l.b16 %v2674
    %v3145 = vunpack.c.l.b16 %v2675
    %v3146 = vunpack.c.l.b16 %v2676
    %v3147 = vunpack.c.l.b16 %v2677
    %v3148 = vunpack.c.l.b16 %v2678
    %v3149 = vunpack.c.l.b16 %v2679
    %v3150 = vunpack.c.l.b16 %v2680
    %v3151 = vunpack.c.l.b16 %v2681
    %v3152 = vpack.c.b16 %v3129, %v3128
    %v3153 = vpack.c.b16 %v3131, %v3130
    %v3154 = vpack.c.b16 %v3133, %v3132
    %v3155 = vpack.c.b16 %v3135, %v3134
    %v3156 = vpack.c.b16 %v3137, %v3136
    %v3157 = vpack.c.b16 %v3139, %v3138
    %v3158 = vpack.c.b16 %v3141, %v3140
    %v3159 = vpack.c.b16 %v3143, %v3142
    %v3160 = vpack.c.b16 %v3145, %v3144
    %v3161 = vpack.c.b16 %v3147, %v3146
    %v3162 = vpack.c.b16 %v3149, %v3148
    %v3163 = vpack.c.b16 %v3151, %v3150
    %v3177 = vsel %vm380, %v3103, 0
    %3179 = vmatpush.bf16.msra.mxu0 %v3159
    %3180 = vmatpush.bf16.msra.mxu0 %v3158
    %3181 = vmatpush.bf16.msra.mxu0 %v3157
    %3182 = vmatpush.bf16.msra.mxu0 %v3156
    %3183 = vmatpush.bf16.msra.mxu0 %v3155
    %3184 = vmatpush.bf16.msra.mxu0 %v3154
    %3185 = vmatpush.bf16.msra.mxu0 %v3153
    %3186 = vmatpush.bf16.msra.mxu0 %v3152
    %3187 = vmatmul.bf16.gmra.mxu0 %v3102
    %v3188 = vpop.f32.mrf.mxu0
    %v3189 = vadd.f32 %v2682, %v3188
    %v3190 = vpop.f32.mrf.mxu0
    %3191 = vdwg.mxu0
    %3192 = vmatpush.bf16.msra.mxu0 0
    %3193 = vmatpush.bf16.msra.mxu0 0
    %3194 = vmatpush.bf16.msra.mxu0 0
    %3195 = vmatpush.bf16.msra.mxu0 0
    %3196 = vmatpush.bf16.msra.mxu0 %v3163
    %3197 = vmatpush.bf16.msra.mxu0 %v3162
    %3198 = vmatpush.bf16.msra.mxu0 %v3161
    %3199 = vmatpush.bf16.msra.mxu0 %v3160
    %3200 = vmatmul.bf16.gmra.mxu0 %v3177
    %v3201 = vpop.f32.mrf.mxu0
    %v3202 = vadd.f32 %v3189, %v3201
    %v3203 = vpop.f32.mrf.mxu0
    %3204 = vdwg.mxu0
    %v3205 = vld [vmem:[%s55] sm:$0xf]
    %v3206 = vld [vmem:[%s55 + $0x4] sm:$0xf]
    %v3207 = vld [vmem:[%s55 + $0x8] sm:$0xf]
    %v3208 = vld [vmem:[%s55 + $0xc] sm:$0xf]
    %v3209 = vpack.c.bf16 %v3202, %v3202
    %v3210 = vld [vmem:[%s57] sm:$0x1]
    %v3212 = vperm.slane %v3210, 0
    %v3218 = vunpack.c.l.b16 %v3205
    %v3219 = vunpack.c.l.b16 %v3206
    %v3220 = vunpack.c.l.b16 %v3207
    %v3221 = vunpack.c.l.b16 %v3208
    %v3222 = vpack.c.b16 %v3219, %v3218
    %v3223 = vpack.c.b16 %v3221, %v3220
    %v3227 = vsel %vm512, %v3209, 0
    %3229 = vmatpush.bf16.msra.mxu0 0
    %3230 = vmatpush.bf16.msra.mxu0 0
    %3231 = vmatpush.bf16.msra.mxu0 0
    %3232 = vmatpush.bf16.msra.mxu0 0
    %3233 = vmatpush.bf16.msra.mxu0 0
    %3234 = vmatpush.bf16.msra.mxu0 0
    %3235 = vmatpush.bf16.msra.mxu0 %v3223
    %3236 = vmatpush.bf16.msra.mxu0 %v3222
    %3237 = vmatmul.bf16.gmra.mxu0 %v3227
    %v3238 = vpop.f32.mrf.mxu0
    %v3239 = vadd.f32 %v3212, %v3238
    %v3240 = vpop.f32.mrf.mxu0
    %3241 = vdwg.mxu0
    %v3242 = vld [vmem:[%s53] sm:$0x3]
    %v3244 = vrot.slane %v3242, 6
    %vm3246 = vcmask 1041408
    %v3247 = vsel %vm3246, %v3242, %v3244
    %v3248 = vpack.c.bf16 %v3247, %v3247
    %v3249 = vpack.c.bf16 %v3239, %v3239
    %v3251 = vsel %vm512, %v3248, 0
    %v3254 = vsel %vm512, %v3249, 0
    %3256 = vmatpush.bf16.xpose.msra.mxu0 0
    %3257 = vmatpush.bf16.xpose.msra.mxu0 0
    %3258 = vmatpush.bf16.xpose.msra.mxu0 0
    %3259 = vmatpush.bf16.xpose.msra.mxu0 0
    %3260 = vmatpush.bf16.xpose.msra.mxu0 0
    %3261 = vmatpush.bf16.xpose.msra.mxu0 0
    %3262 = vmatpush.bf16.xpose.msra.mxu0 0
    %3263 = vmatpush.bf16.xpose.msra.mxu0 %v3254
    %3264 = vmatmul.bf16.gmra.mxu0 %v3251
    %v3265 = vpop.f32.mrf.mxu0
    %v3266 = vadd.f32 0.0, %v3265
    %v3267 = vpop.f32.mrf.mxu0
    %3268 = vdwg.mxu0
    %v3269 = vmul.f32 %v3266, 0.17677669
    %v3270 = vadd.f32 %v3269, %v338
    %vm3271 = vcmask 60416
    %v3272 = vsel %vm3271, %v3270, -inf
    %3273 = vmax.xlane.f32.xlu0 %v3272
    %v3274 = vpop.xlane.xlu0 %3273
    %v3275 = vsub.f32 %v3270, %v3274
    %v3276 = vmul.f32 %v3275, 1.442695
    %v3277 = vpow.pop %v3276
    %v3278 = vsel %vm3271, %v3277, 0.0
    %3279 = vadd.xlane.f32.xlu0 %v3278
    %v3280 = vpop.xlane.xlu0 %3279
    %v3281 = vrcp.pop %v3280
    %v3282 = vmul.f32 %v3277, %v3281
    %v3283 = vpack.c.bf16 %v3282, %v3282
    %3285 = vrot.lane.b32.xlu0 %v3249, 96
    %v3286 = vpop.permute.xlu0 %3285
    %v3288 = vsel %vm1406, %v3283, 0
    %v3291 = vsel %vm1425, %v3286, 0
    %3293 = vmatpush.bf16.msra.mxu0 0
    %3294 = vmatpush.bf16.msra.mxu0 0
    %3295 = vmatpush.bf16.msra.mxu0 0
    %3296 = vmatpush.bf16.msra.mxu0 0
    %3297 = vmatpush.bf16.msra.mxu0 0
    %3298 = vmatpush.bf16.msra.mxu0 0
    %3299 = vmatpush.bf16.msra.mxu0 0
    %3300 = vmatpush.bf16.msra.mxu0 %v3291
    %3301 = vmatmul.bf16.gmra.mxu0 %v3288
    %v3302 = vpop.f32.mrf.mxu0
    %v3303 = vadd.f32 0.0, %v3302
    %v3304 = vpop.f32.mrf.mxu0
    %3305 = vdwg.mxu0
    %v3306 = vld [vmem:[%s59] sm:$0xf]
    %v3307 = vld [vmem:[%s59 + $0x4] sm:$0xf]
    %v3308 = vld [vmem:[%s59 + $0x8] sm:$0xf]
    %v3309 = vld [vmem:[%s59 + $0xc] sm:$0xf]
    %v3310 = vpack.c.bf16 %v3303, %v3303
    %v3311 = vld [vmem:[%s61] sm:$0x1]
    %v3313 = vperm.slane %v3311, 0
    %v3319 = vunpack.c.l.b16 %v3306
    %v3320 = vunpack.c.l.b16 %v3307
    %v3321 = vunpack.c.l.b16 %v3308
    %v3322 = vunpack.c.l.b16 %v3309
    %v3323 = vpack.c.b16 %v3320, %v3319
    %v3324 = vpack.c.b16 %v3322, %v3321
    %v3328 = vsel %vm512, %v3310, 0
    %3330 = vmatpush.bf16.msra.mxu0 0
    %3331 = vmatpush.bf16.msra.mxu0 0
    %3332 = vmatpush.bf16.msra.mxu0 0
    %3333 = vmatpush.bf16.msra.mxu0 0
    %3334 = vmatpush.bf16.msra.mxu0 0
    %3335 = vmatpush.bf16.msra.mxu0 0
    %3336 = vmatpush.bf16.msra.mxu0 %v3324
    %3337 = vmatpush.bf16.msra.mxu0 %v3323
    %3338 = vmatmul.bf16.gmra.mxu0 %v3328
    %v3339 = vpop.f32.mrf.mxu0
    %v3340 = vadd.f32 %v3313, %v3339
    %v3341 = vpop.f32.mrf.mxu0
    %3342 = vdwg.mxu0
    %v3343 = vmul.f32 %v3340, %v3340
    %v3344 = vmul.f32 %v3340, %v3343
    %v3345 = vmul.f32 %v3344, 0.044715
    %v3346 = vadd.f32 %v3340, %v3345
    %v3347 = vmul.f32 %v3346, 0.7978846
    %v3348 = vtanh.pop %v3347
    %v3349 = vadd.f32 %v3348, 1.0
    %v3350 = vmul.f32 %v3349, 0.5
    %v3351 = vmul.f32 %v3340, %v3350
    %3353 = vrot.lane.b32.xlu0 %v3351, 96
    %v3354 = vpop.permute.xlu0 %3353
    %v3356 = vmul.f32 %v3340, %v3354
    %v3357 = vld [vmem:[%s63] sm:$0xf]
    %v3358 = vld [vmem:[%s63 + $0x4] sm:$0xf]
    %v3359 = vld [vmem:[%s63 + $0x8] sm:$0xf]
    %v3360 = vld [vmem:[%s63 + $0xc] sm:$0xf]
    %v3361 = vpack.c.bf16 %v3356, %v3356
    %v3362 = vld [vmem:[%s65] sm:$0x1]
    %v3364 = vperm.slane %v3362, 0
    %v3370 = vunpack.c.l.b16 %v3357
    %v3371 = vunpack.c.l.b16 %v3358
    %v3372 = vunpack.c.l.b16 %v3359
    %v3373 = vunpack.c.l.b16 %v3360
    %v3374 = vpack.c.b16 %v3371, %v3370
    %v3375 = vpack.c.b16 %v3373, %v3372
    %v3379 = vsel %vm512, %v3361, 0
    %3381 = vmatpush.bf16.msra.mxu0 0
    %3382 = vmatpush.bf16.msra.mxu0 0
    %3383 = vmatpush.bf16.msra.mxu0 0
    %3384 = vmatpush.bf16.msra.mxu0 0
    %3385 = vmatpush.bf16.msra.mxu0 0
    %3386 = vmatpush.bf16.msra.mxu0 0
    %3387 = vmatpush.bf16.msra.mxu0 %v3375
    %3388 = vmatpush.bf16.msra.mxu0 %v3374
    %3389 = vmatmul.bf16.gmra.mxu0 %v3379
    %v3390 = vpop.f32.mrf.mxu0
    %v3391 = vadd.f32 %v3364, %v3390
    %v3392 = vpop.f32.mrf.mxu0
    %3393 = vdwg.mxu0
    %3394 = vst.msk [vmem:[#allocation2] sm:$0xff] %vm512, %v2600
    %vm3395 = vcmask 257024
    %3396 = vst.msk [vmem:[#allocation4] sm:$0xf] %vm3395, %v3356
    %vm3397 = vcmask 519168
    %3398 = vst.msk [vmem:[#allocation6] sm:$0xf] %vm3397, %v3391
    // Predicated region
    $region134: #{rnn_forward.1} parent=1 // pred_check
      _
    $region135: #{rnn_forward.1} parent=1 // pred_check_branch
      %3400 = sbr.rel (0) target = $region137
    $region136: #{rnn_forward.1} parent=1 // pred_region
      %3402 = vsyncadd [#allocation3], 0
      %s3404 = sshll.u32 [#allocation2], 4
      %s3405 = int_to_ptr.vmem [resolvable:$true] %s3404
      %s3406 = sshll.u32 %s67, 4
      %s3407 = int_to_ptr.hbm [resolvable:$true] %s3406
      %3409 = dma.vmem_to_hbm [thread:$0]  %s3405, 128, %s3407, [#allocation3]
    $region137: #{rnn_forward.1} parent=1 // pred_fallthru
      _
    // Predicated region
    $region138: #{rnn_forward.1} parent=1 // pred_check
      _
    $region139: #{rnn_forward.1} parent=1 // pred_check_branch
      %3411 = sbr.rel (0) target = $region141
    $region140: #{rnn_forward.1} parent=1 // pred_region
      %3413 = vsyncadd [#allocation5], 0
      %s3415 = sshll.u32 [#allocation4], 4
      %s3416 = int_to_ptr.vmem [resolvable:$true] %s3415
      %s3417 = sshll.u32 %s69, 4
      %s3418 = int_to_ptr.hbm [resolvable:$true] %s3417
      %3420 = dma.vmem_to_hbm [thread:$0]  %s3416, 64, %s3418, [#allocation5]
    $region141: #{rnn_forward.1} parent=1 // pred_fallthru
      _
    // Predicated region
    $region142: #{rnn_forward.1} parent=1 // pred_check
      _
    $region143: #{rnn_forward.1} parent=1 // pred_check_branch
      %3422 = sbr.rel (0) target = $region145
    $region144: #{rnn_forward.1} parent=1 // pred_region
      %3424 = vsyncadd [#allocation5], 0
      %s3426 = sshll.u32 [#allocation6], 4
      %s3427 = int_to_ptr.vmem [resolvable:$true] %s3426
      %s3428 = sshll.u32 %s71, 4
      %s3429 = int_to_ptr.hbm [resolvable:$true] %s3428
      %3431 = dma.vmem_to_hbm [thread:$0]  %s3427, 64, %s3429, [#allocation5]
    $region145: #{rnn_forward.1} parent=1 // pred_fallthru
      _
    // Predicated region
    $region146: #{rnn_forward.1} parent=1 // pred_check
      _
    $region147: #{rnn_forward.1} parent=1 // pred_check_branch
      %3433 = sbr.rel (0) target = $region149
    $region148: #{rnn_forward.1} parent=1 // pred_region
      %3435 = dma.done [#allocation3], 128
    $region149: #{rnn_forward.1} parent=1 // pred_fallthru
      _
    // Predicated region
    $region150: #{rnn_forward.1} parent=1 // pred_check
      _
    $region151: #{rnn_forward.1} parent=1 // pred_check_branch
      %3437 = sbr.rel (0) target = $region153
    $region152: #{rnn_forward.1} parent=1 // pred_region
      %3439 = dma.done [#allocation5], 64
    $region153: #{rnn_forward.1} parent=1 // pred_fallthru
      _
    // Predicated region
    $region154: #{rnn_forward.1} parent=1 // pred_check
      _
    $region155: #{rnn_forward.1} parent=1 // pred_check_branch
      %3441 = sbr.rel (0) target = $region157
    $region156: #{rnn_forward.1} parent=1 // pred_region
      %3443 = dma.done [#allocation5], 64
    $region157: #{rnn_forward.1} parent=1 // pred_fallthru
      _
    %3444 = vsyncpa [#allocation3], 1
    %3445 = vsyncpa [#allocation5], 1

</llo_original>
